<compile_context>
chip_gen: v7x
topology: tpu7x:2x2x1
jax: 0.10.0
libtpu: 0.0.40
codegen_flags: <defaults>
</compile_context>

<pallas_src>
import functools

import jax
import jax.numpy as jnp
from jax import lax
from jax.experimental import pallas as pl
from jax.experimental.pallas import tpu as pltpu  # noqa: F401  (TPU backend assumed)

EPS = 1e-5  # nn.LayerNorm default eps

# Matmuls stay f32 (tight numerical check at these toy sizes; kernel is
# overhead-bound anyway). Flip to bf16 on v6e/v7x for MXU-native packing.
MATMUL_DTYPE = jnp.float32


# ----------------------------- in-kernel helpers -----------------------------
def _layer_norm(x, gamma, beta):
    mu = jnp.mean(x, axis=-1, keepdims=True)
    var = jnp.mean((x - mu) ** 2, axis=-1, keepdims=True)
    return (x - mu) * lax.rsqrt(var + EPS) * gamma + beta


def _softmax_last(x, approx=False):
    m = jnp.max(x, axis=-1, keepdims=True)
    e = jnp.exp(x - m)
    s = jnp.sum(e, axis=-1, keepdims=True)
    return e * pl.reciprocal(s, approx=approx)


def _mm(a, b):
    """y = a @ b with f32 accumulation."""
    return jnp.dot(a.astype(MATMUL_DTYPE), b.astype(MATMUL_DTYPE),
                   preferred_element_type=jnp.float32)


def _mm_qkt(q, k):
    """Scores q @ k^T via dot_general contracting last axes (no transpose)."""
    return lax.dot_general(q.astype(MATMUL_DTYPE), k.astype(MATMUL_DTYPE),
                           (((1,), (1,)), ((), ())),
                           preferred_element_type=jnp.float32)


# ------------------------------ fused forward kernel -------------------------
def fused_forward_kernel(n_layer, n_head, batch, seq,
                         x_ref, tok_ref, bias_ref,
                         ln1g_ref, ln1b_ref, wqkv_ref, wp_ref, bp_ref,
                         ln2g_ref, ln2b_ref, w1_ref, b1_ref, w2_ref, b2_ref,
                         flng_ref, flnb_ref, wf_ref, bf_ref,
                         o_ref):
    x = x_ref[...]                        # (B*T, E): whole batch, VMEM-resident
    BT, E = x.shape
    H = E // n_head
    scale = E ** (-0.5)                   # PyTorch scales by C = embed_size
    attn_bias = bias_ref[...]             # (B*T, B*T): 0 same-batch, -1e30 cross

    for l in range(n_layer):              # static unroll: weights stay in VMEM
        # ---- multi-head self attention (pre-LN), whole batch at once ----
        xn = _layer_norm(x, ln1g_ref[l], ln1b_ref[l])
        qkv = _mm(xn, wqkv_ref[l])                     # (B*T, 3E) fused QKV
        q = qkv[:, :E] * scale                         # fold 1/sqrt(E) into q
        k = qkv[:, E:2 * E]
        v = qkv[:, 2 * E:]
        heads = []
        for h in range(n_head):                        # static unrolled heads
            sl = slice(h * H, (h + 1) * H)
            s = _mm_qkt(q[:, sl], k[:, sl]) + attn_bias   # block-diag masked
            a = _softmax_last(s, approx=True)             # cross-batch -> 0
            heads.append(_mm(a, v[:, sl]))                # (B*T, H)
        attn = _mm(jnp.concatenate(heads, axis=-1), wp_ref[l]) + bp_ref[l]
        x = x + attn

        # ---- feed forward (pre-LN) ----
        xn2 = _layer_norm(x, ln2g_ref[l], ln2b_ref[l])
        h1 = jnp.maximum(_mm(xn2, w1_ref[l]) + b1_ref[l], 0.0)
        x = x + _mm(h1, w2_ref[l]) + b2_ref[l]

    # ---- final head: LN -> linear -> softmax -> mask -> 1 - prod(1 - p) ----
    xn = _layer_norm(x, flng_ref[...], flnb_ref[...])
    logits = _mm(xn, wf_ref[...]) + bf_ref[...]        # (B*T, Vp), pad = -1e30
    probs = _softmax_last(logits, approx=False)        # padded columns -> 0
    keep = tok_ref[...] >= 27                          # (B*T, 1) mask from ints
    probs = jnp.where(keep, probs, 0.0)                # masked_fill(~(tok>=27))
    # 1 - prod_t (1 - p_t) per batch element: cross-sublane log-space sums.
    log1m = jnp.log(jnp.maximum(1.0 - probs, 1e-30))
    rows = [1.0 - jnp.exp(jnp.sum(log1m[b * seq:(b + 1) * seq],
                                  axis=0, keepdims=True))
            for b in range(batch)]                     # B x (1, Vp)
    o_ref[...] = jnp.concatenate(rows, axis=0) if batch > 1 else rows[0]


# ------------------------------- param packing --------------------------------
def pack_params(params):
    """Stack per-layer weights along L, fuse QKV, pad the final head to 128 lanes."""
    lay = params["layers"]
    L = len(lay)

    def st(i):
        return jnp.stack([lay[l][i] for l in range(L)])

    wqkv = jnp.stack([jnp.concatenate([lay[l][2], lay[l][3], lay[l][4]], axis=1)
                      for l in range(L)])              # (L, E, 3E)

    E = params["tok_emb"].shape[1]
    V = params["wf"].shape[1]                          # output_size + 1
    Vp = ((V + 127) // 128) * 128                      # lane-dense output width
    wf_pad = jnp.zeros((E, Vp), jnp.float32).at[:, :V].set(params["wf"])
    bf_pad = jnp.full((1, Vp), -1e30, jnp.float32).at[:, :V].set(params["bf"])

    packed = [
        st(0), st(1),            # ln1 gamma, beta            (L, 1, E)
        wqkv,                    # fused Wqkv                  (L, E, 3E)
        st(5), st(6),            # Wproj, bproj                (L, E, E), (L, 1, E)
        st(7), st(8),            # ln2 gamma, beta             (L, 1, E)
        st(9), st(10),           # W1, b1                      (L, E, 4E), (L, 1, 4E)
        st(11), st(12),          # W2, b2                      (L, 4E, E), (L, 1, E)
        params["fln_g"], params["fln_b"],              # final LN     (1, E)
        wf_pad, bf_pad,                                # final linear (E, Vp), (1, Vp)
    ]
    return packed, Vp


# ------------------------------- model wrapper --------------------------------
def hangman_forward(tokens, params, n_head, output_size):
    B, T = tokens.shape
    E = params["tok_emb"].shape[1]
    L = len(params["layers"])
    packed, Vp = pack_params(params)

    # Embedding gather is glue (no clean Pallas gather at this size).
    x = (params["tok_emb"][tokens] + params["pos_emb"][jnp.arange(T)]).astype(jnp.float32)
    x_flat = x.reshape(B * T, E)                       # batch folded into sublanes
    tok_flat = tokens.astype(jnp.int32).reshape(B * T, 1)

    # Block-diagonal additive attention bias (0 same batch, -1e30 cross batch);
    # shape-only constant, folded by XLA under jit.
    seg = jnp.repeat(jnp.arange(B, dtype=jnp.int32), T)
    attn_bias = jnp.where(seg[:, None] == seg[None, :], 0.0, -1e30).astype(jnp.float32)

    # Gridless call: everything (activations + all stacked weights) fits in VMEM,
    # so a single invocation with whole-array refs is the lowest-overhead layout.
    out = pl.pallas_call(
        functools.partial(fused_forward_kernel, L, n_head, B, T),
        out_shape=jax.ShapeDtypeStruct((B, Vp), jnp.float32),
    )(x_flat, tok_flat, attn_bias, *packed)
    return out[:, :output_size]


# ----------------------------- pure JAX reference -----------------------------
def ref_forward(tokens, params, n_head):
    B, T = tokens.shape
    E = params["tok_emb"].shape[1]
    H = E // n_head
    x = params["tok_emb"][tokens] + params["pos_emb"][jnp.arange(T)]
    keep = (tokens >= 27)[..., None]

    def ln(z, g, b):
        mu = z.mean(-1, keepdims=True)
        var = ((z - mu) ** 2).mean(-1, keepdims=True)
        return (z - mu) / jnp.sqrt(var + EPS) * g + b

    for (l1g, l1b, wq, wk, wv, wp, bp, l2g, l2b, w1, b1, w2, b2) in params["layers"]:
        xn = ln(x, l1g, l1b)
        q, k, v = xn @ wq, xn @ wk, xn @ wv
        heads = []
        for h in range(n_head):
            qh, kh, vh = (q[..., h * H:(h + 1) * H], k[..., h * H:(h + 1) * H],
                          v[..., h * H:(h + 1) * H])
            s = jnp.einsum("btd,bsd->bts", qh, kh) * (E ** -0.5)
            a = jax.nn.softmax(s, axis=-1)
            heads.append(jnp.einsum("bts,bsd->btd", a, vh))
        x = x + (jnp.concatenate(heads, -1) @ wp + bp)
        xn2 = ln(x, l2g, l2b)
        x = x + (jax.nn.relu(xn2 @ w1 + b1) @ w2 + b2)

    xn = ln(x, params["fln_g"], params["fln_b"])
    probs = jax.nn.softmax(xn @ params["wf"] + params["bf"], axis=-1)
    probs = jnp.where(keep, probs, 0.0)
    final = 1.0 - jnp.prod(1.0 - probs, axis=1)
    return final[:, :-1]


# ------------------------------ param construction ----------------------------
def init_params(key, vocab_size, embed_size, block_size, n_head, n_layer, output_size):
    V = output_size + 1
    E = embed_size
    ks = jax.random.split(key, 4 + n_layer)

    def nrm(k, shape, scale=0.02):
        return (scale * jax.random.normal(k, shape)).astype(jnp.float32)

    params = {
        "tok_emb": nrm(ks[0], (vocab_size, E)),
        "pos_emb": nrm(ks[1], (block_size, E)),
        "fln_g": jnp.ones((1, E), jnp.float32),
        "fln_b": jnp.zeros((1, E), jnp.float32),
        "wf": nrm(ks[2], (E, V)),
        "bf": nrm(ks[3], (1, V)),
        "layers": [],
    }
    for l in range(n_layer):
        lk = jax.random.split(ks[4 + l], 8)
        layer = (
            jnp.ones((1, E), jnp.float32), jnp.zeros((1, E), jnp.float32),   # ln1 g,b
            nrm(lk[0], (E, E)), nrm(lk[1], (E, E)), nrm(lk[2], (E, E)),      # Wq Wk Wv
            nrm(lk[3], (E, E)), nrm(lk[4], (1, E)),                          # Wproj, bproj
            jnp.ones((1, E), jnp.float32), jnp.zeros((1, E), jnp.float32),   # ln2 g,b
            nrm(lk[5], (E, 4 * E)), nrm(lk[6], (1, 4 * E)),                  # W1, b1
            nrm(lk[7], (4 * E, E)), jnp.zeros((1, E), jnp.float32),          # W2, b2
        )
        params["layers"].append(layer)
    return params


# ------------------------------------ main -------------------------------------
if __name__ == "__main__":
    vocab_size, embed_size, block_size = 30, 32, 16
    n_head, n_layer, output_size = 4, 2, 26
    dropout = 0.1  # identity in eval mode
    B, T = 2, 8

    key = jax.random.PRNGKey(0)
    pkey, tkey = jax.random.split(key)
    params = init_params(pkey, vocab_size, embed_size, block_size,
                         n_head, n_layer, output_size)

    tokens = jax.random.randint(tkey, (B, T), 0, vocab_size, dtype=jnp.int32)
    # make sure both masked (< 27) and unmasked (>= 27) tokens are present
    tokens = tokens.at[:, 0].set(27).at[:, 1].set(5)

    fwd = jax.jit(functools.partial(hangman_forward, n_head=n_head,
                                    output_size=output_size))
    out = jax.block_until_ready(fwd(tokens, params))

    ref = ref_forward(tokens, params, n_head)
    assert out.shape == (B, output_size), out.shape
    tol = 1e-4 if MATMUL_DTYPE == jnp.float32 else 5e-3
    assert jnp.allclose(out, ref, atol=tol, rtol=tol), \
        f"max abs err {jnp.max(jnp.abs(out - ref))}"

    print("KERNEL_OK")
</pallas_src>

<mosaic_0001>
module attributes {stable_mosaic.version = 11 : i64} {
  func.func @fused_forward_kernel(%arg0: memref<16x32xf32, #tpu.memory_space<vmem>>, %arg1: memref<16x1xi32, #tpu.memory_space<vmem>>, %arg2: memref<16x16xf32, #tpu.memory_space<vmem>>, %arg3: memref<2x1x32xf32, #tpu.memory_space<vmem>>, %arg4: memref<2x1x32xf32, #tpu.memory_space<vmem>>, %arg5: memref<2x32x96xf32, #tpu.memory_space<vmem>>, %arg6: memref<2x32x32xf32, #tpu.memory_space<vmem>>, %arg7: memref<2x1x32xf32, #tpu.memory_space<vmem>>, %arg8: memref<2x1x32xf32, #tpu.memory_space<vmem>>, %arg9: memref<2x1x32xf32, #tpu.memory_space<vmem>>, %arg10: memref<2x32x128xf32, #tpu.memory_space<vmem>>, %arg11: memref<2x1x128xf32, #tpu.memory_space<vmem>>, %arg12: memref<2x128x32xf32, #tpu.memory_space<vmem>>, %arg13: memref<2x1x32xf32, #tpu.memory_space<vmem>>, %arg14: memref<1x32xf32, #tpu.memory_space<vmem>>, %arg15: memref<1x32xf32, #tpu.memory_space<vmem>>, %arg16: memref<32x128xf32, #tpu.memory_space<vmem>>, %arg17: memref<1x128xf32, #tpu.memory_space<vmem>>, %arg18: memref<2x128xf32, #tpu.memory_space<vmem>>) attributes {dimension_semantics = [], scalar_prefetch = 0 : i64, scratch_operands = 0 : i64, tpu.core_type = #tpu.core_type<tc>} {
    %c0 = arith.constant 0 : index
    %c0_0 = arith.constant 0 : index
    %0 = vector.load %arg0[%c0, %c0_0] : memref<16x32xf32, #tpu.memory_space<vmem>>, vector<16x32xf32>
    %c0_1 = arith.constant 0 : index
    %c0_2 = arith.constant 0 : index
    %1 = vector.load %arg2[%c0_1, %c0_2] : memref<16x16xf32, #tpu.memory_space<vmem>>, vector<16x16xf32>
    %c0_3 = arith.constant 0 : index
    %c0_4 = arith.constant 0 : index
    %c0_5 = arith.constant 0 : index
    %2 = vector.load %arg3[%c0_3, %c0_4, %c0_5] : memref<2x1x32xf32, #tpu.memory_space<vmem>>, vector<1x1x32xf32>
    %3 = vector.shape_cast %2 : vector<1x1x32xf32> to vector<1x32xf32>
    %c0_6 = arith.constant 0 : index
    %c0_7 = arith.constant 0 : index
    %c0_8 = arith.constant 0 : index
    %4 = vector.load %arg4[%c0_6, %c0_7, %c0_8] : memref<2x1x32xf32, #tpu.memory_space<vmem>>, vector<1x1x32xf32>
    %5 = vector.shape_cast %4 : vector<1x1x32xf32> to vector<1x32xf32>
    %cst = arith.constant dense<0.000000e+00> : vector<16xf32>
    %6 = vector.multi_reduction <add>, %0, %cst [1] : vector<16x32xf32> to vector<16xf32>
    %7 = vector.shape_cast %6 : vector<16xf32> to vector<16x1xf32>
    %cst_9 = arith.constant 3.200000e+01 : f32
    %8 = vector.broadcast %cst_9 : f32 to vector<16x1xf32>
    %9 = arith.divf %7, %8 : vector<16x1xf32>
    %10 = vector.broadcast %9 : vector<16x1xf32> to vector<16x32xf32>
    %11 = arith.subf %0, %10 : vector<16x32xf32>
    %12 = arith.mulf %11, %11 : vector<16x32xf32>
    %cst_10 = arith.constant dense<0.000000e+00> : vector<16xf32>
    %13 = vector.multi_reduction <add>, %12, %cst_10 [1] : vector<16x32xf32> to vector<16xf32>
    %14 = vector.shape_cast %13 : vector<16xf32> to vector<16x1xf32>
    %cst_11 = arith.constant 3.200000e+01 : f32
    %15 = vector.broadcast %cst_11 : f32 to vector<16x1xf32>
    %16 = arith.divf %14, %15 : vector<16x1xf32>
    %17 = vector.broadcast %9 : vector<16x1xf32> to vector<16x32xf32>
    %18 = arith.subf %0, %17 : vector<16x32xf32>
    %cst_12 = arith.constant 9.99999974E-6 : f32
    %19 = vector.broadcast %cst_12 : f32 to vector<16x1xf32>
    %20 = arith.addf %16, %19 : vector<16x1xf32>
    %21 = math.rsqrt %20 : vector<16x1xf32>
    %22 = vector.broadcast %21 : vector<16x1xf32> to vector<16x32xf32>
    %23 = arith.mulf %18, %22 : vector<16x32xf32>
    %24 = vector.broadcast %3 : vector<1x32xf32> to vector<16x32xf32>
    %25 = arith.mulf %23, %24 : vector<16x32xf32>
    %26 = vector.broadcast %5 : vector<1x32xf32> to vector<16x32xf32>
    %27 = arith.addf %25, %26 : vector<16x32xf32>
    %c0_13 = arith.constant 0 : index
    %c0_14 = arith.constant 0 : index
    %c0_15 = arith.constant 0 : index
    %28 = vector.load %arg5[%c0_13, %c0_14, %c0_15] : memref<2x32x96xf32, #tpu.memory_space<vmem>>, vector<1x32x96xf32>
    %29 = vector.shape_cast %28 : vector<1x32x96xf32> to vector<32x96xf32>
    %cst_16 = arith.constant dense<0.000000e+00> : vector<16x96xf32>
    %30 = tpu.matmul %27, %29, %cst_16 {dimension_numbers = #tpu.dot_dimension_numbers<[1], [0], [0], [1], [0, 0, 1, 1], [], []>} : vector<16x32xf32>, vector<32x96xf32>, vector<16x96xf32> -> vector<16x96xf32>
    %31 = vector.extract_strided_slice %30 {offsets = [0, 0], sizes = [16, 32], strides = [1, 1]} : vector<16x96xf32> to vector<16x32xf32>
    %cst_17 = arith.constant 0.176776692 : f32
    %32 = vector.broadcast %cst_17 : f32 to vector<16x32xf32>
    %33 = arith.mulf %31, %32 : vector<16x32xf32>
    %34 = vector.extract_strided_slice %30 {offsets = [0, 32], sizes = [16, 32], strides = [1, 1]} : vector<16x96xf32> to vector<16x32xf32>
    %35 = vector.extract_strided_slice %30 {offsets = [0, 64], sizes = [16, 32], strides = [1, 1]} : vector<16x96xf32> to vector<16x32xf32>
    %36 = vector.extract_strided_slice %33 {offsets = [0, 0], sizes = [16, 8], strides = [1, 1]} : vector<16x32xf32> to vector<16x8xf32>
    %37 = vector.extract_strided_slice %34 {offsets = [0, 0], sizes = [16, 8], strides = [1, 1]} : vector<16x32xf32> to vector<16x8xf32>
    %cst_18 = arith.constant dense<0.000000e+00> : vector<16x16xf32>
    %38 = tpu.matmul %36, %37, %cst_18 {dimension_numbers = #tpu.dot_dimension_numbers<[1], [1], [0], [0], [0, 0, 1, 0], [], []>} : vector<16x8xf32>, vector<16x8xf32>, vector<16x16xf32> -> vector<16x16xf32>
    %39 = arith.addf %38, %1 : vector<16x16xf32>
    %cst_19 = arith.constant dense<0xFF800000> : vector<16xf32>
    %40 = vector.multi_reduction <maximumf>, %39, %cst_19 [1] : vector<16x16xf32> to vector<16xf32>
    %41 = vector.shape_cast %40 : vector<16xf32> to vector<16x1xf32>
    %42 = vector.broadcast %41 : vector<16x1xf32> to vector<16x16xf32>
    %43 = arith.subf %39, %42 : vector<16x16xf32>
    %44 = math.exp %43 : vector<16x16xf32>
    %cst_20 = arith.constant dense<0.000000e+00> : vector<16xf32>
    %45 = vector.multi_reduction <add>, %44, %cst_20 [1] : vector<16x16xf32> to vector<16xf32>
    %46 = vector.shape_cast %45 : vector<16xf32> to vector<16x1xf32>
    %47 = tpu.reciprocal %46 {approx = true} : vector<16x1xf32> -> vector<16x1xf32>
    %48 = vector.broadcast %47 : vector<16x1xf32> to vector<16x16xf32>
    %49 = arith.mulf %44, %48 : vector<16x16xf32>
    %50 = vector.extract_strided_slice %35 {offsets = [0, 0], sizes = [16, 8], strides = [1, 1]} : vector<16x32xf32> to vector<16x8xf32>
    %cst_21 = arith.constant dense<0.000000e+00> : vector<16x8xf32>
    %51 = tpu.matmul %49, %50, %cst_21 {dimension_numbers = #tpu.dot_dimension_numbers<[1], [0], [0], [1], [0, 0, 1, 1], [], []>} : vector<16x16xf32>, vector<16x8xf32>, vector<16x8xf32> -> vector<16x8xf32>
    %52 = vector.extract_strided_slice %33 {offsets = [0, 8], sizes = [16, 8], strides = [1, 1]} : vector<16x32xf32> to vector<16x8xf32>
    %53 = vector.extract_strided_slice %34 {offsets = [0, 8], sizes = [16, 8], strides = [1, 1]} : vector<16x32xf32> to vector<16x8xf32>
    %cst_22 = arith.constant dense<0.000000e+00> : vector<16x16xf32>
    %54 = tpu.matmul %52, %53, %cst_22 {dimension_numbers = #tpu.dot_dimension_numbers<[1], [1], [0], [0], [0, 0, 1, 0], [], []>} : vector<16x8xf32>, vector<16x8xf32>, vector<16x16xf32> -> vector<16x16xf32>
    %55 = arith.addf %54, %1 : vector<16x16xf32>
    %cst_23 = arith.constant dense<0xFF800000> : vector<16xf32>
    %56 = vector.multi_reduction <maximumf>, %55, %cst_23 [1] : vector<16x16xf32> to vector<16xf32>
    %57 = vector.shape_cast %56 : vector<16xf32> to vector<16x1xf32>
    %58 = vector.broadcast %57 : vector<16x1xf32> to vector<16x16xf32>
    %59 = arith.subf %55, %58 : vector<16x16xf32>
    %60 = math.exp %59 : vector<16x16xf32>
    %cst_24 = arith.constant dense<0.000000e+00> : vector<16xf32>
    %61 = vector.multi_reduction <add>, %60, %cst_24 [1] : vector<16x16xf32> to vector<16xf32>
    %62 = vector.shape_cast %61 : vector<16xf32> to vector<16x1xf32>
    %63 = tpu.reciprocal %62 {approx = true} : vector<16x1xf32> -> vector<16x1xf32>
    %64 = vector.broadcast %63 : vector<16x1xf32> to vector<16x16xf32>
    %65 = arith.mulf %60, %64 : vector<16x16xf32>
    %66 = vector.extract_strided_slice %35 {offsets = [0, 8], sizes = [16, 8], strides = [1, 1]} : vector<16x32xf32> to vector<16x8xf32>
    %cst_25 = arith.constant dense<0.000000e+00> : vector<16x8xf32>
    %67 = tpu.matmul %65, %66, %cst_25 {dimension_numbers = #tpu.dot_dimension_numbers<[1], [0], [0], [1], [0, 0, 1, 1], [], []>} : vector<16x16xf32>, vector<16x8xf32>, vector<16x8xf32> -> vector<16x8xf32>
    %68 = vector.extract_strided_slice %33 {offsets = [0, 16], sizes = [16, 8], strides = [1, 1]} : vector<16x32xf32> to vector<16x8xf32>
    %69 = vector.extract_strided_slice %34 {offsets = [0, 16], sizes = [16, 8], strides = [1, 1]} : vector<16x32xf32> to vector<16x8xf32>
    %cst_26 = arith.constant dense<0.000000e+00> : vector<16x16xf32>
    %70 = tpu.matmul %68, %69, %cst_26 {dimension_numbers = #tpu.dot_dimension_numbers<[1], [1], [0], [0], [0, 0, 1, 0], [], []>} : vector<16x8xf32>, vector<16x8xf32>, vector<16x16xf32> -> vector<16x16xf32>
    %71 = arith.addf %70, %1 : vector<16x16xf32>
    %cst_27 = arith.constant dense<0xFF800000> : vector<16xf32>
    %72 = vector.multi_reduction <maximumf>, %71, %cst_27 [1] : vector<16x16xf32> to vector<16xf32>
    %73 = vector.shape_cast %72 : vector<16xf32> to vector<16x1xf32>
    %74 = vector.broadcast %73 : vector<16x1xf32> to vector<16x16xf32>
    %75 = arith.subf %71, %74 : vector<16x16xf32>
    %76 = math.exp %75 : vector<16x16xf32>
    %cst_28 = arith.constant dense<0.000000e+00> : vector<16xf32>
    %77 = vector.multi_reduction <add>, %76, %cst_28 [1] : vector<16x16xf32> to vector<16xf32>
    %78 = vector.shape_cast %77 : vector<16xf32> to vector<16x1xf32>
    %79 = tpu.reciprocal %78 {approx = true} : vector<16x1xf32> -> vector<16x1xf32>
    %80 = vector.broadcast %79 : vector<16x1xf32> to vector<16x16xf32>
    %81 = arith.mulf %76, %80 : vector<16x16xf32>
    %82 = vector.extract_strided_slice %35 {offsets = [0, 16], sizes = [16, 8], strides = [1, 1]} : vector<16x32xf32> to vector<16x8xf32>
    %cst_29 = arith.constant dense<0.000000e+00> : vector<16x8xf32>
    %83 = tpu.matmul %81, %82, %cst_29 {dimension_numbers = #tpu.dot_dimension_numbers<[1], [0], [0], [1], [0, 0, 1, 1], [], []>} : vector<16x16xf32>, vector<16x8xf32>, vector<16x8xf32> -> vector<16x8xf32>
    %84 = vector.extract_strided_slice %33 {offsets = [0, 24], sizes = [16, 8], strides = [1, 1]} : vector<16x32xf32> to vector<16x8xf32>
    %85 = vector.extract_strided_slice %34 {offsets = [0, 24], sizes = [16, 8], strides = [1, 1]} : vector<16x32xf32> to vector<16x8xf32>
    %cst_30 = arith.constant dense<0.000000e+00> : vector<16x16xf32>
    %86 = tpu.matmul %84, %85, %cst_30 {dimension_numbers = #tpu.dot_dimension_numbers<[1], [1], [0], [0], [0, 0, 1, 0], [], []>} : vector<16x8xf32>, vector<16x8xf32>, vector<16x16xf32> -> vector<16x16xf32>
    %87 = arith.addf %86, %1 : vector<16x16xf32>
    %cst_31 = arith.constant dense<0xFF800000> : vector<16xf32>
    %88 = vector.multi_reduction <maximumf>, %87, %cst_31 [1] : vector<16x16xf32> to vector<16xf32>
    %89 = vector.shape_cast %88 : vector<16xf32> to vector<16x1xf32>
    %90 = vector.broadcast %89 : vector<16x1xf32> to vector<16x16xf32>
    %91 = arith.subf %87, %90 : vector<16x16xf32>
    %92 = math.exp %91 : vector<16x16xf32>
    %cst_32 = arith.constant dense<0.000000e+00> : vector<16xf32>
    %93 = vector.multi_reduction <add>, %92, %cst_32 [1] : vector<16x16xf32> to vector<16xf32>
    %94 = vector.shape_cast %93 : vector<16xf32> to vector<16x1xf32>
    %95 = tpu.reciprocal %94 {approx = true} : vector<16x1xf32> -> vector<16x1xf32>
    %96 = vector.broadcast %95 : vector<16x1xf32> to vector<16x16xf32>
    %97 = arith.mulf %92, %96 : vector<16x16xf32>
    %98 = vector.extract_strided_slice %35 {offsets = [0, 24], sizes = [16, 8], strides = [1, 1]} : vector<16x32xf32> to vector<16x8xf32>
    %cst_33 = arith.constant dense<0.000000e+00> : vector<16x8xf32>
    %99 = tpu.matmul %97, %98, %cst_33 {dimension_numbers = #tpu.dot_dimension_numbers<[1], [0], [0], [1], [0, 0, 1, 1], [], []>} : vector<16x16xf32>, vector<16x8xf32>, vector<16x8xf32> -> vector<16x8xf32>
    %100 = tpu.concatenate %51, %67, %83, %99 in 1 : vector<16x8xf32>, vector<16x8xf32>, vector<16x8xf32>, vector<16x8xf32> -> vector<16x32xf32>
    %c0_34 = arith.constant 0 : index
    %c0_35 = arith.constant 0 : index
    %c0_36 = arith.constant 0 : index
    %101 = vector.load %arg6[%c0_34, %c0_35, %c0_36] : memref<2x32x32xf32, #tpu.memory_space<vmem>>, vector<1x32x32xf32>
    %102 = vector.shape_cast %101 : vector<1x32x32xf32> to vector<32x32xf32>
    %cst_37 = arith.constant dense<0.000000e+00> : vector<16x32xf32>
    %103 = tpu.matmul %100, %102, %cst_37 {dimension_numbers = #tpu.dot_dimension_numbers<[1], [0], [0], [1], [0, 0, 1, 1], [], []>} : vector<16x32xf32>, vector<32x32xf32>, vector<16x32xf32> -> vector<16x32xf32>
    %c0_38 = arith.constant 0 : index
    %c0_39 = arith.constant 0 : index
    %c0_40 = arith.constant 0 : index
    %104 = vector.load %arg7[%c0_38, %c0_39, %c0_40] : memref<2x1x32xf32, #tpu.memory_space<vmem>>, vector<1x1x32xf32>
    %105 = vector.shape_cast %104 : vector<1x1x32xf32> to vector<1x32xf32>
    %106 = vector.broadcast %105 : vector<1x32xf32> to vector<16x32xf32>
    %107 = arith.addf %103, %106 : vector<16x32xf32>
    %108 = arith.addf %0, %107 : vector<16x32xf32>
    %c0_41 = arith.constant 0 : index
    %c0_42 = arith.constant 0 : index
    %c0_43 = arith.constant 0 : index
    %109 = vector.load %arg8[%c0_41, %c0_42, %c0_43] : memref<2x1x32xf32, #tpu.memory_space<vmem>>, vector<1x1x32xf32>
    %110 = vector.shape_cast %109 : vector<1x1x32xf32> to vector<1x32xf32>
    %c0_44 = arith.constant 0 : index
    %c0_45 = arith.constant 0 : index
    %c0_46 = arith.constant 0 : index
    %111 = vector.load %arg9[%c0_44, %c0_45, %c0_46] : memref<2x1x32xf32, #tpu.memory_space<vmem>>, vector<1x1x32xf32>
    %112 = vector.shape_cast %111 : vector<1x1x32xf32> to vector<1x32xf32>
    %cst_47 = arith.constant dense<0.000000e+00> : vector<16xf32>
    %113 = vector.multi_reduction <add>, %108, %cst_47 [1] : vector<16x32xf32> to vector<16xf32>
    %114 = vector.shape_cast %113 : vector<16xf32> to vector<16x1xf32>
    %cst_48 = arith.constant 3.200000e+01 : f32
    %115 = vector.broadcast %cst_48 : f32 to vector<16x1xf32>
    %116 = arith.divf %114, %115 : vector<16x1xf32>
    %117 = vector.broadcast %116 : vector<16x1xf32> to vector<16x32xf32>
    %118 = arith.subf %108, %117 : vector<16x32xf32>
    %119 = arith.mulf %118, %118 : vector<16x32xf32>
    %cst_49 = arith.constant dense<0.000000e+00> : vector<16xf32>
    %120 = vector.multi_reduction <add>, %119, %cst_49 [1] : vector<16x32xf32> to vector<16xf32>
    %121 = vector.shape_cast %120 : vector<16xf32> to vector<16x1xf32>
    %cst_50 = arith.constant 3.200000e+01 : f32
    %122 = vector.broadcast %cst_50 : f32 to vector<16x1xf32>
    %123 = arith.divf %121, %122 : vector<16x1xf32>
    %124 = vector.broadcast %116 : vector<16x1xf32> to vector<16x32xf32>
    %125 = arith.subf %108, %124 : vector<16x32xf32>
    %cst_51 = arith.constant 9.99999974E-6 : f32
    %126 = vector.broadcast %cst_51 : f32 to vector<16x1xf32>
    %127 = arith.addf %123, %126 : vector<16x1xf32>
    %128 = math.rsqrt %127 : vector<16x1xf32>
    %129 = vector.broadcast %128 : vector<16x1xf32> to vector<16x32xf32>
    %130 = arith.mulf %125, %129 : vector<16x32xf32>
    %131 = vector.broadcast %110 : vector<1x32xf32> to vector<16x32xf32>
    %132 = arith.mulf %130, %131 : vector<16x32xf32>
    %133 = vector.broadcast %112 : vector<1x32xf32> to vector<16x32xf32>
    %134 = arith.addf %132, %133 : vector<16x32xf32>
    %c0_52 = arith.constant 0 : index
    %c0_53 = arith.constant 0 : index
    %c0_54 = arith.constant 0 : index
    %135 = vector.load %arg10[%c0_52, %c0_53, %c0_54] : memref<2x32x128xf32, #tpu.memory_space<vmem>>, vector<1x32x128xf32>
    %136 = vector.shape_cast %135 : vector<1x32x128xf32> to vector<32x128xf32>
    %cst_55 = arith.constant dense<0.000000e+00> : vector<16x128xf32>
    %137 = tpu.matmul %134, %136, %cst_55 {dimension_numbers = #tpu.dot_dimension_numbers<[1], [0], [0], [1], [0, 0, 1, 1], [], []>} : vector<16x32xf32>, vector<32x128xf32>, vector<16x128xf32> -> vector<16x128xf32>
    %c0_56 = arith.constant 0 : index
    %c0_57 = arith.constant 0 : index
    %c0_58 = arith.constant 0 : index
    %138 = vector.load %arg11[%c0_56, %c0_57, %c0_58] : memref<2x1x128xf32, #tpu.memory_space<vmem>>, vector<1x1x128xf32>
    %139 = vector.shape_cast %138 : vector<1x1x128xf32> to vector<1x128xf32>
    %140 = vector.broadcast %139 : vector<1x128xf32> to vector<16x128xf32>
    %141 = arith.addf %137, %140 : vector<16x128xf32>
    %cst_59 = arith.constant 0.000000e+00 : f32
    %142 = vector.broadcast %cst_59 : f32 to vector<16x128xf32>
    %143 = arith.maximumf %141, %142 : vector<16x128xf32>
    %c0_60 = arith.constant 0 : index
    %c0_61 = arith.constant 0 : index
    %c0_62 = arith.constant 0 : index
    %144 = vector.load %arg12[%c0_60, %c0_61, %c0_62] : memref<2x128x32xf32, #tpu.memory_space<vmem>>, vector<1x128x32xf32>
    %145 = vector.shape_cast %144 : vector<1x128x32xf32> to vector<128x32xf32>
    %cst_63 = arith.constant dense<0.000000e+00> : vector<16x32xf32>
    %146 = tpu.matmul %143, %145, %cst_63 {dimension_numbers = #tpu.dot_dimension_numbers<[1], [0], [0], [1], [0, 0, 1, 1], [], []>} : vector<16x128xf32>, vector<128x32xf32>, vector<16x32xf32> -> vector<16x32xf32>
    %147 = arith.addf %108, %146 : vector<16x32xf32>
    %c0_64 = arith.constant 0 : index
    %c0_65 = arith.constant 0 : index
    %c0_66 = arith.constant 0 : index
    %148 = vector.load %arg13[%c0_64, %c0_65, %c0_66] : memref<2x1x32xf32, #tpu.memory_space<vmem>>, vector<1x1x32xf32>
    %149 = vector.shape_cast %148 : vector<1x1x32xf32> to vector<1x32xf32>
    %150 = vector.broadcast %149 : vector<1x32xf32> to vector<16x32xf32>
    %151 = arith.addf %147, %150 : vector<16x32xf32>
    %c1 = arith.constant 1 : index
    %c0_67 = arith.constant 0 : index
    %c0_68 = arith.constant 0 : index
    %152 = vector.load %arg3[%c1, %c0_67, %c0_68] : memref<2x1x32xf32, #tpu.memory_space<vmem>>, vector<1x1x32xf32>
    %153 = vector.shape_cast %152 : vector<1x1x32xf32> to vector<1x32xf32>
    %c1_69 = arith.constant 1 : index
    %c0_70 = arith.constant 0 : index
    %c0_71 = arith.constant 0 : index
    %154 = vector.load %arg4[%c1_69, %c0_70, %c0_71] : memref<2x1x32xf32, #tpu.memory_space<vmem>>, vector<1x1x32xf32>
    %155 = vector.shape_cast %154 : vector<1x1x32xf32> to vector<1x32xf32>
    %cst_72 = arith.constant dense<0.000000e+00> : vector<16xf32>
    %156 = vector.multi_reduction <add>, %151, %cst_72 [1] : vector<16x32xf32> to vector<16xf32>
    %157 = vector.shape_cast %156 : vector<16xf32> to vector<16x1xf32>
    %cst_73 = arith.constant 3.200000e+01 : f32
    %158 = vector.broadcast %cst_73 : f32 to vector<16x1xf32>
    %159 = arith.divf %157, %158 : vector<16x1xf32>
    %160 = vector.broadcast %159 : vector<16x1xf32> to vector<16x32xf32>
    %161 = arith.subf %151, %160 : vector<16x32xf32>
    %162 = arith.mulf %161, %161 : vector<16x32xf32>
    %cst_74 = arith.constant dense<0.000000e+00> : vector<16xf32>
    %163 = vector.multi_reduction <add>, %162, %cst_74 [1] : vector<16x32xf32> to vector<16xf32>
    %164 = vector.shape_cast %163 : vector<16xf32> to vector<16x1xf32>
    %cst_75 = arith.constant 3.200000e+01 : f32
    %165 = vector.broadcast %cst_75 : f32 to vector<16x1xf32>
    %166 = arith.divf %164, %165 : vector<16x1xf32>
    %167 = vector.broadcast %159 : vector<16x1xf32> to vector<16x32xf32>
    %168 = arith.subf %151, %167 : vector<16x32xf32>
    %cst_76 = arith.constant 9.99999974E-6 : f32
    %169 = vector.broadcast %cst_76 : f32 to vector<16x1xf32>
    %170 = arith.addf %166, %169 : vector<16x1xf32>
    %171 = math.rsqrt %170 : vector<16x1xf32>
    %172 = vector.broadcast %171 : vector<16x1xf32> to vector<16x32xf32>
    %173 = arith.mulf %168, %172 : vector<16x32xf32>
    %174 = vector.broadcast %153 : vector<1x32xf32> to vector<16x32xf32>
    %175 = arith.mulf %173, %174 : vector<16x32xf32>
    %176 = vector.broadcast %155 : vector<1x32xf32> to vector<16x32xf32>
    %177 = arith.addf %175, %176 : vector<16x32xf32>
    %c1_77 = arith.constant 1 : index
    %c0_78 = arith.constant 0 : index
    %c0_79 = arith.constant 0 : index
    %178 = vector.load %arg5[%c1_77, %c0_78, %c0_79] : memref<2x32x96xf32, #tpu.memory_space<vmem>>, vector<1x32x96xf32>
    %179 = vector.shape_cast %178 : vector<1x32x96xf32> to vector<32x96xf32>
    %cst_80 = arith.constant dense<0.000000e+00> : vector<16x96xf32>
    %180 = tpu.matmul %177, %179, %cst_80 {dimension_numbers = #tpu.dot_dimension_numbers<[1], [0], [0], [1], [0, 0, 1, 1], [], []>} : vector<16x32xf32>, vector<32x96xf32>, vector<16x96xf32> -> vector<16x96xf32>
    %181 = vector.extract_strided_slice %180 {offsets = [0, 0], sizes = [16, 32], strides = [1, 1]} : vector<16x96xf32> to vector<16x32xf32>
    %cst_81 = arith.constant 0.176776692 : f32
    %182 = vector.broadcast %cst_81 : f32 to vector<16x32xf32>
    %183 = arith.mulf %181, %182 : vector<16x32xf32>
    %184 = vector.extract_strided_slice %180 {offsets = [0, 32], sizes = [16, 32], strides = [1, 1]} : vector<16x96xf32> to vector<16x32xf32>
    %185 = vector.extract_strided_slice %180 {offsets = [0, 64], sizes = [16, 32], strides = [1, 1]} : vector<16x96xf32> to vector<16x32xf32>
    %186 = vector.extract_strided_slice %183 {offsets = [0, 0], sizes = [16, 8], strides = [1, 1]} : vector<16x32xf32> to vector<16x8xf32>
    %187 = vector.extract_strided_slice %184 {offsets = [0, 0], sizes = [16, 8], strides = [1, 1]} : vector<16x32xf32> to vector<16x8xf32>
    %cst_82 = arith.constant dense<0.000000e+00> : vector<16x16xf32>
    %188 = tpu.matmul %186, %187, %cst_82 {dimension_numbers = #tpu.dot_dimension_numbers<[1], [1], [0], [0], [0, 0, 1, 0], [], []>} : vector<16x8xf32>, vector<16x8xf32>, vector<16x16xf32> -> vector<16x16xf32>
    %189 = arith.addf %188, %1 : vector<16x16xf32>
    %cst_83 = arith.constant dense<0xFF800000> : vector<16xf32>
    %190 = vector.multi_reduction <maximumf>, %189, %cst_83 [1] : vector<16x16xf32> to vector<16xf32>
    %191 = vector.shape_cast %190 : vector<16xf32> to vector<16x1xf32>
    %192 = vector.broadcast %191 : vector<16x1xf32> to vector<16x16xf32>
    %193 = arith.subf %189, %192 : vector<16x16xf32>
    %194 = math.exp %193 : vector<16x16xf32>
    %cst_84 = arith.constant dense<0.000000e+00> : vector<16xf32>
    %195 = vector.multi_reduction <add>, %194, %cst_84 [1] : vector<16x16xf32> to vector<16xf32>
    %196 = vector.shape_cast %195 : vector<16xf32> to vector<16x1xf32>
    %197 = tpu.reciprocal %196 {approx = true} : vector<16x1xf32> -> vector<16x1xf32>
    %198 = vector.broadcast %197 : vector<16x1xf32> to vector<16x16xf32>
    %199 = arith.mulf %194, %198 : vector<16x16xf32>
    %200 = vector.extract_strided_slice %185 {offsets = [0, 0], sizes = [16, 8], strides = [1, 1]} : vector<16x32xf32> to vector<16x8xf32>
    %cst_85 = arith.constant dense<0.000000e+00> : vector<16x8xf32>
    %201 = tpu.matmul %199, %200, %cst_85 {dimension_numbers = #tpu.dot_dimension_numbers<[1], [0], [0], [1], [0, 0, 1, 1], [], []>} : vector<16x16xf32>, vector<16x8xf32>, vector<16x8xf32> -> vector<16x8xf32>
    %202 = vector.extract_strided_slice %183 {offsets = [0, 8], sizes = [16, 8], strides = [1, 1]} : vector<16x32xf32> to vector<16x8xf32>
    %203 = vector.extract_strided_slice %184 {offsets = [0, 8], sizes = [16, 8], strides = [1, 1]} : vector<16x32xf32> to vector<16x8xf32>
    %cst_86 = arith.constant dense<0.000000e+00> : vector<16x16xf32>
    %204 = tpu.matmul %202, %203, %cst_86 {dimension_numbers = #tpu.dot_dimension_numbers<[1], [1], [0], [0], [0, 0, 1, 0], [], []>} : vector<16x8xf32>, vector<16x8xf32>, vector<16x16xf32> -> vector<16x16xf32>
    %205 = arith.addf %204, %1 : vector<16x16xf32>
    %cst_87 = arith.constant dense<0xFF800000> : vector<16xf32>
    %206 = vector.multi_reduction <maximumf>, %205, %cst_87 [1] : vector<16x16xf32> to vector<16xf32>
    %207 = vector.shape_cast %206 : vector<16xf32> to vector<16x1xf32>
    %208 = vector.broadcast %207 : vector<16x1xf32> to vector<16x16xf32>
    %209 = arith.subf %205, %208 : vector<16x16xf32>
    %210 = math.exp %209 : vector<16x16xf32>
    %cst_88 = arith.constant dense<0.000000e+00> : vector<16xf32>
    %211 = vector.multi_reduction <add>, %210, %cst_88 [1] : vector<16x16xf32> to vector<16xf32>
    %212 = vector.shape_cast %211 : vector<16xf32> to vector<16x1xf32>
    %213 = tpu.reciprocal %212 {approx = true} : vector<16x1xf32> -> vector<16x1xf32>
    %214 = vector.broadcast %213 : vector<16x1xf32> to vector<16x16xf32>
    %215 = arith.mulf %210, %214 : vector<16x16xf32>
    %216 = vector.extract_strided_slice %185 {offsets = [0, 8], sizes = [16, 8], strides = [1, 1]} : vector<16x32xf32> to vector<16x8xf32>
    %cst_89 = arith.constant dense<0.000000e+00> : vector<16x8xf32>
    %217 = tpu.matmul %215, %216, %cst_89 {dimension_numbers = #tpu.dot_dimension_numbers<[1], [0], [0], [1], [0, 0, 1, 1], [], []>} : vector<16x16xf32>, vector<16x8xf32>, vector<16x8xf32> -> vector<16x8xf32>
    %218 = vector.extract_strided_slice %183 {offsets = [0, 16], sizes = [16, 8], strides = [1, 1]} : vector<16x32xf32> to vector<16x8xf32>
    %219 = vector.extract_strided_slice %184 {offsets = [0, 16], sizes = [16, 8], strides = [1, 1]} : vector<16x32xf32> to vector<16x8xf32>
    %cst_90 = arith.constant dense<0.000000e+00> : vector<16x16xf32>
    %220 = tpu.matmul %218, %219, %cst_90 {dimension_numbers = #tpu.dot_dimension_numbers<[1], [1], [0], [0], [0, 0, 1, 0], [], []>} : vector<16x8xf32>, vector<16x8xf32>, vector<16x16xf32> -> vector<16x16xf32>
    %221 = arith.addf %220, %1 : vector<16x16xf32>
    %cst_91 = arith.constant dense<0xFF800000> : vector<16xf32>
    %222 = vector.multi_reduction <maximumf>, %221, %cst_91 [1] : vector<16x16xf32> to vector<16xf32>
    %223 = vector.shape_cast %222 : vector<16xf32> to vector<16x1xf32>
    %224 = vector.broadcast %223 : vector<16x1xf32> to vector<16x16xf32>
    %225 = arith.subf %221, %224 : vector<16x16xf32>
    %226 = math.exp %225 : vector<16x16xf32>
    %cst_92 = arith.constant dense<0.000000e+00> : vector<16xf32>
    %227 = vector.multi_reduction <add>, %226, %cst_92 [1] : vector<16x16xf32> to vector<16xf32>
    %228 = vector.shape_cast %227 : vector<16xf32> to vector<16x1xf32>
    %229 = tpu.reciprocal %228 {approx = true} : vector<16x1xf32> -> vector<16x1xf32>
    %230 = vector.broadcast %229 : vector<16x1xf32> to vector<16x16xf32>
    %231 = arith.mulf %226, %230 : vector<16x16xf32>
    %232 = vector.extract_strided_slice %185 {offsets = [0, 16], sizes = [16, 8], strides = [1, 1]} : vector<16x32xf32> to vector<16x8xf32>
    %cst_93 = arith.constant dense<0.000000e+00> : vector<16x8xf32>
    %233 = tpu.matmul %231, %232, %cst_93 {dimension_numbers = #tpu.dot_dimension_numbers<[1], [0], [0], [1], [0, 0, 1, 1], [], []>} : vector<16x16xf32>, vector<16x8xf32>, vector<16x8xf32> -> vector<16x8xf32>
    %234 = vector.extract_strided_slice %183 {offsets = [0, 24], sizes = [16, 8], strides = [1, 1]} : vector<16x32xf32> to vector<16x8xf32>
    %235 = vector.extract_strided_slice %184 {offsets = [0, 24], sizes = [16, 8], strides = [1, 1]} : vector<16x32xf32> to vector<16x8xf32>
    %cst_94 = arith.constant dense<0.000000e+00> : vector<16x16xf32>
    %236 = tpu.matmul %234, %235, %cst_94 {dimension_numbers = #tpu.dot_dimension_numbers<[1], [1], [0], [0], [0, 0, 1, 0], [], []>} : vector<16x8xf32>, vector<16x8xf32>, vector<16x16xf32> -> vector<16x16xf32>
    %237 = arith.addf %236, %1 : vector<16x16xf32>
    %cst_95 = arith.constant dense<0xFF800000> : vector<16xf32>
    %238 = vector.multi_reduction <maximumf>, %237, %cst_95 [1] : vector<16x16xf32> to vector<16xf32>
    %239 = vector.shape_cast %238 : vector<16xf32> to vector<16x1xf32>
    %240 = vector.broadcast %239 : vector<16x1xf32> to vector<16x16xf32>
    %241 = arith.subf %237, %240 : vector<16x16xf32>
    %242 = math.exp %241 : vector<16x16xf32>
    %cst_96 = arith.constant dense<0.000000e+00> : vector<16xf32>
    %243 = vector.multi_reduction <add>, %242, %cst_96 [1] : vector<16x16xf32> to vector<16xf32>
    %244 = vector.shape_cast %243 : vector<16xf32> to vector<16x1xf32>
    %245 = tpu.reciprocal %244 {approx = true} : vector<16x1xf32> -> vector<16x1xf32>
    %246 = vector.broadcast %245 : vector<16x1xf32> to vector<16x16xf32>
    %247 = arith.mulf %242, %246 : vector<16x16xf32>
    %248 = vector.extract_strided_slice %185 {offsets = [0, 24], sizes = [16, 8], strides = [1, 1]} : vector<16x32xf32> to vector<16x8xf32>
    %cst_97 = arith.constant dense<0.000000e+00> : vector<16x8xf32>
    %249 = tpu.matmul %247, %248, %cst_97 {dimension_numbers = #tpu.dot_dimension_numbers<[1], [0], [0], [1], [0, 0, 1, 1], [], []>} : vector<16x16xf32>, vector<16x8xf32>, vector<16x8xf32> -> vector<16x8xf32>
    %250 = tpu.concatenate %201, %217, %233, %249 in 1 : vector<16x8xf32>, vector<16x8xf32>, vector<16x8xf32>, vector<16x8xf32> -> vector<16x32xf32>
    %c1_98 = arith.constant 1 : index
    %c0_99 = arith.constant 0 : index
    %c0_100 = arith.constant 0 : index
    %251 = vector.load %arg6[%c1_98, %c0_99, %c0_100] : memref<2x32x32xf32, #tpu.memory_space<vmem>>, vector<1x32x32xf32>
    %252 = vector.shape_cast %251 : vector<1x32x32xf32> to vector<32x32xf32>
    %cst_101 = arith.constant dense<0.000000e+00> : vector<16x32xf32>
    %253 = tpu.matmul %250, %252, %cst_101 {dimension_numbers = #tpu.dot_dimension_numbers<[1], [0], [0], [1], [0, 0, 1, 1], [], []>} : vector<16x32xf32>, vector<32x32xf32>, vector<16x32xf32> -> vector<16x32xf32>
    %c1_102 = arith.constant 1 : index
    %c0_103 = arith.constant 0 : index
    %c0_104 = arith.constant 0 : index
    %254 = vector.load %arg7[%c1_102, %c0_103, %c0_104] : memref<2x1x32xf32, #tpu.memory_space<vmem>>, vector<1x1x32xf32>
    %255 = vector.shape_cast %254 : vector<1x1x32xf32> to vector<1x32xf32>
    %256 = vector.broadcast %255 : vector<1x32xf32> to vector<16x32xf32>
    %257 = arith.addf %253, %256 : vector<16x32xf32>
    %258 = arith.addf %151, %257 : vector<16x32xf32>
    %c1_105 = arith.constant 1 : index
    %c0_106 = arith.constant 0 : index
    %c0_107 = arith.constant 0 : index
    %259 = vector.load %arg8[%c1_105, %c0_106, %c0_107] : memref<2x1x32xf32, #tpu.memory_space<vmem>>, vector<1x1x32xf32>
    %260 = vector.shape_cast %259 : vector<1x1x32xf32> to vector<1x32xf32>
    %c1_108 = arith.constant 1 : index
    %c0_109 = arith.constant 0 : index
    %c0_110 = arith.constant 0 : index
    %261 = vector.load %arg9[%c1_108, %c0_109, %c0_110] : memref<2x1x32xf32, #tpu.memory_space<vmem>>, vector<1x1x32xf32>
    %262 = vector.shape_cast %261 : vector<1x1x32xf32> to vector<1x32xf32>
    %cst_111 = arith.constant dense<0.000000e+00> : vector<16xf32>
    %263 = vector.multi_reduction <add>, %258, %cst_111 [1] : vector<16x32xf32> to vector<16xf32>
    %264 = vector.shape_cast %263 : vector<16xf32> to vector<16x1xf32>
    %cst_112 = arith.constant 3.200000e+01 : f32
    %265 = vector.broadcast %cst_112 : f32 to vector<16x1xf32>
    %266 = arith.divf %264, %265 : vector<16x1xf32>
    %267 = vector.broadcast %266 : vector<16x1xf32> to vector<16x32xf32>
    %268 = arith.subf %258, %267 : vector<16x32xf32>
    %269 = arith.mulf %268, %268 : vector<16x32xf32>
    %cst_113 = arith.constant dense<0.000000e+00> : vector<16xf32>
    %270 = vector.multi_reduction <add>, %269, %cst_113 [1] : vector<16x32xf32> to vector<16xf32>
    %271 = vector.shape_cast %270 : vector<16xf32> to vector<16x1xf32>
    %cst_114 = arith.constant 3.200000e+01 : f32
    %272 = vector.broadcast %cst_114 : f32 to vector<16x1xf32>
    %273 = arith.divf %271, %272 : vector<16x1xf32>
    %274 = vector.broadcast %266 : vector<16x1xf32> to vector<16x32xf32>
    %275 = arith.subf %258, %274 : vector<16x32xf32>
    %cst_115 = arith.constant 9.99999974E-6 : f32
    %276 = vector.broadcast %cst_115 : f32 to vector<16x1xf32>
    %277 = arith.addf %273, %276 : vector<16x1xf32>
    %278 = math.rsqrt %277 : vector<16x1xf32>
    %279 = vector.broadcast %278 : vector<16x1xf32> to vector<16x32xf32>
    %280 = arith.mulf %275, %279 : vector<16x32xf32>
    %281 = vector.broadcast %260 : vector<1x32xf32> to vector<16x32xf32>
    %282 = arith.mulf %280, %281 : vector<16x32xf32>
    %283 = vector.broadcast %262 : vector<1x32xf32> to vector<16x32xf32>
    %284 = arith.addf %282, %283 : vector<16x32xf32>
    %c1_116 = arith.constant 1 : index
    %c0_117 = arith.constant 0 : index
    %c0_118 = arith.constant 0 : index
    %285 = vector.load %arg10[%c1_116, %c0_117, %c0_118] : memref<2x32x128xf32, #tpu.memory_space<vmem>>, vector<1x32x128xf32>
    %286 = vector.shape_cast %285 : vector<1x32x128xf32> to vector<32x128xf32>
    %cst_119 = arith.constant dense<0.000000e+00> : vector<16x128xf32>
    %287 = tpu.matmul %284, %286, %cst_119 {dimension_numbers = #tpu.dot_dimension_numbers<[1], [0], [0], [1], [0, 0, 1, 1], [], []>} : vector<16x32xf32>, vector<32x128xf32>, vector<16x128xf32> -> vector<16x128xf32>
    %c1_120 = arith.constant 1 : index
    %c0_121 = arith.constant 0 : index
    %c0_122 = arith.constant 0 : index
    %288 = vector.load %arg11[%c1_120, %c0_121, %c0_122] : memref<2x1x128xf32, #tpu.memory_space<vmem>>, vector<1x1x128xf32>
    %289 = vector.shape_cast %288 : vector<1x1x128xf32> to vector<1x128xf32>
    %290 = vector.broadcast %289 : vector<1x128xf32> to vector<16x128xf32>
    %291 = arith.addf %287, %290 : vector<16x128xf32>
    %cst_123 = arith.constant 0.000000e+00 : f32
    %292 = vector.broadcast %cst_123 : f32 to vector<16x128xf32>
    %293 = arith.maximumf %291, %292 : vector<16x128xf32>
    %c1_124 = arith.constant 1 : index
    %c0_125 = arith.constant 0 : index
    %c0_126 = arith.constant 0 : index
    %294 = vector.load %arg12[%c1_124, %c0_125, %c0_126] : memref<2x128x32xf32, #tpu.memory_space<vmem>>, vector<1x128x32xf32>
    %295 = vector.shape_cast %294 : vector<1x128x32xf32> to vector<128x32xf32>
    %cst_127 = arith.constant dense<0.000000e+00> : vector<16x32xf32>
    %296 = tpu.matmul %293, %295, %cst_127 {dimension_numbers = #tpu.dot_dimension_numbers<[1], [0], [0], [1], [0, 0, 1, 1], [], []>} : vector<16x128xf32>, vector<128x32xf32>, vector<16x32xf32> -> vector<16x32xf32>
    %297 = arith.addf %258, %296 : vector<16x32xf32>
    %c1_128 = arith.constant 1 : index
    %c0_129 = arith.constant 0 : index
    %c0_130 = arith.constant 0 : index
    %298 = vector.load %arg13[%c1_128, %c0_129, %c0_130] : memref<2x1x32xf32, #tpu.memory_space<vmem>>, vector<1x1x32xf32>
    %299 = vector.shape_cast %298 : vector<1x1x32xf32> to vector<1x32xf32>
    %300 = vector.broadcast %299 : vector<1x32xf32> to vector<16x32xf32>
    %301 = arith.addf %297, %300 : vector<16x32xf32>
    %c0_131 = arith.constant 0 : index
    %c0_132 = arith.constant 0 : index
    %302 = vector.load %arg14[%c0_131, %c0_132] : memref<1x32xf32, #tpu.memory_space<vmem>>, vector<1x32xf32>
    %c0_133 = arith.constant 0 : index
    %c0_134 = arith.constant 0 : index
    %303 = vector.load %arg15[%c0_133, %c0_134] : memref<1x32xf32, #tpu.memory_space<vmem>>, vector<1x32xf32>
    %cst_135 = arith.constant dense<0.000000e+00> : vector<16xf32>
    %304 = vector.multi_reduction <add>, %301, %cst_135 [1] : vector<16x32xf32> to vector<16xf32>
    %305 = vector.shape_cast %304 : vector<16xf32> to vector<16x1xf32>
    %cst_136 = arith.constant 3.200000e+01 : f32
    %306 = vector.broadcast %cst_136 : f32 to vector<16x1xf32>
    %307 = arith.divf %305, %306 : vector<16x1xf32>
    %308 = vector.broadcast %307 : vector<16x1xf32> to vector<16x32xf32>
    %309 = arith.subf %301, %308 : vector<16x32xf32>
    %310 = arith.mulf %309, %309 : vector<16x32xf32>
    %cst_137 = arith.constant dense<0.000000e+00> : vector<16xf32>
    %311 = vector.multi_reduction <add>, %310, %cst_137 [1] : vector<16x32xf32> to vector<16xf32>
    %312 = vector.shape_cast %311 : vector<16xf32> to vector<16x1xf32>
    %cst_138 = arith.constant 3.200000e+01 : f32
    %313 = vector.broadcast %cst_138 : f32 to vector<16x1xf32>
    %314 = arith.divf %312, %313 : vector<16x1xf32>
    %315 = vector.broadcast %307 : vector<16x1xf32> to vector<16x32xf32>
    %316 = arith.subf %301, %315 : vector<16x32xf32>
    %cst_139 = arith.constant 9.99999974E-6 : f32
    %317 = vector.broadcast %cst_139 : f32 to vector<16x1xf32>
    %318 = arith.addf %314, %317 : vector<16x1xf32>
    %319 = math.rsqrt %318 : vector<16x1xf32>
    %320 = vector.broadcast %319 : vector<16x1xf32> to vector<16x32xf32>
    %321 = arith.mulf %316, %320 : vector<16x32xf32>
    %322 = vector.broadcast %302 : vector<1x32xf32> to vector<16x32xf32>
    %323 = arith.mulf %321, %322 : vector<16x32xf32>
    %324 = vector.broadcast %303 : vector<1x32xf32> to vector<16x32xf32>
    %325 = arith.addf %323, %324 : vector<16x32xf32>
    %c0_140 = arith.constant 0 : index
    %c0_141 = arith.constant 0 : index
    %326 = vector.load %arg16[%c0_140, %c0_141] : memref<32x128xf32, #tpu.memory_space<vmem>>, vector<32x128xf32>
    %cst_142 = arith.constant dense<0.000000e+00> : vector<16x128xf32>
    %327 = tpu.matmul %325, %326, %cst_142 {dimension_numbers = #tpu.dot_dimension_numbers<[1], [0], [0], [1], [0, 0, 1, 1], [], []>} : vector<16x32xf32>, vector<32x128xf32>, vector<16x128xf32> -> vector<16x128xf32>
    %c0_143 = arith.constant 0 : index
    %c0_144 = arith.constant 0 : index
    %328 = vector.load %arg17[%c0_143, %c0_144] : memref<1x128xf32, #tpu.memory_space<vmem>>, vector<1x128xf32>
    %329 = vector.broadcast %328 : vector<1x128xf32> to vector<16x128xf32>
    %330 = arith.addf %327, %329 : vector<16x128xf32>
    %cst_145 = arith.constant dense<0xFF800000> : vector<16xf32>
    %331 = vector.multi_reduction <maximumf>, %330, %cst_145 [1] : vector<16x128xf32> to vector<16xf32>
    %332 = vector.shape_cast %331 : vector<16xf32> to vector<16x1xf32>
    %333 = vector.broadcast %332 : vector<16x1xf32> to vector<16x128xf32>
    %334 = arith.subf %330, %333 : vector<16x128xf32>
    %335 = math.exp %334 : vector<16x128xf32>
    %cst_146 = arith.constant dense<0.000000e+00> : vector<16xf32>
    %336 = vector.multi_reduction <add>, %335, %cst_146 [1] : vector<16x128xf32> to vector<16xf32>
    %337 = vector.shape_cast %336 : vector<16xf32> to vector<16x1xf32>
    %338 = tpu.reciprocal %337 : vector<16x1xf32> -> vector<16x1xf32>
    %339 = vector.broadcast %338 : vector<16x1xf32> to vector<16x128xf32>
    %340 = arith.mulf %335, %339 : vector<16x128xf32>
    %c0_147 = arith.constant 0 : index
    %c0_148 = arith.constant 0 : index
    %341 = vector.load %arg1[%c0_147, %c0_148] : memref<16x1xi32, #tpu.memory_space<vmem>>, vector<16x1xi32>
    %c27_i32 = arith.constant 27 : i32
    %342 = vector.broadcast %c27_i32 : i32 to vector<16x1xi32>
    %343 = arith.cmpi sge, %341, %342 : vector<16x1xi32>
    %cst_149 = arith.constant 0.000000e+00 : f32
    %344 = vector.shape_cast %343 : vector<16x1xi1> to vector<16x1xi1>
    %345 = vector.broadcast %344 : vector<16x1xi1> to vector<16x128xi1>
    %346 = vector.broadcast %cst_149 : f32 to vector<16x128xf32>
    %347 = arith.select %345, %340, %346 : vector<16x128xi1>, vector<16x128xf32>
    %cst_150 = arith.constant 1.000000e+00 : f32
    %348 = vector.broadcast %cst_150 : f32 to vector<16x128xf32>
    %349 = arith.subf %348, %347 : vector<16x128xf32>
    %cst_151 = arith.constant 1.000000e-30 : f32
    %350 = vector.broadcast %cst_151 : f32 to vector<16x128xf32>
    %351 = arith.maximumf %349, %350 : vector<16x128xf32>
    %352 = math.log %351 : vector<16x128xf32>
    %353 = vector.extract_strided_slice %352 {offsets = [0, 0], sizes = [8, 128], strides = [1, 1]} : vector<16x128xf32> to vector<8x128xf32>
    %cst_152 = arith.constant dense<0.000000e+00> : vector<128xf32>
    %354 = vector.multi_reduction <add>, %353, %cst_152 [0] : vector<8x128xf32> to vector<128xf32>
    %355 = vector.shape_cast %354 : vector<128xf32> to vector<1x128xf32>
    %356 = math.exp %355 : vector<1x128xf32>
    %cst_153 = arith.constant 1.000000e+00 : f32
    %357 = vector.broadcast %cst_153 : f32 to vector<1x128xf32>
    %358 = arith.subf %357, %356 : vector<1x128xf32>
    %359 = vector.extract_strided_slice %352 {offsets = [8, 0], sizes = [8, 128], strides = [1, 1]} : vector<16x128xf32> to vector<8x128xf32>
    %cst_154 = arith.constant dense<0.000000e+00> : vector<128xf32>
    %360 = vector.multi_reduction <add>, %359, %cst_154 [0] : vector<8x128xf32> to vector<128xf32>
    %361 = vector.shape_cast %360 : vector<128xf32> to vector<1x128xf32>
    %362 = math.exp %361 : vector<1x128xf32>
    %cst_155 = arith.constant 1.000000e+00 : f32
    %363 = vector.broadcast %cst_155 : f32 to vector<1x128xf32>
    %364 = arith.subf %363, %362 : vector<1x128xf32>
    %365 = tpu.concatenate %358, %364 in 0 : vector<1x128xf32>, vector<1x128xf32> -> vector<2x128xf32>
    %c0_156 = arith.constant 0 : index
    %c0_157 = arith.constant 0 : index
    %366 = vector.load %arg18[%c0_156, %c0_157] : memref<2x128xf32, #tpu.memory_space<vmem>>, vector<2x128xf32>
    tpu.vector_store %arg18[%c0_156, %c0_157], %365 {strides = array<i32>} : memref<2x128xf32, #tpu.memory_space<vmem>>, vector<2x128xf32>,
    return
  }
}

</mosaic_0001>

<llo_original>
// kernel: hangman_forward.1
$region0: #{hangman_forward.1}
  #allocation0 [shape = 'u32[]', space=smem, size = 0x4, offset = 0x4, fixed_abs, tag = 'smem constant byte address 0x4 - core index']
  #allocation1 [shape = 'u32[144,128]{1,0:T(1,128)}', space=vmem, size = 0x12000, scoped, tag = 'internal scratch']
  %s0 = inlined_call_operand.vmem [shape: f32[16,32], index: 0, kind: input, shape index: {}]
  %s1 = inlined_call_operand.vmem [shape: s32[16,1], index: 1, kind: input, shape index: {}]
  %s2 = inlined_call_operand.vmem [shape: f32[16,16], index: 2, kind: input, shape index: {}]
  %s3 = inlined_call_operand.vmem [shape: f32[2,1,32], index: 3, kind: input, shape index: {}]
  %s4 = inlined_call_operand.vmem [shape: f32[2,1,32], index: 4, kind: input, shape index: {}]
  %s5 = inlined_call_operand.vmem [shape: f32[2,32,96], index: 5, kind: input, shape index: {}]
  %s6 = inlined_call_operand.vmem [shape: f32[2,32,32], index: 6, kind: input, shape index: {}]
  %s7 = inlined_call_operand.vmem [shape: f32[2,1,32], index: 7, kind: input, shape index: {}]
  %s8 = inlined_call_operand.vmem [shape: f32[2,1,32], index: 8, kind: input, shape index: {}]
  %s9 = inlined_call_operand.vmem [shape: f32[2,1,32], index: 9, kind: input, shape index: {}]
  %s10 = inlined_call_operand.vmem [shape: f32[2,32,128], index: 10, kind: input, shape index: {}]
  %s11 = inlined_call_operand.vmem [shape: f32[2,1,128], index: 11, kind: input, shape index: {}]
  %s12 = inlined_call_operand.vmem [shape: f32[2,128,32], index: 12, kind: input, shape index: {}]
  %s13 = inlined_call_operand.vmem [shape: f32[2,1,32], index: 13, kind: input, shape index: {}]
  %s14 = inlined_call_operand.vmem [shape: f32[1,32], index: 14, kind: input, shape index: {}]
  %s15 = inlined_call_operand.vmem [shape: f32[1,32], index: 15, kind: input, shape index: {}]
  %s16 = inlined_call_operand.vmem [shape: f32[32,128], index: 16, kind: input, shape index: {}]
  %s17 = inlined_call_operand.vmem [shape: f32[1,128], index: 17, kind: input, shape index: {}]
  %s18 = inlined_call_operand.hbm [shape: f32[2,128], index: 18, kind: output, shape index: {}]
  %s19 = sld [smem:[#allocation0]]
  $region82: #{hangman_forward.1} parent=0
    _
  %s21 = ssub.s32 1, %s19
  %s22 = scalar_select 0, %s21, %s19
  $region1: #{hangman_forward.1} parent=0
    #allocation2 [shape = 'u8[1024]{0}', space=vmem, size = 0x400, scoped, tag = 'output window, operand 0, single buffered']
    #allocation3 [shape = 's32[1]{0}', space=sflag, size = 0x4, scoped, tag = 'scoped memory for hangman_forward.1']
    %23 = vsyncpa [#allocation3], 0
    // Predicated region
    $region2: #{hangman_forward.1} parent=1 // pred_check
      _
    $region3: #{hangman_forward.1} parent=1 // pred_check_branch
      %25 = sbr.rel (0) target = $region5
    $region4: #{hangman_forward.1} parent=1 // pred_region
      _
    $region5: #{hangman_forward.1} parent=1 // pred_fallthru
      _
    // Predicated region
    $region6: #{hangman_forward.1} parent=1 // pred_check
      _
    $region7: #{hangman_forward.1} parent=1 // pred_check_branch
      %27 = sbr.rel (0) target = $region9
    $region8: #{hangman_forward.1} parent=1 // pred_region
      _
    $region9: #{hangman_forward.1} parent=1 // pred_fallthru
      _
    // Predicated region
    $region10: #{hangman_forward.1} parent=1 // pred_check
      _
    $region11: #{hangman_forward.1} parent=1 // pred_check_branch
      %29 = sbr.rel (0) target = $region13
    $region12: #{hangman_forward.1} parent=1 // pred_region
      _
    $region13: #{hangman_forward.1} parent=1 // pred_fallthru
      _
    // Predicated region
    $region14: #{hangman_forward.1} parent=1 // pred_check
      _
    $region15: #{hangman_forward.1} parent=1 // pred_check_branch
      %31 = sbr.rel (0) target = $region17
    $region16: #{hangman_forward.1} parent=1 // pred_region
      _
    $region17: #{hangman_forward.1} parent=1 // pred_fallthru
      _
    // Predicated region
    $region18: #{hangman_forward.1} parent=1 // pred_check
      _
    $region19: #{hangman_forward.1} parent=1 // pred_check_branch
      %33 = sbr.rel (0) target = $region21
    $region20: #{hangman_forward.1} parent=1 // pred_region
      _
    $region21: #{hangman_forward.1} parent=1 // pred_fallthru
      _
    // Predicated region
    $region22: #{hangman_forward.1} parent=1 // pred_check
      _
    $region23: #{hangman_forward.1} parent=1 // pred_check_branch
      %35 = sbr.rel (0) target = $region25
    $region24: #{hangman_forward.1} parent=1 // pred_region
      _
    $region25: #{hangman_forward.1} parent=1 // pred_fallthru
      _
    // Predicated region
    $region26: #{hangman_forward.1} parent=1 // pred_check
      _
    $region27: #{hangman_forward.1} parent=1 // pred_check_branch
      %37 = sbr.rel (0) target = $region29
    $region28: #{hangman_forward.1} parent=1 // pred_region
      _
    $region29: #{hangman_forward.1} parent=1 // pred_fallthru
      _
    // Predicated region
    $region30: #{hangman_forward.1} parent=1 // pred_check
      _
    $region31: #{hangman_forward.1} parent=1 // pred_check_branch
      %39 = sbr.rel (0) target = $region33
    $region32: #{hangman_forward.1} parent=1 // pred_region
      _
    $region33: #{hangman_forward.1} parent=1 // pred_fallthru
      _
    // Predicated region
    $region34: #{hangman_forward.1} parent=1 // pred_check
      _
    $region35: #{hangman_forward.1} parent=1 // pred_check_branch
      %41 = sbr.rel (0) target = $region37
    $region36: #{hangman_forward.1} parent=1 // pred_region
      _
    $region37: #{hangman_forward.1} parent=1 // pred_fallthru
      _
    // Predicated region
    $region38: #{hangman_forward.1} parent=1 // pred_check
      _
    $region39: #{hangman_forward.1} parent=1 // pred_check_branch
      %43 = sbr.rel (0) target = $region41
    $region40: #{hangman_forward.1} parent=1 // pred_region
      _
    $region41: #{hangman_forward.1} parent=1 // pred_fallthru
      _
    // Predicated region
    $region42: #{hangman_forward.1} parent=1 // pred_check
      _
    $region43: #{hangman_forward.1} parent=1 // pred_check_branch
      %45 = sbr.rel (0) target = $region45
    $region44: #{hangman_forward.1} parent=1 // pred_region
      _
    $region45: #{hangman_forward.1} parent=1 // pred_fallthru
      _
    // Predicated region
    $region46: #{hangman_forward.1} parent=1 // pred_check
      _
    $region47: #{hangman_forward.1} parent=1 // pred_check_branch
      %47 = sbr.rel (0) target = $region49
    $region48: #{hangman_forward.1} parent=1 // pred_region
      _
    $region49: #{hangman_forward.1} parent=1 // pred_fallthru
      _
    // Predicated region
    $region50: #{hangman_forward.1} parent=1 // pred_check
      _
    $region51: #{hangman_forward.1} parent=1 // pred_check_branch
      %49 = sbr.rel (0) target = $region53
    $region52: #{hangman_forward.1} parent=1 // pred_region
      _
    $region53: #{hangman_forward.1} parent=1 // pred_fallthru
      _
    // Predicated region
    $region54: #{hangman_forward.1} parent=1 // pred_check
      _
    $region55: #{hangman_forward.1} parent=1 // pred_check_branch
      %51 = sbr.rel (0) target = $region57
    $region56: #{hangman_forward.1} parent=1 // pred_region
      _
    $region57: #{hangman_forward.1} parent=1 // pred_fallthru
      _
    // Predicated region
    $region58: #{hangman_forward.1} parent=1 // pred_check
      _
    $region59: #{hangman_forward.1} parent=1 // pred_check_branch
      %53 = sbr.rel (0) target = $region61
    $region60: #{hangman_forward.1} parent=1 // pred_region
      _
    $region61: #{hangman_forward.1} parent=1 // pred_fallthru
      _
    // Predicated region
    $region62: #{hangman_forward.1} parent=1 // pred_check
      _
    $region63: #{hangman_forward.1} parent=1 // pred_check_branch
      %55 = sbr.rel (0) target = $region65
    $region64: #{hangman_forward.1} parent=1 // pred_region
      _
    $region65: #{hangman_forward.1} parent=1 // pred_fallthru
      _
    // Predicated region
    $region66: #{hangman_forward.1} parent=1 // pred_check
      _
    $region67: #{hangman_forward.1} parent=1 // pred_check_branch
      %57 = sbr.rel (0) target = $region69
    $region68: #{hangman_forward.1} parent=1 // pred_region
      _
    $region69: #{hangman_forward.1} parent=1 // pred_fallthru
      _
    // Predicated region
    $region70: #{hangman_forward.1} parent=1 // pred_check
      _
    $region71: #{hangman_forward.1} parent=1 // pred_check_branch
      %59 = sbr.rel (0) target = $region73
    $region72: #{hangman_forward.1} parent=1 // pred_region
      _
    $region73: #{hangman_forward.1} parent=1 // pred_fallthru
      _
    %v60 = vld [vmem:[%s0] sm:$0xff]
    %v61 = vld [vmem:[%s0 + $0x8] sm:$0xff]
    %v62 = vld [vmem:[%s2] sm:$0xff]
    %v63 = vld [vmem:[%s2 + $0x8] sm:$0xff]
    %v64 = vld [vmem:[%s3] sm:$0x1]
    %v65 = vld [vmem:[%s4] sm:$0x1]
    %vm66 = vcmask 261120
    %v67 = vsel %vm66, %v60, 0.0
    %68 = vadd.xlane.f32.xlu0 %v67
    %v69 = vpop.xlane.xlu0 %68
    %v70 = vsel %vm66, %v61, 0.0
    %71 = vadd.xlane.f32.xlu0 %v70
    %v72 = vpop.xlane.xlu0 %71
    %v73 = vrcp.pop 32.0
    %v74 = vmul.f32 %v69, %v73
    %v75 = vmul.f32 %v72, %v73
    %v76 = vsub.f32 %v60, %v74
    %v77 = vsub.f32 %v61, %v75
    %v78 = vmul.f32 %v76, %v76
    %v79 = vmul.f32 %v77, %v77
    %v80 = vsel %vm66, %v78, 0.0
    %81 = vadd.xlane.f32.xlu0 %v80
    %v82 = vpop.xlane.xlu0 %81
    %v83 = vsel %vm66, %v79, 0.0
    %84 = vadd.xlane.f32.xlu0 %v83
    %v85 = vpop.xlane.xlu0 %84
    %v86 = vmul.f32 %v82, %v73
    %v87 = vmul.f32 %v85, %v73
    %v88 = vadd.f32 %v86, 1e-05
    %v89 = vadd.f32 %v87, 1e-05
    %v90 = vrsqrt.pop %v88
    %v91 = vrsqrt.pop %v89
    %v92 = vmul.f32 %v76, %v90
    %v93 = vmul.f32 %v77, %v91
    %v95 = vlaneseq
    %v96 = vshrl.u32 %v95, 7
    %v97 = vsub.s32 0, %v96
    %v98 = vrot.slane %v64, %v97
    %v100 = vmul.f32 %v92, %v98
    %v101 = vmul.f32 %v93, %v98
    %v103 = vlaneseq
    %v104 = vshrl.u32 %v103, 7
    %v105 = vsub.s32 0, %v104
    %v106 = vrot.slane %v65, %v105
    %v108 = vadd.f32 %v100, %v106
    %v109 = vadd.f32 %v101, %v106
    %v110 = vld [vmem:[%s5] sm:$0xff]
    %v111 = vld [vmem:[%s5 + $0x8] sm:$0xff]
    %v112 = vld [vmem:[%s5 + $0x10] sm:$0xff]
    %v113 = vld [vmem:[%s5 + $0x18] sm:$0xff]
    %v115 = vsel %vm66, %v108, 0
    %v118 = vsel %vm66, %v109, 0
    %120 = vmatprep.subr.mxu0 0.0
    %121 = vmatpush1.msra.mxu0 %v110
    %122 = vmatprep.subr.mxu0 0.0
    %123 = vmatpush1.msra.mxu0 %v111
    %124 = vmatprep.subr.mxu0 0.0
    %125 = vmatpush1.msra.mxu0 %v112
    %126 = vmatprep.subr.mxu0 0.0
    %127 = vmatpush1.msra.mxu0 %v113
    %128 = vmatprep.subr.mxu0 0.0
    %129 = vmatpush1.msra.mxu0 0.0
    %130 = vmatprep.subr.mxu0 0.0
    %131 = vmatpush1.msra.mxu0 0.0
    %132 = vmatprep.subr.mxu0 0.0
    %133 = vmatpush1.msra.mxu0 0.0
    %134 = vmatprep.subr.mxu0 0.0
    %135 = vmatpush1.msra.mxu0 0.0
    %136 = vmatprep.subr.mxu0 0.0
    %137 = vmatpush1.msra.mxu0 0.0
    %138 = vmatprep.subr.mxu0 0.0
    %139 = vmatpush1.msra.mxu0 0.0
    %140 = vmatprep.subr.mxu0 0.0
    %141 = vmatpush1.msra.mxu0 0.0
    %142 = vmatprep.subr.mxu0 0.0
    %143 = vmatpush1.msra.mxu0 0.0
    %144 = vmatprep.subr.mxu0 0.0
    %145 = vmatpush1.msra.mxu0 0.0
    %146 = vmatprep.subr.mxu0 0.0
    %147 = vmatpush1.msra.mxu0 0.0
    %148 = vmatprep.subr.mxu0 0.0
    %149 = vmatpush1.msra.mxu0 0.0
    %150 = vmatprep.subr.mxu0 0.0
    %151 = vmatpush1.msra.mxu0 0.0
    %152 = vmatprep.subr.mxu0 0.0
    %153 = vmatpush1.msra.mxu0 0.0
    %154 = vmatprep.subr.mxu0 0.0
    %155 = vmatpush1.msra.mxu0 0.0
    %156 = vmatprep.subr.mxu0 0.0
    %157 = vmatpush1.msra.mxu0 0.0
    %158 = vmatprep.subr.mxu0 0.0
    %159 = vmatpush1.msra.mxu0 0.0
    %160 = vmatprep.subr.mxu0 0.0
    %161 = vmatpush1.msra.mxu0 0.0
    %162 = vmatprep.subr.mxu0 0.0
    %163 = vmatpush1.msra.mxu0 0.0
    %164 = vmatprep.subr.mxu0 0.0
    %165 = vmatpush1.msra.mxu0 0.0
    %166 = vmatprep.subr.mxu0 0.0
    %167 = vmatpush1.msra.mxu0 0.0
    %168 = vmatprep.subr.mxu0 0.0
    %169 = vmatpush1.msra.mxu0 0.0
    %170 = vmatprep.subr.mxu0 0.0
    %171 = vmatpush1.msra.mxu0 0.0
    %172 = vmatprep.subr.mxu0 0.0
    %173 = vmatpush1.msra.mxu0 0.0
    %174 = vmatprep.subr.mxu0 0.0
    %175 = vmatpush1.msra.mxu0 0.0
    %176 = vmatprep.subr.mxu0 0.0
    %177 = vmatpush1.msra.mxu0 0.0
    %178 = vmatprep.subr.mxu0 0.0
    %179 = vmatpush1.msra.mxu0 0.0
    %180 = vmatprep.subr.mxu0 0.0
    %181 = vmatpush1.msra.mxu0 0.0
    %182 = vmatprep.subr.mxu0 0.0
    %183 = vmatpush1.msra.mxu0 0.0
    %184 = vmatprep.mubr.f32.mxu0 0.0
    %185 = vmatmul.mubr.f32.gmra.mrb[0].mxu0 %v115
    %v186 = vpop.f32.mrb[0].mxu0
    %v187 = vadd.f32 0.0, %v186
    %v188 = vpop.f32.mrb[0].mxu0
    %189 = vmatprep.mubr.f32.mxu0 0.0
    %190 = vmatmul.mubr.f32.gmra.mrb[0].mxu0 %v118
    %v191 = vpop.f32.mrb[0].mxu0
    %v192 = vadd.f32 0.0, %v191
    %v193 = vpop.f32.mrb[0].mxu0
    %194 = vdwg.mxu0
    %v195 = vmul.f32 %v187, 0.17677669
    %v196 = vmul.f32 %v192, 0.17677669
    %199 = vrot.lane.b32.xlu0 %v187, 96
    %v200 = vpop.permute.xlu0 %199
    %201 = vrot.lane.b32.xlu0 %v192, 96
    %v202 = vpop.permute.xlu0 %201
    %vm203 = vcmask 64512
    %v205 = vsel %vm203, %v195, 0
    %v208 = vsel %vm203, %v196, 0
    %v210 = vsel %vm203, %v200, 0
    %v212 = vsel %vm203, %v202, 0
    %214 = vmatprep.subr.mxu0 0.0
    %215 = vmatpush1.xpose.msra.mxu0 %v210
    %216 = vmatprep.subr.mxu0 0.0
    %217 = vmatpush1.xpose.msra.mxu0 %v212
    %218 = vmatprep.subr.mxu0 0.0
    %219 = vmatpush1.xpose.msra.mxu0 0.0
    %220 = vmatprep.subr.mxu0 0.0
    %221 = vmatpush1.xpose.msra.mxu0 0.0
    %222 = vmatprep.subr.mxu0 0.0
    %223 = vmatpush1.xpose.msra.mxu0 0.0
    %224 = vmatprep.subr.mxu0 0.0
    %225 = vmatpush1.xpose.msra.mxu0 0.0
    %226 = vmatprep.subr.mxu0 0.0
    %227 = vmatpush1.xpose.msra.mxu0 0.0
    %228 = vmatprep.subr.mxu0 0.0
    %229 = vmatpush1.xpose.msra.mxu0 0.0
    %230 = vmatprep.subr.mxu0 0.0
    %231 = vmatpush1.xpose.msra.mxu0 0.0
    %232 = vmatprep.subr.mxu0 0.0
    %233 = vmatpush1.xpose.msra.mxu0 0.0
    %234 = vmatprep.subr.mxu0 0.0
    %235 = vmatpush1.xpose.msra.mxu0 0.0
    %236 = vmatprep.subr.mxu0 0.0
    %237 = vmatpush1.xpose.msra.mxu0 0.0
    %238 = vmatprep.subr.mxu0 0.0
    %239 = vmatpush1.xpose.msra.mxu0 0.0
    %240 = vmatprep.subr.mxu0 0.0
    %241 = vmatpush1.xpose.msra.mxu0 0.0
    %242 = vmatprep.subr.mxu0 0.0
    %243 = vmatpush1.xpose.msra.mxu0 0.0
    %244 = vmatprep.subr.mxu0 0.0
    %245 = vmatpush1.xpose.msra.mxu0 0.0
    %246 = vmatprep.subr.mxu0 0.0
    %247 = vmatpush1.xpose.msra.mxu0 0.0
    %248 = vmatprep.subr.mxu0 0.0
    %249 = vmatpush1.xpose.msra.mxu0 0.0
    %250 = vmatprep.subr.mxu0 0.0
    %251 = vmatpush1.xpose.msra.mxu0 0.0
    %252 = vmatprep.subr.mxu0 0.0
    %253 = vmatpush1.xpose.msra.mxu0 0.0
    %254 = vmatprep.subr.mxu0 0.0
    %255 = vmatpush1.xpose.msra.mxu0 0.0
    %256 = vmatprep.subr.mxu0 0.0
    %257 = vmatpush1.xpose.msra.mxu0 0.0
    %258 = vmatprep.subr.mxu0 0.0
    %259 = vmatpush1.xpose.msra.mxu0 0.0
    %260 = vmatprep.subr.mxu0 0.0
    %261 = vmatpush1.xpose.msra.mxu0 0.0
    %262 = vmatprep.subr.mxu0 0.0
    %263 = vmatpush1.xpose.msra.mxu0 0.0
    %264 = vmatprep.subr.mxu0 0.0
    %265 = vmatpush1.xpose.msra.mxu0 0.0
    %266 = vmatprep.subr.mxu0 0.0
    %267 = vmatpush1.xpose.msra.mxu0 0.0
    %268 = vmatprep.subr.mxu0 0.0
    %269 = vmatpush1.xpose.msra.mxu0 0.0
    %270 = vmatprep.subr.mxu0 0.0
    %271 = vmatpush1.xpose.msra.mxu0 0.0
    %272 = vmatprep.subr.mxu0 0.0
    %273 = vmatpush1.xpose.msra.mxu0 0.0
    %274 = vmatprep.subr.mxu0 0.0
    %275 = vmatpush1.xpose.msra.mxu0 0.0
    %276 = vmatprep.subr.mxu0 0.0
    %277 = vmatpush1.xpose.msra.mxu0 0.0
    %278 = vmatprep.mubr.f32.mxu0 0.0
    %279 = vmatmul.mubr.f32.gmra.mrb[0].mxu0 %v205
    %v280 = vpop.f32.mrb[0].mxu0
    %v281 = vadd.f32 %v62, %v280
    %v282 = vpop.f32.mrb[0].mxu0
    %283 = vmatprep.mubr.f32.mxu0 0.0
    %284 = vmatmul.mubr.f32.gmra.mrb[0].mxu0 %v208
    %v285 = vpop.f32.mrb[0].mxu0
    %v286 = vadd.f32 %v63, %v285
    %v287 = vpop.f32.mrb[0].mxu0
    %288 = vdwg.mxu0
    %vm289 = vcmask 130048
    %v290 = vsel %vm289, %v281, -inf
    %291 = vmax.xlane.f32.xlu0 %v290
    %v292 = vpop.xlane.xlu0 %291
    %v293 = vsel %vm289, %v286, -inf
    %294 = vmax.xlane.f32.xlu0 %v293
    %v295 = vpop.xlane.xlu0 %294
    %v296 = vsub.f32 %v281, %v292
    %v297 = vsub.f32 %v286, %v295
    %v298 = vmul.f32 %v296, 1.442695
    %v299 = vpow.pop %v298
    %v300 = vmul.f32 %v297, 1.442695
    %v301 = vpow.pop %v300
    %v302 = vsel %vm289, %v299, 0.0
    %303 = vadd.xlane.f32.xlu0 %v302
    %v304 = vpop.xlane.xlu0 %303
    %v305 = vsel %vm289, %v301, 0.0
    %306 = vadd.xlane.f32.xlu0 %v305
    %v307 = vpop.xlane.xlu0 %306
    %v308 = vrcp.pop %v304
    %v309 = vrcp.pop %v307
    %v310 = vmul.f32 %v299, %v308
    %v311 = vmul.f32 %v301, %v309
    %312 = vrot.lane.b32.xlu0 %v187, 64
    %v313 = vpop.permute.xlu0 %312
    %314 = vrot.lane.b32.xlu0 %v192, 64
    %v315 = vpop.permute.xlu0 %314
    %v319 = vsel %vm289, %v310, 0
    %v322 = vsel %vm289, %v311, 0
    %324 = vmatprep.subr.mxu0 0.0
    %325 = vmatpush1.msra.mxu0 %v313
    %326 = vmatprep.subr.mxu0 0.0
    %327 = vmatpush1.msra.mxu0 %v315
    %328 = vmatprep.subr.mxu0 0.0
    %329 = vmatpush1.msra.mxu0 0.0
    %330 = vmatprep.subr.mxu0 0.0
    %331 = vmatpush1.msra.mxu0 0.0
    %332 = vmatprep.subr.mxu0 0.0
    %333 = vmatpush1.msra.mxu0 0.0
    %334 = vmatprep.subr.mxu0 0.0
    %335 = vmatpush1.msra.mxu0 0.0
    %336 = vmatprep.subr.mxu0 0.0
    %337 = vmatpush1.msra.mxu0 0.0
    %338 = vmatprep.subr.mxu0 0.0
    %339 = vmatpush1.msra.mxu0 0.0
    %340 = vmatprep.subr.mxu0 0.0
    %341 = vmatpush1.msra.mxu0 0.0
    %342 = vmatprep.subr.mxu0 0.0
    %343 = vmatpush1.msra.mxu0 0.0
    %344 = vmatprep.subr.mxu0 0.0
    %345 = vmatpush1.msra.mxu0 0.0
    %346 = vmatprep.subr.mxu0 0.0
    %347 = vmatpush1.msra.mxu0 0.0
    %348 = vmatprep.subr.mxu0 0.0
    %349 = vmatpush1.msra.mxu0 0.0
    %350 = vmatprep.subr.mxu0 0.0
    %351 = vmatpush1.msra.mxu0 0.0
    %352 = vmatprep.subr.mxu0 0.0
    %353 = vmatpush1.msra.mxu0 0.0
    %354 = vmatprep.subr.mxu0 0.0
    %355 = vmatpush1.msra.mxu0 0.0
    %356 = vmatprep.subr.mxu0 0.0
    %357 = vmatpush1.msra.mxu0 0.0
    %358 = vmatprep.subr.mxu0 0.0
    %359 = vmatpush1.msra.mxu0 0.0
    %360 = vmatprep.subr.mxu0 0.0
    %361 = vmatpush1.msra.mxu0 0.0
    %362 = vmatprep.subr.mxu0 0.0
    %363 = vmatpush1.msra.mxu0 0.0
    %364 = vmatprep.subr.mxu0 0.0
    %365 = vmatpush1.msra.mxu0 0.0
    %366 = vmatprep.subr.mxu0 0.0
    %367 = vmatpush1.msra.mxu0 0.0
    %368 = vmatprep.subr.mxu0 0.0
    %369 = vmatpush1.msra.mxu0 0.0
    %370 = vmatprep.subr.mxu0 0.0
    %371 = vmatpush1.msra.mxu0 0.0
    %372 = vmatprep.subr.mxu0 0.0
    %373 = vmatpush1.msra.mxu0 0.0
    %374 = vmatprep.subr.mxu0 0.0
    %375 = vmatpush1.msra.mxu0 0.0
    %376 = vmatprep.subr.mxu0 0.0
    %377 = vmatpush1.msra.mxu0 0.0
    %378 = vmatprep.subr.mxu0 0.0
    %379 = vmatpush1.msra.mxu0 0.0
    %380 = vmatprep.subr.mxu0 0.0
    %381 = vmatpush1.msra.mxu0 0.0
    %382 = vmatprep.subr.mxu0 0.0
    %383 = vmatpush1.msra.mxu0 0.0
    %384 = vmatprep.subr.mxu0 0.0
    %385 = vmatpush1.msra.mxu0 0.0
    %386 = vmatprep.subr.mxu0 0.0
    %387 = vmatpush1.msra.mxu0 0.0
    %388 = vmatprep.mubr.f32.mxu0 0.0
    %389 = vmatmul.mubr.f32.gmra.mrb[0].mxu0 %v319
    %v390 = vpop.f32.mrb[0].mxu0
    %v391 = vadd.f32 0.0, %v390
    %v392 = vpop.f32.mrb[0].mxu0
    %393 = vmatprep.mubr.f32.mxu0 0.0
    %394 = vmatmul.mubr.f32.gmra.mrb[0].mxu0 %v322
    %v395 = vpop.f32.mrb[0].mxu0
    %v396 = vadd.f32 0.0, %v395
    %v397 = vpop.f32.mrb[0].mxu0
    %398 = vdwg.mxu0
    %399 = vrot.lane.b32.xlu0 %v195, 120
    %v400 = vpop.permute.xlu0 %399
    %401 = vrot.lane.b32.xlu0 %v196, 120
    %v402 = vpop.permute.xlu0 %401
    %403 = vrot.lane.b32.xlu0 %v187, 88
    %v404 = vpop.permute.xlu0 %403
    %405 = vrot.lane.b32.xlu0 %v192, 88
    %v406 = vpop.permute.xlu0 %405
    %v407 = vsel %vm203, %v400, 0
    %v409 = vsel %vm203, %v402, 0
    %v411 = vsel %vm203, %v404, 0
    %v413 = vsel %vm203, %v406, 0
    %415 = vmatprep.subr.mxu0 0.0
    %416 = vmatpush1.xpose.msra.mxu0 %v411
    %417 = vmatprep.subr.mxu0 0.0
    %418 = vmatpush1.xpose.msra.mxu0 %v413
    %419 = vmatprep.subr.mxu0 0.0
    %420 = vmatpush1.xpose.msra.mxu0 0.0
    %421 = vmatprep.subr.mxu0 0.0
    %422 = vmatpush1.xpose.msra.mxu0 0.0
    %423 = vmatprep.subr.mxu0 0.0
    %424 = vmatpush1.xpose.msra.mxu0 0.0
    %425 = vmatprep.subr.mxu0 0.0
    %426 = vmatpush1.xpose.msra.mxu0 0.0
    %427 = vmatprep.subr.mxu0 0.0
    %428 = vmatpush1.xpose.msra.mxu0 0.0
    %429 = vmatprep.subr.mxu0 0.0
    %430 = vmatpush1.xpose.msra.mxu0 0.0
    %431 = vmatprep.subr.mxu0 0.0
    %432 = vmatpush1.xpose.msra.mxu0 0.0
    %433 = vmatprep.subr.mxu0 0.0
    %434 = vmatpush1.xpose.msra.mxu0 0.0
    %435 = vmatprep.subr.mxu0 0.0
    %436 = vmatpush1.xpose.msra.mxu0 0.0
    %437 = vmatprep.subr.mxu0 0.0
    %438 = vmatpush1.xpose.msra.mxu0 0.0
    %439 = vmatprep.subr.mxu0 0.0
    %440 = vmatpush1.xpose.msra.mxu0 0.0
    %441 = vmatprep.subr.mxu0 0.0
    %442 = vmatpush1.xpose.msra.mxu0 0.0
    %443 = vmatprep.subr.mxu0 0.0
    %444 = vmatpush1.xpose.msra.mxu0 0.0
    %445 = vmatprep.subr.mxu0 0.0
    %446 = vmatpush1.xpose.msra.mxu0 0.0
    %447 = vmatprep.subr.mxu0 0.0
    %448 = vmatpush1.xpose.msra.mxu0 0.0
    %449 = vmatprep.subr.mxu0 0.0
    %450 = vmatpush1.xpose.msra.mxu0 0.0
    %451 = vmatprep.subr.mxu0 0.0
    %452 = vmatpush1.xpose.msra.mxu0 0.0
    %453 = vmatprep.subr.mxu0 0.0
    %454 = vmatpush1.xpose.msra.mxu0 0.0
    %455 = vmatprep.subr.mxu0 0.0
    %456 = vmatpush1.xpose.msra.mxu0 0.0
    %457 = vmatprep.subr.mxu0 0.0
    %458 = vmatpush1.xpose.msra.mxu0 0.0
    %459 = vmatprep.subr.mxu0 0.0
    %460 = vmatpush1.xpose.msra.mxu0 0.0
    %461 = vmatprep.subr.mxu0 0.0
    %462 = vmatpush1.xpose.msra.mxu0 0.0
    %463 = vmatprep.subr.mxu0 0.0
    %464 = vmatpush1.xpose.msra.mxu0 0.0
    %465 = vmatprep.subr.mxu0 0.0
    %466 = vmatpush1.xpose.msra.mxu0 0.0
    %467 = vmatprep.subr.mxu0 0.0
    %468 = vmatpush1.xpose.msra.mxu0 0.0
    %469 = vmatprep.subr.mxu0 0.0
    %470 = vmatpush1.xpose.msra.mxu0 0.0
    %471 = vmatprep.subr.mxu0 0.0
    %472 = vmatpush1.xpose.msra.mxu0 0.0
    %473 = vmatprep.subr.mxu0 0.0
    %474 = vmatpush1.xpose.msra.mxu0 0.0
    %475 = vmatprep.subr.mxu0 0.0
    %476 = vmatpush1.xpose.msra.mxu0 0.0
    %477 = vmatprep.subr.mxu0 0.0
    %478 = vmatpush1.xpose.msra.mxu0 0.0
    %479 = vmatprep.mubr.f32.mxu0 0.0
    %480 = vmatmul.mubr.f32.gmra.mrb[0].mxu0 %v407
    %v481 = vpop.f32.mrb[0].mxu0
    %v482 = vadd.f32 %v62, %v481
    %v483 = vpop.f32.mrb[0].mxu0
    %484 = vmatprep.mubr.f32.mxu0 0.0
    %485 = vmatmul.mubr.f32.gmra.mrb[0].mxu0 %v409
    %v486 = vpop.f32.mrb[0].mxu0
    %v487 = vadd.f32 %v63, %v486
    %v488 = vpop.f32.mrb[0].mxu0
    %489 = vdwg.mxu0
    %v490 = vsel %vm289, %v482, -inf
    %491 = vmax.xlane.f32.xlu0 %v490
    %v492 = vpop.xlane.xlu0 %491
    %v493 = vsel %vm289, %v487, -inf
    %494 = vmax.xlane.f32.xlu0 %v493
    %v495 = vpop.xlane.xlu0 %494
    %v496 = vsub.f32 %v482, %v492
    %v497 = vsub.f32 %v487, %v495
    %v498 = vmul.f32 %v496, 1.442695
    %v499 = vpow.pop %v498
    %v500 = vmul.f32 %v497, 1.442695
    %v501 = vpow.pop %v500
    %v502 = vsel %vm289, %v499, 0.0
    %503 = vadd.xlane.f32.xlu0 %v502
    %v504 = vpop.xlane.xlu0 %503
    %v505 = vsel %vm289, %v501, 0.0
    %506 = vadd.xlane.f32.xlu0 %v505
    %v507 = vpop.xlane.xlu0 %506
    %v508 = vrcp.pop %v504
    %v509 = vrcp.pop %v507
    %v510 = vmul.f32 %v499, %v508
    %v511 = vmul.f32 %v501, %v509
    %512 = vrot.lane.b32.xlu0 %v187, 56
    %v513 = vpop.permute.xlu0 %512
    %514 = vrot.lane.b32.xlu0 %v192, 56
    %v515 = vpop.permute.xlu0 %514
    %v519 = vsel %vm289, %v510, 0
    %v522 = vsel %vm289, %v511, 0
    %524 = vmatprep.subr.mxu0 0.0
    %525 = vmatpush1.msra.mxu0 %v513
    %526 = vmatprep.subr.mxu0 0.0
    %527 = vmatpush1.msra.mxu0 %v515
    %528 = vmatprep.subr.mxu0 0.0
    %529 = vmatpush1.msra.mxu0 0.0
    %530 = vmatprep.subr.mxu0 0.0
    %531 = vmatpush1.msra.mxu0 0.0
    %532 = vmatprep.subr.mxu0 0.0
    %533 = vmatpush1.msra.mxu0 0.0
    %534 = vmatprep.subr.mxu0 0.0
    %535 = vmatpush1.msra.mxu0 0.0
    %536 = vmatprep.subr.mxu0 0.0
    %537 = vmatpush1.msra.mxu0 0.0
    %538 = vmatprep.subr.mxu0 0.0
    %539 = vmatpush1.msra.mxu0 0.0
    %540 = vmatprep.subr.mxu0 0.0
    %541 = vmatpush1.msra.mxu0 0.0
    %542 = vmatprep.subr.mxu0 0.0
    %543 = vmatpush1.msra.mxu0 0.0
    %544 = vmatprep.subr.mxu0 0.0
    %545 = vmatpush1.msra.mxu0 0.0
    %546 = vmatprep.subr.mxu0 0.0
    %547 = vmatpush1.msra.mxu0 0.0
    %548 = vmatprep.subr.mxu0 0.0
    %549 = vmatpush1.msra.mxu0 0.0
    %550 = vmatprep.subr.mxu0 0.0
    %551 = vmatpush1.msra.mxu0 0.0
    %552 = vmatprep.subr.mxu0 0.0
    %553 = vmatpush1.msra.mxu0 0.0
    %554 = vmatprep.subr.mxu0 0.0
    %555 = vmatpush1.msra.mxu0 0.0
    %556 = vmatprep.subr.mxu0 0.0
    %557 = vmatpush1.msra.mxu0 0.0
    %558 = vmatprep.subr.mxu0 0.0
    %559 = vmatpush1.msra.mxu0 0.0
    %560 = vmatprep.subr.mxu0 0.0
    %561 = vmatpush1.msra.mxu0 0.0
    %562 = vmatprep.subr.mxu0 0.0
    %563 = vmatpush1.msra.mxu0 0.0
    %564 = vmatprep.subr.mxu0 0.0
    %565 = vmatpush1.msra.mxu0 0.0
    %566 = vmatprep.subr.mxu0 0.0
    %567 = vmatpush1.msra.mxu0 0.0
    %568 = vmatprep.subr.mxu0 0.0
    %569 = vmatpush1.msra.mxu0 0.0
    %570 = vmatprep.subr.mxu0 0.0
    %571 = vmatpush1.msra.mxu0 0.0
    %572 = vmatprep.subr.mxu0 0.0
    %573 = vmatpush1.msra.mxu0 0.0
    %574 = vmatprep.subr.mxu0 0.0
    %575 = vmatpush1.msra.mxu0 0.0
    %576 = vmatprep.subr.mxu0 0.0
    %577 = vmatpush1.msra.mxu0 0.0
    %578 = vmatprep.subr.mxu0 0.0
    %579 = vmatpush1.msra.mxu0 0.0
    %580 = vmatprep.subr.mxu0 0.0
    %581 = vmatpush1.msra.mxu0 0.0
    %582 = vmatprep.subr.mxu0 0.0
    %583 = vmatpush1.msra.mxu0 0.0
    %584 = vmatprep.subr.mxu0 0.0
    %585 = vmatpush1.msra.mxu0 0.0
    %586 = vmatprep.subr.mxu0 0.0
    %587 = vmatpush1.msra.mxu0 0.0
    %588 = vmatprep.mubr.f32.mxu0 0.0
    %589 = vmatmul.mubr.f32.gmra.mrb[0].mxu0 %v519
    %v590 = vpop.f32.mrb[0].mxu0
    %v591 = vadd.f32 0.0, %v590
    %v592 = vpop.f32.mrb[0].mxu0
    %593 = vmatprep.mubr.f32.mxu0 0.0
    %594 = vmatmul.mubr.f32.gmra.mrb[0].mxu0 %v522
    %v595 = vpop.f32.mrb[0].mxu0
    %v596 = vadd.f32 0.0, %v595
    %v597 = vpop.f32.mrb[0].mxu0
    %598 = vdwg.mxu0
    %599 = vrot.lane.b32.xlu0 %v195, 112
    %v600 = vpop.permute.xlu0 %599
    %601 = vrot.lane.b32.xlu0 %v196, 112
    %v602 = vpop.permute.xlu0 %601
    %603 = vrot.lane.b32.xlu0 %v187, 80
    %v604 = vpop.permute.xlu0 %603
    %605 = vrot.lane.b32.xlu0 %v192, 80
    %v606 = vpop.permute.xlu0 %605
    %v607 = vsel %vm203, %v600, 0
    %v609 = vsel %vm203, %v602, 0
    %v611 = vsel %vm203, %v604, 0
    %v613 = vsel %vm203, %v606, 0
    %615 = vmatprep.subr.mxu0 0.0
    %616 = vmatpush1.xpose.msra.mxu0 %v611
    %617 = vmatprep.subr.mxu0 0.0
    %618 = vmatpush1.xpose.msra.mxu0 %v613
    %619 = vmatprep.subr.mxu0 0.0
    %620 = vmatpush1.xpose.msra.mxu0 0.0
    %621 = vmatprep.subr.mxu0 0.0
    %622 = vmatpush1.xpose.msra.mxu0 0.0
    %623 = vmatprep.subr.mxu0 0.0
    %624 = vmatpush1.xpose.msra.mxu0 0.0
    %625 = vmatprep.subr.mxu0 0.0
    %626 = vmatpush1.xpose.msra.mxu0 0.0
    %627 = vmatprep.subr.mxu0 0.0
    %628 = vmatpush1.xpose.msra.mxu0 0.0
    %629 = vmatprep.subr.mxu0 0.0
    %630 = vmatpush1.xpose.msra.mxu0 0.0
    %631 = vmatprep.subr.mxu0 0.0
    %632 = vmatpush1.xpose.msra.mxu0 0.0
    %633 = vmatprep.subr.mxu0 0.0
    %634 = vmatpush1.xpose.msra.mxu0 0.0
    %635 = vmatprep.subr.mxu0 0.0
    %636 = vmatpush1.xpose.msra.mxu0 0.0
    %637 = vmatprep.subr.mxu0 0.0
    %638 = vmatpush1.xpose.msra.mxu0 0.0
    %639 = vmatprep.subr.mxu0 0.0
    %640 = vmatpush1.xpose.msra.mxu0 0.0
    %641 = vmatprep.subr.mxu0 0.0
    %642 = vmatpush1.xpose.msra.mxu0 0.0
    %643 = vmatprep.subr.mxu0 0.0
    %644 = vmatpush1.xpose.msra.mxu0 0.0
    %645 = vmatprep.subr.mxu0 0.0
    %646 = vmatpush1.xpose.msra.mxu0 0.0
    %647 = vmatprep.subr.mxu0 0.0
    %648 = vmatpush1.xpose.msra.mxu0 0.0
    %649 = vmatprep.subr.mxu0 0.0
    %650 = vmatpush1.xpose.msra.mxu0 0.0
    %651 = vmatprep.subr.mxu0 0.0
    %652 = vmatpush1.xpose.msra.mxu0 0.0
    %653 = vmatprep.subr.mxu0 0.0
    %654 = vmatpush1.xpose.msra.mxu0 0.0
    %655 = vmatprep.subr.mxu0 0.0
    %656 = vmatpush1.xpose.msra.mxu0 0.0
    %657 = vmatprep.subr.mxu0 0.0
    %658 = vmatpush1.xpose.msra.mxu0 0.0
    %659 = vmatprep.subr.mxu0 0.0
    %660 = vmatpush1.xpose.msra.mxu0 0.0
    %661 = vmatprep.subr.mxu0 0.0
    %662 = vmatpush1.xpose.msra.mxu0 0.0
    %663 = vmatprep.subr.mxu0 0.0
    %664 = vmatpush1.xpose.msra.mxu0 0.0
    %665 = vmatprep.subr.mxu0 0.0
    %666 = vmatpush1.xpose.msra.mxu0 0.0
    %667 = vmatprep.subr.mxu0 0.0
    %668 = vmatpush1.xpose.msra.mxu0 0.0
    %669 = vmatprep.subr.mxu0 0.0
    %670 = vmatpush1.xpose.msra.mxu0 0.0
    %671 = vmatprep.subr.mxu0 0.0
    %672 = vmatpush1.xpose.msra.mxu0 0.0
    %673 = vmatprep.subr.mxu0 0.0
    %674 = vmatpush1.xpose.msra.mxu0 0.0
    %675 = vmatprep.subr.mxu0 0.0
    %676 = vmatpush1.xpose.msra.mxu0 0.0
    %677 = vmatprep.subr.mxu0 0.0
    %678 = vmatpush1.xpose.msra.mxu0 0.0
    %679 = vmatprep.mubr.f32.mxu0 0.0
    %680 = vmatmul.mubr.f32.gmra.mrb[0].mxu0 %v607
    %v681 = vpop.f32.mrb[0].mxu0
    %v682 = vadd.f32 %v62, %v681
    %v683 = vpop.f32.mrb[0].mxu0
    %684 = vmatprep.mubr.f32.mxu0 0.0
    %685 = vmatmul.mubr.f32.gmra.mrb[0].mxu0 %v609
    %v686 = vpop.f32.mrb[0].mxu0
    %v687 = vadd.f32 %v63, %v686
    %v688 = vpop.f32.mrb[0].mxu0
    %689 = vdwg.mxu0
    %v690 = vsel %vm289, %v682, -inf
    %691 = vmax.xlane.f32.xlu0 %v690
    %v692 = vpop.xlane.xlu0 %691
    %v693 = vsel %vm289, %v687, -inf
    %694 = vmax.xlane.f32.xlu0 %v693
    %v695 = vpop.xlane.xlu0 %694
    %v696 = vsub.f32 %v682, %v692
    %v697 = vsub.f32 %v687, %v695
    %v698 = vmul.f32 %v696, 1.442695
    %v699 = vpow.pop %v698
    %v700 = vmul.f32 %v697, 1.442695
    %v701 = vpow.pop %v700
    %v702 = vsel %vm289, %v699, 0.0
    %703 = vadd.xlane.f32.xlu0 %v702
    %v704 = vpop.xlane.xlu0 %703
    %v705 = vsel %vm289, %v701, 0.0
    %706 = vadd.xlane.f32.xlu0 %v705
    %v707 = vpop.xlane.xlu0 %706
    %v708 = vrcp.pop %v704
    %v709 = vrcp.pop %v707
    %v710 = vmul.f32 %v699, %v708
    %v711 = vmul.f32 %v701, %v709
    %712 = vrot.lane.b32.xlu0 %v187, 48
    %v713 = vpop.permute.xlu0 %712
    %714 = vrot.lane.b32.xlu0 %v192, 48
    %v715 = vpop.permute.xlu0 %714
    %v719 = vsel %vm289, %v710, 0
    %v722 = vsel %vm289, %v711, 0
    %724 = vmatprep.subr.mxu0 0.0
    %725 = vmatpush1.msra.mxu0 %v713
    %726 = vmatprep.subr.mxu0 0.0
    %727 = vmatpush1.msra.mxu0 %v715
    %728 = vmatprep.subr.mxu0 0.0
    %729 = vmatpush1.msra.mxu0 0.0
    %730 = vmatprep.subr.mxu0 0.0
    %731 = vmatpush1.msra.mxu0 0.0
    %732 = vmatprep.subr.mxu0 0.0
    %733 = vmatpush1.msra.mxu0 0.0
    %734 = vmatprep.subr.mxu0 0.0
    %735 = vmatpush1.msra.mxu0 0.0
    %736 = vmatprep.subr.mxu0 0.0
    %737 = vmatpush1.msra.mxu0 0.0
    %738 = vmatprep.subr.mxu0 0.0
    %739 = vmatpush1.msra.mxu0 0.0
    %740 = vmatprep.subr.mxu0 0.0
    %741 = vmatpush1.msra.mxu0 0.0
    %742 = vmatprep.subr.mxu0 0.0
    %743 = vmatpush1.msra.mxu0 0.0
    %744 = vmatprep.subr.mxu0 0.0
    %745 = vmatpush1.msra.mxu0 0.0
    %746 = vmatprep.subr.mxu0 0.0
    %747 = vmatpush1.msra.mxu0 0.0
    %748 = vmatprep.subr.mxu0 0.0
    %749 = vmatpush1.msra.mxu0 0.0
    %750 = vmatprep.subr.mxu0 0.0
    %751 = vmatpush1.msra.mxu0 0.0
    %752 = vmatprep.subr.mxu0 0.0
    %753 = vmatpush1.msra.mxu0 0.0
    %754 = vmatprep.subr.mxu0 0.0
    %755 = vmatpush1.msra.mxu0 0.0
    %756 = vmatprep.subr.mxu0 0.0
    %757 = vmatpush1.msra.mxu0 0.0
    %758 = vmatprep.subr.mxu0 0.0
    %759 = vmatpush1.msra.mxu0 0.0
    %760 = vmatprep.subr.mxu0 0.0
    %761 = vmatpush1.msra.mxu0 0.0
    %762 = vmatprep.subr.mxu0 0.0
    %763 = vmatpush1.msra.mxu0 0.0
    %764 = vmatprep.subr.mxu0 0.0
    %765 = vmatpush1.msra.mxu0 0.0
    %766 = vmatprep.subr.mxu0 0.0
    %767 = vmatpush1.msra.mxu0 0.0
    %768 = vmatprep.subr.mxu0 0.0
    %769 = vmatpush1.msra.mxu0 0.0
    %770 = vmatprep.subr.mxu0 0.0
    %771 = vmatpush1.msra.mxu0 0.0
    %772 = vmatprep.subr.mxu0 0.0
    %773 = vmatpush1.msra.mxu0 0.0
    %774 = vmatprep.subr.mxu0 0.0
    %775 = vmatpush1.msra.mxu0 0.0
    %776 = vmatprep.subr.mxu0 0.0
    %777 = vmatpush1.msra.mxu0 0.0
    %778 = vmatprep.subr.mxu0 0.0
    %779 = vmatpush1.msra.mxu0 0.0
    %780 = vmatprep.subr.mxu0 0.0
    %781 = vmatpush1.msra.mxu0 0.0
    %782 = vmatprep.subr.mxu0 0.0
    %783 = vmatpush1.msra.mxu0 0.0
    %784 = vmatprep.subr.mxu0 0.0
    %785 = vmatpush1.msra.mxu0 0.0
    %786 = vmatprep.subr.mxu0 0.0
    %787 = vmatpush1.msra.mxu0 0.0
    %788 = vmatprep.mubr.f32.mxu0 0.0
    %789 = vmatmul.mubr.f32.gmra.mrb[0].mxu0 %v719
    %v790 = vpop.f32.mrb[0].mxu0
    %v791 = vadd.f32 0.0, %v790
    %v792 = vpop.f32.mrb[0].mxu0
    %793 = vmatprep.mubr.f32.mxu0 0.0
    %794 = vmatmul.mubr.f32.gmra.mrb[0].mxu0 %v722
    %v795 = vpop.f32.mrb[0].mxu0
    %v796 = vadd.f32 0.0, %v795
    %v797 = vpop.f32.mrb[0].mxu0
    %798 = vdwg.mxu0
    %799 = vrot.lane.b32.xlu0 %v195, 104
    %v800 = vpop.permute.xlu0 %799
    %801 = vrot.lane.b32.xlu0 %v196, 104
    %v802 = vpop.permute.xlu0 %801
    %803 = vrot.lane.b32.xlu0 %v187, 72
    %v804 = vpop.permute.xlu0 %803
    %805 = vrot.lane.b32.xlu0 %v192, 72
    %v806 = vpop.permute.xlu0 %805
    %v807 = vsel %vm203, %v800, 0
    %v809 = vsel %vm203, %v802, 0
    %v811 = vsel %vm203, %v804, 0
    %v813 = vsel %vm203, %v806, 0
    %815 = vmatprep.subr.mxu0 0.0
    %816 = vmatpush1.xpose.msra.mxu0 %v811
    %817 = vmatprep.subr.mxu0 0.0
    %818 = vmatpush1.xpose.msra.mxu0 %v813
    %819 = vmatprep.subr.mxu0 0.0
    %820 = vmatpush1.xpose.msra.mxu0 0.0
    %821 = vmatprep.subr.mxu0 0.0
    %822 = vmatpush1.xpose.msra.mxu0 0.0
    %823 = vmatprep.subr.mxu0 0.0
    %824 = vmatpush1.xpose.msra.mxu0 0.0
    %825 = vmatprep.subr.mxu0 0.0
    %826 = vmatpush1.xpose.msra.mxu0 0.0
    %827 = vmatprep.subr.mxu0 0.0
    %828 = vmatpush1.xpose.msra.mxu0 0.0
    %829 = vmatprep.subr.mxu0 0.0
    %830 = vmatpush1.xpose.msra.mxu0 0.0
    %831 = vmatprep.subr.mxu0 0.0
    %832 = vmatpush1.xpose.msra.mxu0 0.0
    %833 = vmatprep.subr.mxu0 0.0
    %834 = vmatpush1.xpose.msra.mxu0 0.0
    %835 = vmatprep.subr.mxu0 0.0
    %836 = vmatpush1.xpose.msra.mxu0 0.0
    %837 = vmatprep.subr.mxu0 0.0
    %838 = vmatpush1.xpose.msra.mxu0 0.0
    %839 = vmatprep.subr.mxu0 0.0
    %840 = vmatpush1.xpose.msra.mxu0 0.0
    %841 = vmatprep.subr.mxu0 0.0
    %842 = vmatpush1.xpose.msra.mxu0 0.0
    %843 = vmatprep.subr.mxu0 0.0
    %844 = vmatpush1.xpose.msra.mxu0 0.0
    %845 = vmatprep.subr.mxu0 0.0
    %846 = vmatpush1.xpose.msra.mxu0 0.0
    %847 = vmatprep.subr.mxu0 0.0
    %848 = vmatpush1.xpose.msra.mxu0 0.0
    %849 = vmatprep.subr.mxu0 0.0
    %850 = vmatpush1.xpose.msra.mxu0 0.0
    %851 = vmatprep.subr.mxu0 0.0
    %852 = vmatpush1.xpose.msra.mxu0 0.0
    %853 = vmatprep.subr.mxu0 0.0
    %854 = vmatpush1.xpose.msra.mxu0 0.0
    %855 = vmatprep.subr.mxu0 0.0
    %856 = vmatpush1.xpose.msra.mxu0 0.0
    %857 = vmatprep.subr.mxu0 0.0
    %858 = vmatpush1.xpose.msra.mxu0 0.0
    %859 = vmatprep.subr.mxu0 0.0
    %860 = vmatpush1.xpose.msra.mxu0 0.0
    %861 = vmatprep.subr.mxu0 0.0
    %862 = vmatpush1.xpose.msra.mxu0 0.0
    %863 = vmatprep.subr.mxu0 0.0
    %864 = vmatpush1.xpose.msra.mxu0 0.0
    %865 = vmatprep.subr.mxu0 0.0
    %866 = vmatpush1.xpose.msra.mxu0 0.0
    %867 = vmatprep.subr.mxu0 0.0
    %868 = vmatpush1.xpose.msra.mxu0 0.0
    %869 = vmatprep.subr.mxu0 0.0
    %870 = vmatpush1.xpose.msra.mxu0 0.0
    %871 = vmatprep.subr.mxu0 0.0
    %872 = vmatpush1.xpose.msra.mxu0 0.0
    %873 = vmatprep.subr.mxu0 0.0
    %874 = vmatpush1.xpose.msra.mxu0 0.0
    %875 = vmatprep.subr.mxu0 0.0
    %876 = vmatpush1.xpose.msra.mxu0 0.0
    %877 = vmatprep.subr.mxu0 0.0
    %878 = vmatpush1.xpose.msra.mxu0 0.0
    %879 = vmatprep.mubr.f32.mxu0 0.0
    %880 = vmatmul.mubr.f32.gmra.mrb[0].mxu0 %v807
    %v881 = vpop.f32.mrb[0].mxu0
    %v882 = vadd.f32 %v62, %v881
    %v883 = vpop.f32.mrb[0].mxu0
    %884 = vmatprep.mubr.f32.mxu0 0.0
    %885 = vmatmul.mubr.f32.gmra.mrb[0].mxu0 %v809
    %v886 = vpop.f32.mrb[0].mxu0
    %v887 = vadd.f32 %v63, %v886
    %v888 = vpop.f32.mrb[0].mxu0
    %889 = vdwg.mxu0
    %v890 = vsel %vm289, %v882, -inf
    %891 = vmax.xlane.f32.xlu0 %v890
    %v892 = vpop.xlane.xlu0 %891
    %v893 = vsel %vm289, %v887, -inf
    %894 = vmax.xlane.f32.xlu0 %v893
    %v895 = vpop.xlane.xlu0 %894
    %v896 = vsub.f32 %v882, %v892
    %v897 = vsub.f32 %v887, %v895
    %v898 = vmul.f32 %v896, 1.442695
    %v899 = vpow.pop %v898
    %v900 = vmul.f32 %v897, 1.442695
    %v901 = vpow.pop %v900
    %v902 = vsel %vm289, %v899, 0.0
    %903 = vadd.xlane.f32.xlu0 %v902
    %v904 = vpop.xlane.xlu0 %903
    %v905 = vsel %vm289, %v901, 0.0
    %906 = vadd.xlane.f32.xlu0 %v905
    %v907 = vpop.xlane.xlu0 %906
    %v908 = vrcp.pop %v904
    %v909 = vrcp.pop %v907
    %v910 = vmul.f32 %v899, %v908
    %v911 = vmul.f32 %v901, %v909
    %912 = vrot.lane.b32.xlu0 %v187, 40
    %v913 = vpop.permute.xlu0 %912
    %914 = vrot.lane.b32.xlu0 %v192, 40
    %v915 = vpop.permute.xlu0 %914
    %v919 = vsel %vm289, %v910, 0
    %v922 = vsel %vm289, %v911, 0
    %924 = vmatprep.subr.mxu0 0.0
    %925 = vmatpush1.msra.mxu0 %v913
    %926 = vmatprep.subr.mxu0 0.0
    %927 = vmatpush1.msra.mxu0 %v915
    %928 = vmatprep.subr.mxu0 0.0
    %929 = vmatpush1.msra.mxu0 0.0
    %930 = vmatprep.subr.mxu0 0.0
    %931 = vmatpush1.msra.mxu0 0.0
    %932 = vmatprep.subr.mxu0 0.0
    %933 = vmatpush1.msra.mxu0 0.0
    %934 = vmatprep.subr.mxu0 0.0
    %935 = vmatpush1.msra.mxu0 0.0
    %936 = vmatprep.subr.mxu0 0.0
    %937 = vmatpush1.msra.mxu0 0.0
    %938 = vmatprep.subr.mxu0 0.0
    %939 = vmatpush1.msra.mxu0 0.0
    %940 = vmatprep.subr.mxu0 0.0
    %941 = vmatpush1.msra.mxu0 0.0
    %942 = vmatprep.subr.mxu0 0.0
    %943 = vmatpush1.msra.mxu0 0.0
    %944 = vmatprep.subr.mxu0 0.0
    %945 = vmatpush1.msra.mxu0 0.0
    %946 = vmatprep.subr.mxu0 0.0
    %947 = vmatpush1.msra.mxu0 0.0
    %948 = vmatprep.subr.mxu0 0.0
    %949 = vmatpush1.msra.mxu0 0.0
    %950 = vmatprep.subr.mxu0 0.0
    %951 = vmatpush1.msra.mxu0 0.0
    %952 = vmatprep.subr.mxu0 0.0
    %953 = vmatpush1.msra.mxu0 0.0
    %954 = vmatprep.subr.mxu0 0.0
    %955 = vmatpush1.msra.mxu0 0.0
    %956 = vmatprep.subr.mxu0 0.0
    %957 = vmatpush1.msra.mxu0 0.0
    %958 = vmatprep.subr.mxu0 0.0
    %959 = vmatpush1.msra.mxu0 0.0
    %960 = vmatprep.subr.mxu0 0.0
    %961 = vmatpush1.msra.mxu0 0.0
    %962 = vmatprep.subr.mxu0 0.0
    %963 = vmatpush1.msra.mxu0 0.0
    %964 = vmatprep.subr.mxu0 0.0
    %965 = vmatpush1.msra.mxu0 0.0
    %966 = vmatprep.subr.mxu0 0.0
    %967 = vmatpush1.msra.mxu0 0.0
    %968 = vmatprep.subr.mxu0 0.0
    %969 = vmatpush1.msra.mxu0 0.0
    %970 = vmatprep.subr.mxu0 0.0
    %971 = vmatpush1.msra.mxu0 0.0
    %972 = vmatprep.subr.mxu0 0.0
    %973 = vmatpush1.msra.mxu0 0.0
    %974 = vmatprep.subr.mxu0 0.0
    %975 = vmatpush1.msra.mxu0 0.0
    %976 = vmatprep.subr.mxu0 0.0
    %977 = vmatpush1.msra.mxu0 0.0
    %978 = vmatprep.subr.mxu0 0.0
    %979 = vmatpush1.msra.mxu0 0.0
    %980 = vmatprep.subr.mxu0 0.0
    %981 = vmatpush1.msra.mxu0 0.0
    %982 = vmatprep.subr.mxu0 0.0
    %983 = vmatpush1.msra.mxu0 0.0
    %984 = vmatprep.subr.mxu0 0.0
    %985 = vmatpush1.msra.mxu0 0.0
    %986 = vmatprep.subr.mxu0 0.0
    %987 = vmatpush1.msra.mxu0 0.0
    %988 = vmatprep.mubr.f32.mxu0 0.0
    %989 = vmatmul.mubr.f32.gmra.mrb[0].mxu0 %v919
    %v990 = vpop.f32.mrb[0].mxu0
    %v991 = vadd.f32 0.0, %v990
    %v992 = vpop.f32.mrb[0].mxu0
    %993 = vmatprep.mubr.f32.mxu0 0.0
    %994 = vmatmul.mubr.f32.gmra.mrb[0].mxu0 %v922
    %v995 = vpop.f32.mrb[0].mxu0
    %v996 = vadd.f32 0.0, %v995
    %v997 = vpop.f32.mrb[0].mxu0
    %998 = vdwg.mxu0
    %1001 = vrot.lane.b32.xlu0 %v591, 8
    %v1002 = vpop.permute.xlu0 %1001
    %1003 = vrot.lane.b32.xlu0 %v596, 8
    %v1004 = vpop.permute.xlu0 %1003
    %1009 = vrot.lane.b32.xlu0 %v791, 16
    %v1010 = vpop.permute.xlu0 %1009
    %1011 = vrot.lane.b32.xlu0 %v796, 16
    %v1012 = vpop.permute.xlu0 %1011
    %1017 = vrot.lane.b32.xlu0 %v991, 24
    %v1018 = vpop.permute.xlu0 %1017
    %1019 = vrot.lane.b32.xlu0 %v996, 24
    %v1020 = vpop.permute.xlu0 %1019
    %v1023 = vsel %vm203, %v391, %v1002
    %v1024 = vsel %vm203, %v396, %v1004
    %v1025 = vsel %vm289, %v1023, %v1010
    %v1026 = vsel %vm289, %v1024, %v1012
    %vm1027 = vcmask 195584
    %v1028 = vsel %vm1027, %v1025, %v1018
    %v1029 = vsel %vm1027, %v1026, %v1020
    %v1030 = vld [vmem:[%s6] sm:$0xff]
    %v1031 = vld [vmem:[%s6 + $0x8] sm:$0xff]
    %v1032 = vld [vmem:[%s6 + $0x10] sm:$0xff]
    %v1033 = vld [vmem:[%s6 + $0x18] sm:$0xff]
    %v1034 = vld [vmem:[%s7] sm:$0x1]
    %v1036 = vlaneseq
    %v1037 = vshrl.u32 %v1036, 7
    %v1038 = vsub.s32 0, %v1037
    %v1039 = vrot.slane %v1034, %v1038
    %v1042 = vsel %vm66, %v1028, 0
    %v1045 = vsel %vm66, %v1029, 0
    %1047 = vmatprep.subr.mxu0 0.0
    %1048 = vmatpush1.msra.mxu0 %v1030
    %1049 = vmatprep.subr.mxu0 0.0
    %1050 = vmatpush1.msra.mxu0 %v1031
    %1051 = vmatprep.subr.mxu0 0.0
    %1052 = vmatpush1.msra.mxu0 %v1032
    %1053 = vmatprep.subr.mxu0 0.0
    %1054 = vmatpush1.msra.mxu0 %v1033
    %1055 = vmatprep.subr.mxu0 0.0
    %1056 = vmatpush1.msra.mxu0 0.0
    %1057 = vmatprep.subr.mxu0 0.0
    %1058 = vmatpush1.msra.mxu0 0.0
    %1059 = vmatprep.subr.mxu0 0.0
    %1060 = vmatpush1.msra.mxu0 0.0
    %1061 = vmatprep.subr.mxu0 0.0
    %1062 = vmatpush1.msra.mxu0 0.0
    %1063 = vmatprep.subr.mxu0 0.0
    %1064 = vmatpush1.msra.mxu0 0.0
    %1065 = vmatprep.subr.mxu0 0.0
    %1066 = vmatpush1.msra.mxu0 0.0
    %1067 = vmatprep.subr.mxu0 0.0
    %1068 = vmatpush1.msra.mxu0 0.0
    %1069 = vmatprep.subr.mxu0 0.0
    %1070 = vmatpush1.msra.mxu0 0.0
    %1071 = vmatprep.subr.mxu0 0.0
    %1072 = vmatpush1.msra.mxu0 0.0
    %1073 = vmatprep.subr.mxu0 0.0
    %1074 = vmatpush1.msra.mxu0 0.0
    %1075 = vmatprep.subr.mxu0 0.0
    %1076 = vmatpush1.msra.mxu0 0.0
    %1077 = vmatprep.subr.mxu0 0.0
    %1078 = vmatpush1.msra.mxu0 0.0
    %1079 = vmatprep.subr.mxu0 0.0
    %1080 = vmatpush1.msra.mxu0 0.0
    %1081 = vmatprep.subr.mxu0 0.0
    %1082 = vmatpush1.msra.mxu0 0.0
    %1083 = vmatprep.subr.mxu0 0.0
    %1084 = vmatpush1.msra.mxu0 0.0
    %1085 = vmatprep.subr.mxu0 0.0
    %1086 = vmatpush1.msra.mxu0 0.0
    %1087 = vmatprep.subr.mxu0 0.0
    %1088 = vmatpush1.msra.mxu0 0.0
    %1089 = vmatprep.subr.mxu0 0.0
    %1090 = vmatpush1.msra.mxu0 0.0
    %1091 = vmatprep.subr.mxu0 0.0
    %1092 = vmatpush1.msra.mxu0 0.0
    %1093 = vmatprep.subr.mxu0 0.0
    %1094 = vmatpush1.msra.mxu0 0.0
    %1095 = vmatprep.subr.mxu0 0.0
    %1096 = vmatpush1.msra.mxu0 0.0
    %1097 = vmatprep.subr.mxu0 0.0
    %1098 = vmatpush1.msra.mxu0 0.0
    %1099 = vmatprep.subr.mxu0 0.0
    %1100 = vmatpush1.msra.mxu0 0.0
    %1101 = vmatprep.subr.mxu0 0.0
    %1102 = vmatpush1.msra.mxu0 0.0
    %1103 = vmatprep.subr.mxu0 0.0
    %1104 = vmatpush1.msra.mxu0 0.0
    %1105 = vmatprep.subr.mxu0 0.0
    %1106 = vmatpush1.msra.mxu0 0.0
    %1107 = vmatprep.subr.mxu0 0.0
    %1108 = vmatpush1.msra.mxu0 0.0
    %1109 = vmatprep.subr.mxu0 0.0
    %1110 = vmatpush1.msra.mxu0 0.0
    %1111 = vmatprep.mubr.f32.mxu0 0.0
    %1112 = vmatmul.mubr.f32.gmra.mrb[0].mxu0 %v1042
    %v1113 = vpop.f32.mrb[0].mxu0
    %v1114 = vadd.f32 %v1039, %v1113
    %v1115 = vpop.f32.mrb[0].mxu0
    %1116 = vmatprep.mubr.f32.mxu0 0.0
    %1117 = vmatmul.mubr.f32.gmra.mrb[0].mxu0 %v1045
    %v1118 = vpop.f32.mrb[0].mxu0
    %v1119 = vadd.f32 %v1039, %v1118
    %v1120 = vpop.f32.mrb[0].mxu0
    %1121 = vdwg.mxu0
    %v1122 = vadd.f32 %v60, %v1114
    %v1123 = vadd.f32 %v61, %v1119
    %v1124 = vld [vmem:[%s8] sm:$0x1]
    %v1125 = vld [vmem:[%s9] sm:$0x1]
    %v1126 = vsel %vm66, %v1122, 0.0
    %1127 = vadd.xlane.f32.xlu0 %v1126
    %v1128 = vpop.xlane.xlu0 %1127
    %v1129 = vsel %vm66, %v1123, 0.0
    %1130 = vadd.xlane.f32.xlu0 %v1129
    %v1131 = vpop.xlane.xlu0 %1130
    %v1132 = vmul.f32 %v1128, %v73
    %v1133 = vmul.f32 %v1131, %v73
    %v1134 = vsub.f32 %v1122, %v1132
    %v1135 = vsub.f32 %v1123, %v1133
    %v1136 = vmul.f32 %v1134, %v1134
    %v1137 = vmul.f32 %v1135, %v1135
    %v1138 = vsel %vm66, %v1136, 0.0
    %1139 = vadd.xlane.f32.xlu0 %v1138
    %v1140 = vpop.xlane.xlu0 %1139
    %v1141 = vsel %vm66, %v1137, 0.0
    %1142 = vadd.xlane.f32.xlu0 %v1141
    %v1143 = vpop.xlane.xlu0 %1142
    %v1144 = vmul.f32 %v1140, %v73
    %v1145 = vmul.f32 %v1143, %v73
    %v1146 = vadd.f32 %v1144, 1e-05
    %v1147 = vadd.f32 %v1145, 1e-05
    %v1148 = vrsqrt.pop %v1146
    %v1149 = vrsqrt.pop %v1147
    %v1150 = vmul.f32 %v1134, %v1148
    %v1151 = vmul.f32 %v1135, %v1149
    %v1153 = vlaneseq
    %v1154 = vshrl.u32 %v1153, 7
    %v1155 = vsub.s32 0, %v1154
    %v1156 = vrot.slane %v1124, %v1155
    %v1158 = vmul.f32 %v1150, %v1156
    %v1159 = vmul.f32 %v1151, %v1156
    %v1161 = vlaneseq
    %v1162 = vshrl.u32 %v1161, 7
    %v1163 = vsub.s32 0, %v1162
    %v1164 = vrot.slane %v1125, %v1163
    %v1166 = vadd.f32 %v1158, %v1164
    %v1167 = vadd.f32 %v1159, %v1164
    %v1168 = vld [vmem:[%s10] sm:$0xff]
    %v1169 = vld [vmem:[%s10 + $0x8] sm:$0xff]
    %v1170 = vld [vmem:[%s10 + $0x10] sm:$0xff]
    %v1171 = vld [vmem:[%s10 + $0x18] sm:$0xff]
    %v1172 = vld [vmem:[%s11] sm:$0x1]
    %v1174 = vlaneseq
    %v1175 = vshrl.u32 %v1174, 7
    %v1176 = vsub.s32 0, %v1175
    %v1177 = vrot.slane %v1172, %v1176
    %v1180 = vsel %vm66, %v1166, 0
    %v1183 = vsel %vm66, %v1167, 0
    %1185 = vmatprep.subr.mxu0 0.0
    %1186 = vmatpush1.msra.mxu0 %v1168
    %1187 = vmatprep.subr.mxu0 0.0
    %1188 = vmatpush1.msra.mxu0 %v1169
    %1189 = vmatprep.subr.mxu0 0.0
    %1190 = vmatpush1.msra.mxu0 %v1170
    %1191 = vmatprep.subr.mxu0 0.0
    %1192 = vmatpush1.msra.mxu0 %v1171
    %1193 = vmatprep.subr.mxu0 0.0
    %1194 = vmatpush1.msra.mxu0 0.0
    %1195 = vmatprep.subr.mxu0 0.0
    %1196 = vmatpush1.msra.mxu0 0.0
    %1197 = vmatprep.subr.mxu0 0.0
    %1198 = vmatpush1.msra.mxu0 0.0
    %1199 = vmatprep.subr.mxu0 0.0
    %1200 = vmatpush1.msra.mxu0 0.0
    %1201 = vmatprep.subr.mxu0 0.0
    %1202 = vmatpush1.msra.mxu0 0.0
    %1203 = vmatprep.subr.mxu0 0.0
    %1204 = vmatpush1.msra.mxu0 0.0
    %1205 = vmatprep.subr.mxu0 0.0
    %1206 = vmatpush1.msra.mxu0 0.0
    %1207 = vmatprep.subr.mxu0 0.0
    %1208 = vmatpush1.msra.mxu0 0.0
    %1209 = vmatprep.subr.mxu0 0.0
    %1210 = vmatpush1.msra.mxu0 0.0
    %1211 = vmatprep.subr.mxu0 0.0
    %1212 = vmatpush1.msra.mxu0 0.0
    %1213 = vmatprep.subr.mxu0 0.0
    %1214 = vmatpush1.msra.mxu0 0.0
    %1215 = vmatprep.subr.mxu0 0.0
    %1216 = vmatpush1.msra.mxu0 0.0
    %1217 = vmatprep.subr.mxu0 0.0
    %1218 = vmatpush1.msra.mxu0 0.0
    %1219 = vmatprep.subr.mxu0 0.0
    %1220 = vmatpush1.msra.mxu0 0.0
    %1221 = vmatprep.subr.mxu0 0.0
    %1222 = vmatpush1.msra.mxu0 0.0
    %1223 = vmatprep.subr.mxu0 0.0
    %1224 = vmatpush1.msra.mxu0 0.0
    %1225 = vmatprep.subr.mxu0 0.0
    %1226 = vmatpush1.msra.mxu0 0.0
    %1227 = vmatprep.subr.mxu0 0.0
    %1228 = vmatpush1.msra.mxu0 0.0
    %1229 = vmatprep.subr.mxu0 0.0
    %1230 = vmatpush1.msra.mxu0 0.0
    %1231 = vmatprep.subr.mxu0 0.0
    %1232 = vmatpush1.msra.mxu0 0.0
    %1233 = vmatprep.subr.mxu0 0.0
    %1234 = vmatpush1.msra.mxu0 0.0
    %1235 = vmatprep.subr.mxu0 0.0
    %1236 = vmatpush1.msra.mxu0 0.0
    %1237 = vmatprep.subr.mxu0 0.0
    %1238 = vmatpush1.msra.mxu0 0.0
    %1239 = vmatprep.subr.mxu0 0.0
    %1240 = vmatpush1.msra.mxu0 0.0
    %1241 = vmatprep.subr.mxu0 0.0
    %1242 = vmatpush1.msra.mxu0 0.0
    %1243 = vmatprep.subr.mxu0 0.0
    %1244 = vmatpush1.msra.mxu0 0.0
    %1245 = vmatprep.subr.mxu0 0.0
    %1246 = vmatpush1.msra.mxu0 0.0
    %1247 = vmatprep.subr.mxu0 0.0
    %1248 = vmatpush1.msra.mxu0 0.0
    %1249 = vmatprep.mubr.f32.mxu0 0.0
    %1250 = vmatmul.mubr.f32.gmra.mrb[0].mxu0 %v1180
    %v1251 = vpop.f32.mrb[0].mxu0
    %v1252 = vadd.f32 %v1177, %v1251
    %v1253 = vpop.f32.mrb[0].mxu0
    %1254 = vmatprep.mubr.f32.mxu0 0.0
    %1255 = vmatmul.mubr.f32.gmra.mrb[0].mxu0 %v1183
    %v1256 = vpop.f32.mrb[0].mxu0
    %v1257 = vadd.f32 %v1177, %v1256
    %v1258 = vpop.f32.mrb[0].mxu0
    %1259 = vdwg.mxu0
    %v1260 = vmax.f32 %v1252, 0.0
    %v1261 = vmax.f32 %v1257, 0.0
    %v1262 = vld [vmem:[%s12] sm:$0xff]
    %v1263 = vld [vmem:[%s12 + $0x8] sm:$0xff]
    %v1264 = vld [vmem:[%s12 + $0x10] sm:$0xff]
    %v1265 = vld [vmem:[%s12 + $0x18] sm:$0xff]
    %v1266 = vld [vmem:[%s12 + $0x20] sm:$0xff]
    %v1267 = vld [vmem:[%s12 + $0x28] sm:$0xff]
    %v1268 = vld [vmem:[%s12 + $0x30] sm:$0xff]
    %v1269 = vld [vmem:[%s12 + $0x38] sm:$0xff]
    %v1270 = vld [vmem:[%s12 + $0x40] sm:$0xff]
    %v1271 = vld [vmem:[%s12 + $0x48] sm:$0xff]
    %v1272 = vld [vmem:[%s12 + $0x50] sm:$0xff]
    %v1273 = vld [vmem:[%s12 + $0x58] sm:$0xff]
    %v1274 = vld [vmem:[%s12 + $0x60] sm:$0xff]
    %v1275 = vld [vmem:[%s12 + $0x68] sm:$0xff]
    %v1276 = vld [vmem:[%s12 + $0x70] sm:$0xff]
    %v1277 = vld [vmem:[%s12 + $0x78] sm:$0xff]
    %1278 = vmatprep.subr.mxu0 0.0
    %1279 = vmatpush1.msra.mxu0 %v1262
    %1280 = vmatprep.subr.mxu0 0.0
    %1281 = vmatpush1.msra.mxu0 %v1263
    %1282 = vmatprep.subr.mxu0 0.0
    %1283 = vmatpush1.msra.mxu0 %v1264
    %1284 = vmatprep.subr.mxu0 0.0
    %1285 = vmatpush1.msra.mxu0 %v1265
    %1286 = vmatprep.subr.mxu0 0.0
    %1287 = vmatpush1.msra.mxu0 %v1266
    %1288 = vmatprep.subr.mxu0 0.0
    %1289 = vmatpush1.msra.mxu0 %v1267
    %1290 = vmatprep.subr.mxu0 0.0
    %1291 = vmatpush1.msra.mxu0 %v1268
    %1292 = vmatprep.subr.mxu0 0.0
    %1293 = vmatpush1.msra.mxu0 %v1269
    %1294 = vmatprep.subr.mxu0 0.0
    %1295 = vmatpush1.msra.mxu0 %v1270
    %1296 = vmatprep.subr.mxu0 0.0
    %1297 = vmatpush1.msra.mxu0 %v1271
    %1298 = vmatprep.subr.mxu0 0.0
    %1299 = vmatpush1.msra.mxu0 %v1272
    %1300 = vmatprep.subr.mxu0 0.0
    %1301 = vmatpush1.msra.mxu0 %v1273
    %1302 = vmatprep.subr.mxu0 0.0
    %1303 = vmatpush1.msra.mxu0 %v1274
    %1304 = vmatprep.subr.mxu0 0.0
    %1305 = vmatpush1.msra.mxu0 %v1275
    %1306 = vmatprep.subr.mxu0 0.0
    %1307 = vmatpush1.msra.mxu0 %v1276
    %1308 = vmatprep.subr.mxu0 0.0
    %1309 = vmatpush1.msra.mxu0 %v1277
    %1310 = vmatprep.subr.mxu0 0.0
    %1311 = vmatpush1.msra.mxu0 0.0
    %1312 = vmatprep.subr.mxu0 0.0
    %1313 = vmatpush1.msra.mxu0 0.0
    %1314 = vmatprep.subr.mxu0 0.0
    %1315 = vmatpush1.msra.mxu0 0.0
    %1316 = vmatprep.subr.mxu0 0.0
    %1317 = vmatpush1.msra.mxu0 0.0
    %1318 = vmatprep.subr.mxu0 0.0
    %1319 = vmatpush1.msra.mxu0 0.0
    %1320 = vmatprep.subr.mxu0 0.0
    %1321 = vmatpush1.msra.mxu0 0.0
    %1322 = vmatprep.subr.mxu0 0.0
    %1323 = vmatpush1.msra.mxu0 0.0
    %1324 = vmatprep.subr.mxu0 0.0
    %1325 = vmatpush1.msra.mxu0 0.0
    %1326 = vmatprep.subr.mxu0 0.0
    %1327 = vmatpush1.msra.mxu0 0.0
    %1328 = vmatprep.subr.mxu0 0.0
    %1329 = vmatpush1.msra.mxu0 0.0
    %1330 = vmatprep.subr.mxu0 0.0
    %1331 = vmatpush1.msra.mxu0 0.0
    %1332 = vmatprep.subr.mxu0 0.0
    %1333 = vmatpush1.msra.mxu0 0.0
    %1334 = vmatprep.subr.mxu0 0.0
    %1335 = vmatpush1.msra.mxu0 0.0
    %1336 = vmatprep.subr.mxu0 0.0
    %1337 = vmatpush1.msra.mxu0 0.0
    %1338 = vmatprep.subr.mxu0 0.0
    %1339 = vmatpush1.msra.mxu0 0.0
    %1340 = vmatprep.subr.mxu0 0.0
    %1341 = vmatpush1.msra.mxu0 0.0
    %1342 = vmatprep.mubr.f32.mxu0 0.0
    %1343 = vmatmul.mubr.f32.gmra.mrb[0].mxu0 %v1260
    %v1344 = vpop.f32.mrb[0].mxu0
    %v1345 = vadd.f32 0.0, %v1344
    %v1346 = vpop.f32.mrb[0].mxu0
    %1347 = vmatprep.mubr.f32.mxu0 0.0
    %1348 = vmatmul.mubr.f32.gmra.mrb[0].mxu0 %v1261
    %v1349 = vpop.f32.mrb[0].mxu0
    %v1350 = vadd.f32 0.0, %v1349
    %v1351 = vpop.f32.mrb[0].mxu0
    %1352 = vdwg.mxu0
    %v1353 = vadd.f32 %v1122, %v1345
    %v1354 = vadd.f32 %v1123, %v1350
    %v1355 = vld [vmem:[%s13] sm:$0x1]
    %v1357 = vlaneseq
    %v1358 = vshrl.u32 %v1357, 7
    %v1359 = vsub.s32 0, %v1358
    %v1360 = vrot.slane %v1355, %v1359
    %v1362 = vadd.f32 %v1353, %v1360
    %v1363 = vadd.f32 %v1354, %v1360
    %s1364 = scalar_lea.vmem %s3, 1
    %v1365 = vld [vmem:[%s1364] sm:$0x1]
    %s1366 = scalar_lea.vmem %s4, 1
    %v1367 = vld [vmem:[%s1366] sm:$0x1]
    %v1368 = vsel %vm66, %v1362, 0.0
    %1369 = vadd.xlane.f32.xlu0 %v1368
    %v1370 = vpop.xlane.xlu0 %1369
    %v1371 = vsel %vm66, %v1363, 0.0
    %1372 = vadd.xlane.f32.xlu0 %v1371
    %v1373 = vpop.xlane.xlu0 %1372
    %v1374 = vmul.f32 %v1370, %v73
    %v1375 = vmul.f32 %v1373, %v73
    %v1376 = vsub.f32 %v1362, %v1374
    %v1377 = vsub.f32 %v1363, %v1375
    %v1378 = vmul.f32 %v1376, %v1376
    %v1379 = vmul.f32 %v1377, %v1377
    %v1380 = vsel %vm66, %v1378, 0.0
    %1381 = vadd.xlane.f32.xlu0 %v1380
    %v1382 = vpop.xlane.xlu0 %1381
    %v1383 = vsel %vm66, %v1379, 0.0
    %1384 = vadd.xlane.f32.xlu0 %v1383
    %v1385 = vpop.xlane.xlu0 %1384
    %v1386 = vmul.f32 %v1382, %v73
    %v1387 = vmul.f32 %v1385, %v73
    %v1388 = vadd.f32 %v1386, 1e-05
    %v1389 = vadd.f32 %v1387, 1e-05
    %v1390 = vrsqrt.pop %v1388
    %v1391 = vrsqrt.pop %v1389
    %v1392 = vmul.f32 %v1376, %v1390
    %v1393 = vmul.f32 %v1377, %v1391
    %v1395 = vlaneseq
    %v1396 = vshrl.u32 %v1395, 7
    %v1397 = vsub.s32 0, %v1396
    %v1398 = vrot.slane %v1365, %v1397
    %v1400 = vmul.f32 %v1392, %v1398
    %v1401 = vmul.f32 %v1393, %v1398
    %v1403 = vlaneseq
    %v1404 = vshrl.u32 %v1403, 7
    %v1405 = vsub.s32 0, %v1404
    %v1406 = vrot.slane %v1367, %v1405
    %v1408 = vadd.f32 %v1400, %v1406
    %v1409 = vadd.f32 %v1401, %v1406
    %s1410 = scalar_lea.vmem %s5, 32
    %v1411 = vld [vmem:[%s1410] sm:$0xff]
    %v1412 = vld [vmem:[%s1410 + $0x8] sm:$0xff]
    %v1413 = vld [vmem:[%s1410 + $0x10] sm:$0xff]
    %v1414 = vld [vmem:[%s1410 + $0x18] sm:$0xff]
    %v1416 = vsel %vm66, %v1408, 0
    %v1419 = vsel %vm66, %v1409, 0
    %1421 = vmatprep.subr.mxu0 0.0
    %1422 = vmatpush1.msra.mxu0 %v1411
    %1423 = vmatprep.subr.mxu0 0.0
    %1424 = vmatpush1.msra.mxu0 %v1412
    %1425 = vmatprep.subr.mxu0 0.0
    %1426 = vmatpush1.msra.mxu0 %v1413
    %1427 = vmatprep.subr.mxu0 0.0
    %1428 = vmatpush1.msra.mxu0 %v1414
    %1429 = vmatprep.subr.mxu0 0.0
    %1430 = vmatpush1.msra.mxu0 0.0
    %1431 = vmatprep.subr.mxu0 0.0
    %1432 = vmatpush1.msra.mxu0 0.0
    %1433 = vmatprep.subr.mxu0 0.0
    %1434 = vmatpush1.msra.mxu0 0.0
    %1435 = vmatprep.subr.mxu0 0.0
    %1436 = vmatpush1.msra.mxu0 0.0
    %1437 = vmatprep.subr.mxu0 0.0
    %1438 = vmatpush1.msra.mxu0 0.0
    %1439 = vmatprep.subr.mxu0 0.0
    %1440 = vmatpush1.msra.mxu0 0.0
    %1441 = vmatprep.subr.mxu0 0.0
    %1442 = vmatpush1.msra.mxu0 0.0
    %1443 = vmatprep.subr.mxu0 0.0
    %1444 = vmatpush1.msra.mxu0 0.0
    %1445 = vmatprep.subr.mxu0 0.0
    %1446 = vmatpush1.msra.mxu0 0.0
    %1447 = vmatprep.subr.mxu0 0.0
    %1448 = vmatpush1.msra.mxu0 0.0
    %1449 = vmatprep.subr.mxu0 0.0
    %1450 = vmatpush1.msra.mxu0 0.0
    %1451 = vmatprep.subr.mxu0 0.0
    %1452 = vmatpush1.msra.mxu0 0.0
    %1453 = vmatprep.subr.mxu0 0.0
    %1454 = vmatpush1.msra.mxu0 0.0
    %1455 = vmatprep.subr.mxu0 0.0
    %1456 = vmatpush1.msra.mxu0 0.0
    %1457 = vmatprep.subr.mxu0 0.0
    %1458 = vmatpush1.msra.mxu0 0.0
    %1459 = vmatprep.subr.mxu0 0.0
    %1460 = vmatpush1.msra.mxu0 0.0
    %1461 = vmatprep.subr.mxu0 0.0
    %1462 = vmatpush1.msra.mxu0 0.0
    %1463 = vmatprep.subr.mxu0 0.0
    %1464 = vmatpush1.msra.mxu0 0.0
    %1465 = vmatprep.subr.mxu0 0.0
    %1466 = vmatpush1.msra.mxu0 0.0
    %1467 = vmatprep.subr.mxu0 0.0
    %1468 = vmatpush1.msra.mxu0 0.0
    %1469 = vmatprep.subr.mxu0 0.0
    %1470 = vmatpush1.msra.mxu0 0.0
    %1471 = vmatprep.subr.mxu0 0.0
    %1472 = vmatpush1.msra.mxu0 0.0
    %1473 = vmatprep.subr.mxu0 0.0
    %1474 = vmatpush1.msra.mxu0 0.0
    %1475 = vmatprep.subr.mxu0 0.0
    %1476 = vmatpush1.msra.mxu0 0.0
    %1477 = vmatprep.subr.mxu0 0.0
    %1478 = vmatpush1.msra.mxu0 0.0
    %1479 = vmatprep.subr.mxu0 0.0
    %1480 = vmatpush1.msra.mxu0 0.0
    %1481 = vmatprep.subr.mxu0 0.0
    %1482 = vmatpush1.msra.mxu0 0.0
    %1483 = vmatprep.subr.mxu0 0.0
    %1484 = vmatpush1.msra.mxu0 0.0
    %1485 = vmatprep.mubr.f32.mxu0 0.0
    %1486 = vmatmul.mubr.f32.gmra.mrb[0].mxu0 %v1416
    %v1487 = vpop.f32.mrb[0].mxu0
    %v1488 = vadd.f32 0.0, %v1487
    %v1489 = vpop.f32.mrb[0].mxu0
    %1490 = vmatprep.mubr.f32.mxu0 0.0
    %1491 = vmatmul.mubr.f32.gmra.mrb[0].mxu0 %v1419
    %v1492 = vpop.f32.mrb[0].mxu0
    %v1493 = vadd.f32 0.0, %v1492
    %v1494 = vpop.f32.mrb[0].mxu0
    %1495 = vdwg.mxu0
    %v1496 = vmul.f32 %v1488, 0.17677669
    %v1497 = vmul.f32 %v1493, 0.17677669
    %1500 = vrot.lane.b32.xlu0 %v1488, 96
    %v1501 = vpop.permute.xlu0 %1500
    %1502 = vrot.lane.b32.xlu0 %v1493, 96
    %v1503 = vpop.permute.xlu0 %1502
    %v1505 = vsel %vm203, %v1496, 0
    %v1508 = vsel %vm203, %v1497, 0
    %v1510 = vsel %vm203, %v1501, 0
    %v1512 = vsel %vm203, %v1503, 0
    %1514 = vmatprep.subr.mxu0 0.0
    %1515 = vmatpush1.xpose.msra.mxu0 %v1510
    %1516 = vmatprep.subr.mxu0 0.0
    %1517 = vmatpush1.xpose.msra.mxu0 %v1512
    %1518 = vmatprep.subr.mxu0 0.0
    %1519 = vmatpush1.xpose.msra.mxu0 0.0
    %1520 = vmatprep.subr.mxu0 0.0
    %1521 = vmatpush1.xpose.msra.mxu0 0.0
    %1522 = vmatprep.subr.mxu0 0.0
    %1523 = vmatpush1.xpose.msra.mxu0 0.0
    %1524 = vmatprep.subr.mxu0 0.0
    %1525 = vmatpush1.xpose.msra.mxu0 0.0
    %1526 = vmatprep.subr.mxu0 0.0
    %1527 = vmatpush1.xpose.msra.mxu0 0.0
    %1528 = vmatprep.subr.mxu0 0.0
    %1529 = vmatpush1.xpose.msra.mxu0 0.0
    %1530 = vmatprep.subr.mxu0 0.0
    %1531 = vmatpush1.xpose.msra.mxu0 0.0
    %1532 = vmatprep.subr.mxu0 0.0
    %1533 = vmatpush1.xpose.msra.mxu0 0.0
    %1534 = vmatprep.subr.mxu0 0.0
    %1535 = vmatpush1.xpose.msra.mxu0 0.0
    %1536 = vmatprep.subr.mxu0 0.0
    %1537 = vmatpush1.xpose.msra.mxu0 0.0
    %1538 = vmatprep.subr.mxu0 0.0
    %1539 = vmatpush1.xpose.msra.mxu0 0.0
    %1540 = vmatprep.subr.mxu0 0.0
    %1541 = vmatpush1.xpose.msra.mxu0 0.0
    %1542 = vmatprep.subr.mxu0 0.0
    %1543 = vmatpush1.xpose.msra.mxu0 0.0
    %1544 = vmatprep.subr.mxu0 0.0
    %1545 = vmatpush1.xpose.msra.mxu0 0.0
    %1546 = vmatprep.subr.mxu0 0.0
    %1547 = vmatpush1.xpose.msra.mxu0 0.0
    %1548 = vmatprep.subr.mxu0 0.0
    %1549 = vmatpush1.xpose.msra.mxu0 0.0
    %1550 = vmatprep.subr.mxu0 0.0
    %1551 = vmatpush1.xpose.msra.mxu0 0.0
    %1552 = vmatprep.subr.mxu0 0.0
    %1553 = vmatpush1.xpose.msra.mxu0 0.0
    %1554 = vmatprep.subr.mxu0 0.0
    %1555 = vmatpush1.xpose.msra.mxu0 0.0
    %1556 = vmatprep.subr.mxu0 0.0
    %1557 = vmatpush1.xpose.msra.mxu0 0.0
    %1558 = vmatprep.subr.mxu0 0.0
    %1559 = vmatpush1.xpose.msra.mxu0 0.0
    %1560 = vmatprep.subr.mxu0 0.0
    %1561 = vmatpush1.xpose.msra.mxu0 0.0
    %1562 = vmatprep.subr.mxu0 0.0
    %1563 = vmatpush1.xpose.msra.mxu0 0.0
    %1564 = vmatprep.subr.mxu0 0.0
    %1565 = vmatpush1.xpose.msra.mxu0 0.0
    %1566 = vmatprep.subr.mxu0 0.0
    %1567 = vmatpush1.xpose.msra.mxu0 0.0
    %1568 = vmatprep.subr.mxu0 0.0
    %1569 = vmatpush1.xpose.msra.mxu0 0.0
    %1570 = vmatprep.subr.mxu0 0.0
    %1571 = vmatpush1.xpose.msra.mxu0 0.0
    %1572 = vmatprep.subr.mxu0 0.0
    %1573 = vmatpush1.xpose.msra.mxu0 0.0
    %1574 = vmatprep.subr.mxu0 0.0
    %1575 = vmatpush1.xpose.msra.mxu0 0.0
    %1576 = vmatprep.subr.mxu0 0.0
    %1577 = vmatpush1.xpose.msra.mxu0 0.0
    %1578 = vmatprep.mubr.f32.mxu0 0.0
    %1579 = vmatmul.mubr.f32.gmra.mrb[0].mxu0 %v1505
    %v1580 = vpop.f32.mrb[0].mxu0
    %v1581 = vadd.f32 %v62, %v1580
    %v1582 = vpop.f32.mrb[0].mxu0
    %1583 = vmatprep.mubr.f32.mxu0 0.0
    %1584 = vmatmul.mubr.f32.gmra.mrb[0].mxu0 %v1508
    %v1585 = vpop.f32.mrb[0].mxu0
    %v1586 = vadd.f32 %v63, %v1585
    %v1587 = vpop.f32.mrb[0].mxu0
    %1588 = vdwg.mxu0
    %v1589 = vsel %vm289, %v1581, -inf
    %1590 = vmax.xlane.f32.xlu0 %v1589
    %v1591 = vpop.xlane.xlu0 %1590
    %v1592 = vsel %vm289, %v1586, -inf
    %1593 = vmax.xlane.f32.xlu0 %v1592
    %v1594 = vpop.xlane.xlu0 %1593
    %v1595 = vsub.f32 %v1581, %v1591
    %v1596 = vsub.f32 %v1586, %v1594
    %v1597 = vmul.f32 %v1595, 1.442695
    %v1598 = vpow.pop %v1597
    %v1599 = vmul.f32 %v1596, 1.442695
    %v1600 = vpow.pop %v1599
    %v1601 = vsel %vm289, %v1598, 0.0
    %1602 = vadd.xlane.f32.xlu0 %v1601
    %v1603 = vpop.xlane.xlu0 %1602
    %v1604 = vsel %vm289, %v1600, 0.0
    %1605 = vadd.xlane.f32.xlu0 %v1604
    %v1606 = vpop.xlane.xlu0 %1605
    %v1607 = vrcp.pop %v1603
    %v1608 = vrcp.pop %v1606
    %v1609 = vmul.f32 %v1598, %v1607
    %v1610 = vmul.f32 %v1600, %v1608
    %1611 = vrot.lane.b32.xlu0 %v1488, 64
    %v1612 = vpop.permute.xlu0 %1611
    %1613 = vrot.lane.b32.xlu0 %v1493, 64
    %v1614 = vpop.permute.xlu0 %1613
    %v1618 = vsel %vm289, %v1609, 0
    %v1621 = vsel %vm289, %v1610, 0
    %1623 = vmatprep.subr.mxu0 0.0
    %1624 = vmatpush1.msra.mxu0 %v1612
    %1625 = vmatprep.subr.mxu0 0.0
    %1626 = vmatpush1.msra.mxu0 %v1614
    %1627 = vmatprep.subr.mxu0 0.0
    %1628 = vmatpush1.msra.mxu0 0.0
    %1629 = vmatprep.subr.mxu0 0.0
    %1630 = vmatpush1.msra.mxu0 0.0
    %1631 = vmatprep.subr.mxu0 0.0
    %1632 = vmatpush1.msra.mxu0 0.0
    %1633 = vmatprep.subr.mxu0 0.0
    %1634 = vmatpush1.msra.mxu0 0.0
    %1635 = vmatprep.subr.mxu0 0.0
    %1636 = vmatpush1.msra.mxu0 0.0
    %1637 = vmatprep.subr.mxu0 0.0
    %1638 = vmatpush1.msra.mxu0 0.0
    %1639 = vmatprep.subr.mxu0 0.0
    %1640 = vmatpush1.msra.mxu0 0.0
    %1641 = vmatprep.subr.mxu0 0.0
    %1642 = vmatpush1.msra.mxu0 0.0
    %1643 = vmatprep.subr.mxu0 0.0
    %1644 = vmatpush1.msra.mxu0 0.0
    %1645 = vmatprep.subr.mxu0 0.0
    %1646 = vmatpush1.msra.mxu0 0.0
    %1647 = vmatprep.subr.mxu0 0.0
    %1648 = vmatpush1.msra.mxu0 0.0
    %1649 = vmatprep.subr.mxu0 0.0
    %1650 = vmatpush1.msra.mxu0 0.0
    %1651 = vmatprep.subr.mxu0 0.0
    %1652 = vmatpush1.msra.mxu0 0.0
    %1653 = vmatprep.subr.mxu0 0.0
    %1654 = vmatpush1.msra.mxu0 0.0
    %1655 = vmatprep.subr.mxu0 0.0
    %1656 = vmatpush1.msra.mxu0 0.0
    %1657 = vmatprep.subr.mxu0 0.0
    %1658 = vmatpush1.msra.mxu0 0.0
    %1659 = vmatprep.subr.mxu0 0.0
    %1660 = vmatpush1.msra.mxu0 0.0
    %1661 = vmatprep.subr.mxu0 0.0
    %1662 = vmatpush1.msra.mxu0 0.0
    %1663 = vmatprep.subr.mxu0 0.0
    %1664 = vmatpush1.msra.mxu0 0.0
    %1665 = vmatprep.subr.mxu0 0.0
    %1666 = vmatpush1.msra.mxu0 0.0
    %1667 = vmatprep.subr.mxu0 0.0
    %1668 = vmatpush1.msra.mxu0 0.0
    %1669 = vmatprep.subr.mxu0 0.0
    %1670 = vmatpush1.msra.mxu0 0.0
    %1671 = vmatprep.subr.mxu0 0.0
    %1672 = vmatpush1.msra.mxu0 0.0
    %1673 = vmatprep.subr.mxu0 0.0
    %1674 = vmatpush1.msra.mxu0 0.0
    %1675 = vmatprep.subr.mxu0 0.0
    %1676 = vmatpush1.msra.mxu0 0.0
    %1677 = vmatprep.subr.mxu0 0.0
    %1678 = vmatpush1.msra.mxu0 0.0
    %1679 = vmatprep.subr.mxu0 0.0
    %1680 = vmatpush1.msra.mxu0 0.0
    %1681 = vmatprep.subr.mxu0 0.0
    %1682 = vmatpush1.msra.mxu0 0.0
    %1683 = vmatprep.subr.mxu0 0.0
    %1684 = vmatpush1.msra.mxu0 0.0
    %1685 = vmatprep.subr.mxu0 0.0
    %1686 = vmatpush1.msra.mxu0 0.0
    %1687 = vmatprep.mubr.f32.mxu0 0.0
    %1688 = vmatmul.mubr.f32.gmra.mrb[0].mxu0 %v1618
    %v1689 = vpop.f32.mrb[0].mxu0
    %v1690 = vadd.f32 0.0, %v1689
    %v1691 = vpop.f32.mrb[0].mxu0
    %1692 = vmatprep.mubr.f32.mxu0 0.0
    %1693 = vmatmul.mubr.f32.gmra.mrb[0].mxu0 %v1621
    %v1694 = vpop.f32.mrb[0].mxu0
    %v1695 = vadd.f32 0.0, %v1694
    %v1696 = vpop.f32.mrb[0].mxu0
    %1697 = vdwg.mxu0
    %1698 = vrot.lane.b32.xlu0 %v1496, 120
    %v1699 = vpop.permute.xlu0 %1698
    %1700 = vrot.lane.b32.xlu0 %v1497, 120
    %v1701 = vpop.permute.xlu0 %1700
    %1702 = vrot.lane.b32.xlu0 %v1488, 88
    %v1703 = vpop.permute.xlu0 %1702
    %1704 = vrot.lane.b32.xlu0 %v1493, 88
    %v1705 = vpop.permute.xlu0 %1704
    %v1706 = vsel %vm203, %v1699, 0
    %v1708 = vsel %vm203, %v1701, 0
    %v1710 = vsel %vm203, %v1703, 0
    %v1712 = vsel %vm203, %v1705, 0
    %1714 = vmatprep.subr.mxu0 0.0
    %1715 = vmatpush1.xpose.msra.mxu0 %v1710
    %1716 = vmatprep.subr.mxu0 0.0
    %1717 = vmatpush1.xpose.msra.mxu0 %v1712
    %1718 = vmatprep.subr.mxu0 0.0
    %1719 = vmatpush1.xpose.msra.mxu0 0.0
    %1720 = vmatprep.subr.mxu0 0.0
    %1721 = vmatpush1.xpose.msra.mxu0 0.0
    %1722 = vmatprep.subr.mxu0 0.0
    %1723 = vmatpush1.xpose.msra.mxu0 0.0
    %1724 = vmatprep.subr.mxu0 0.0
    %1725 = vmatpush1.xpose.msra.mxu0 0.0
    %1726 = vmatprep.subr.mxu0 0.0
    %1727 = vmatpush1.xpose.msra.mxu0 0.0
    %1728 = vmatprep.subr.mxu0 0.0
    %1729 = vmatpush1.xpose.msra.mxu0 0.0
    %1730 = vmatprep.subr.mxu0 0.0
    %1731 = vmatpush1.xpose.msra.mxu0 0.0
    %1732 = vmatprep.subr.mxu0 0.0
    %1733 = vmatpush1.xpose.msra.mxu0 0.0
    %1734 = vmatprep.subr.mxu0 0.0
    %1735 = vmatpush1.xpose.msra.mxu0 0.0
    %1736 = vmatprep.subr.mxu0 0.0
    %1737 = vmatpush1.xpose.msra.mxu0 0.0
    %1738 = vmatprep.subr.mxu0 0.0
    %1739 = vmatpush1.xpose.msra.mxu0 0.0
    %1740 = vmatprep.subr.mxu0 0.0
    %1741 = vmatpush1.xpose.msra.mxu0 0.0
    %1742 = vmatprep.subr.mxu0 0.0
    %1743 = vmatpush1.xpose.msra.mxu0 0.0
    %1744 = vmatprep.subr.mxu0 0.0
    %1745 = vmatpush1.xpose.msra.mxu0 0.0
    %1746 = vmatprep.subr.mxu0 0.0
    %1747 = vmatpush1.xpose.msra.mxu0 0.0
    %1748 = vmatprep.subr.mxu0 0.0
    %1749 = vmatpush1.xpose.msra.mxu0 0.0
    %1750 = vmatprep.subr.mxu0 0.0
    %1751 = vmatpush1.xpose.msra.mxu0 0.0
    %1752 = vmatprep.subr.mxu0 0.0
    %1753 = vmatpush1.xpose.msra.mxu0 0.0
    %1754 = vmatprep.subr.mxu0 0.0
    %1755 = vmatpush1.xpose.msra.mxu0 0.0
    %1756 = vmatprep.subr.mxu0 0.0
    %1757 = vmatpush1.xpose.msra.mxu0 0.0
    %1758 = vmatprep.subr.mxu0 0.0
    %1759 = vmatpush1.xpose.msra.mxu0 0.0
    %1760 = vmatprep.subr.mxu0 0.0
    %1761 = vmatpush1.xpose.msra.mxu0 0.0
    %1762 = vmatprep.subr.mxu0 0.0
    %1763 = vmatpush1.xpose.msra.mxu0 0.0
    %1764 = vmatprep.subr.mxu0 0.0
    %1765 = vmatpush1.xpose.msra.mxu0 0.0
    %1766 = vmatprep.subr.mxu0 0.0
    %1767 = vmatpush1.xpose.msra.mxu0 0.0
    %1768 = vmatprep.subr.mxu0 0.0
    %1769 = vmatpush1.xpose.msra.mxu0 0.0
    %1770 = vmatprep.subr.mxu0 0.0
    %1771 = vmatpush1.xpose.msra.mxu0 0.0
    %1772 = vmatprep.subr.mxu0 0.0
    %1773 = vmatpush1.xpose.msra.mxu0 0.0
    %1774 = vmatprep.subr.mxu0 0.0
    %1775 = vmatpush1.xpose.msra.mxu0 0.0
    %1776 = vmatprep.subr.mxu0 0.0
    %1777 = vmatpush1.xpose.msra.mxu0 0.0
    %1778 = vmatprep.mubr.f32.mxu0 0.0
    %1779 = vmatmul.mubr.f32.gmra.mrb[0].mxu0 %v1706
    %v1780 = vpop.f32.mrb[0].mxu0
    %v1781 = vadd.f32 %v62, %v1780
    %v1782 = vpop.f32.mrb[0].mxu0
    %1783 = vmatprep.mubr.f32.mxu0 0.0
    %1784 = vmatmul.mubr.f32.gmra.mrb[0].mxu0 %v1708
    %v1785 = vpop.f32.mrb[0].mxu0
    %v1786 = vadd.f32 %v63, %v1785
    %v1787 = vpop.f32.mrb[0].mxu0
    %1788 = vdwg.mxu0
    %v1789 = vsel %vm289, %v1781, -inf
    %1790 = vmax.xlane.f32.xlu0 %v1789
    %v1791 = vpop.xlane.xlu0 %1790
    %v1792 = vsel %vm289, %v1786, -inf
    %1793 = vmax.xlane.f32.xlu0 %v1792
    %v1794 = vpop.xlane.xlu0 %1793
    %v1795 = vsub.f32 %v1781, %v1791
    %v1796 = vsub.f32 %v1786, %v1794
    %v1797 = vmul.f32 %v1795, 1.442695
    %v1798 = vpow.pop %v1797
    %v1799 = vmul.f32 %v1796, 1.442695
    %v1800 = vpow.pop %v1799
    %v1801 = vsel %vm289, %v1798, 0.0
    %1802 = vadd.xlane.f32.xlu0 %v1801
    %v1803 = vpop.xlane.xlu0 %1802
    %v1804 = vsel %vm289, %v1800, 0.0
    %1805 = vadd.xlane.f32.xlu0 %v1804
    %v1806 = vpop.xlane.xlu0 %1805
    %v1807 = vrcp.pop %v1803
    %v1808 = vrcp.pop %v1806
    %v1809 = vmul.f32 %v1798, %v1807
    %v1810 = vmul.f32 %v1800, %v1808
    %1811 = vrot.lane.b32.xlu0 %v1488, 56
    %v1812 = vpop.permute.xlu0 %1811
    %1813 = vrot.lane.b32.xlu0 %v1493, 56
    %v1814 = vpop.permute.xlu0 %1813
    %v1818 = vsel %vm289, %v1809, 0
    %v1821 = vsel %vm289, %v1810, 0
    %1823 = vmatprep.subr.mxu0 0.0
    %1824 = vmatpush1.msra.mxu0 %v1812
    %1825 = vmatprep.subr.mxu0 0.0
    %1826 = vmatpush1.msra.mxu0 %v1814
    %1827 = vmatprep.subr.mxu0 0.0
    %1828 = vmatpush1.msra.mxu0 0.0
    %1829 = vmatprep.subr.mxu0 0.0
    %1830 = vmatpush1.msra.mxu0 0.0
    %1831 = vmatprep.subr.mxu0 0.0
    %1832 = vmatpush1.msra.mxu0 0.0
    %1833 = vmatprep.subr.mxu0 0.0
    %1834 = vmatpush1.msra.mxu0 0.0
    %1835 = vmatprep.subr.mxu0 0.0
    %1836 = vmatpush1.msra.mxu0 0.0
    %1837 = vmatprep.subr.mxu0 0.0
    %1838 = vmatpush1.msra.mxu0 0.0
    %1839 = vmatprep.subr.mxu0 0.0
    %1840 = vmatpush1.msra.mxu0 0.0
    %1841 = vmatprep.subr.mxu0 0.0
    %1842 = vmatpush1.msra.mxu0 0.0
    %1843 = vmatprep.subr.mxu0 0.0
    %1844 = vmatpush1.msra.mxu0 0.0
    %1845 = vmatprep.subr.mxu0 0.0
    %1846 = vmatpush1.msra.mxu0 0.0
    %1847 = vmatprep.subr.mxu0 0.0
    %1848 = vmatpush1.msra.mxu0 0.0
    %1849 = vmatprep.subr.mxu0 0.0
    %1850 = vmatpush1.msra.mxu0 0.0
    %1851 = vmatprep.subr.mxu0 0.0
    %1852 = vmatpush1.msra.mxu0 0.0
    %1853 = vmatprep.subr.mxu0 0.0
    %1854 = vmatpush1.msra.mxu0 0.0
    %1855 = vmatprep.subr.mxu0 0.0
    %1856 = vmatpush1.msra.mxu0 0.0
    %1857 = vmatprep.subr.mxu0 0.0
    %1858 = vmatpush1.msra.mxu0 0.0
    %1859 = vmatprep.subr.mxu0 0.0
    %1860 = vmatpush1.msra.mxu0 0.0
    %1861 = vmatprep.subr.mxu0 0.0
    %1862 = vmatpush1.msra.mxu0 0.0
    %1863 = vmatprep.subr.mxu0 0.0
    %1864 = vmatpush1.msra.mxu0 0.0
    %1865 = vmatprep.subr.mxu0 0.0
    %1866 = vmatpush1.msra.mxu0 0.0
    %1867 = vmatprep.subr.mxu0 0.0
    %1868 = vmatpush1.msra.mxu0 0.0
    %1869 = vmatprep.subr.mxu0 0.0
    %1870 = vmatpush1.msra.mxu0 0.0
    %1871 = vmatprep.subr.mxu0 0.0
    %1872 = vmatpush1.msra.mxu0 0.0
    %1873 = vmatprep.subr.mxu0 0.0
    %1874 = vmatpush1.msra.mxu0 0.0
    %1875 = vmatprep.subr.mxu0 0.0
    %1876 = vmatpush1.msra.mxu0 0.0
    %1877 = vmatprep.subr.mxu0 0.0
    %1878 = vmatpush1.msra.mxu0 0.0
    %1879 = vmatprep.subr.mxu0 0.0
    %1880 = vmatpush1.msra.mxu0 0.0
    %1881 = vmatprep.subr.mxu0 0.0
    %1882 = vmatpush1.msra.mxu0 0.0
    %1883 = vmatprep.subr.mxu0 0.0
    %1884 = vmatpush1.msra.mxu0 0.0
    %1885 = vmatprep.subr.mxu0 0.0
    %1886 = vmatpush1.msra.mxu0 0.0
    %1887 = vmatprep.mubr.f32.mxu0 0.0
    %1888 = vmatmul.mubr.f32.gmra.mrb[0].mxu0 %v1818
    %v1889 = vpop.f32.mrb[0].mxu0
    %v1890 = vadd.f32 0.0, %v1889
    %v1891 = vpop.f32.mrb[0].mxu0
    %1892 = vmatprep.mubr.f32.mxu0 0.0
    %1893 = vmatmul.mubr.f32.gmra.mrb[0].mxu0 %v1821
    %v1894 = vpop.f32.mrb[0].mxu0
    %v1895 = vadd.f32 0.0, %v1894
    %v1896 = vpop.f32.mrb[0].mxu0
    %1897 = vdwg.mxu0
    %1898 = vrot.lane.b32.xlu0 %v1496, 112
    %v1899 = vpop.permute.xlu0 %1898
    %1900 = vrot.lane.b32.xlu0 %v1497, 112
    %v1901 = vpop.permute.xlu0 %1900
    %1902 = vrot.lane.b32.xlu0 %v1488, 80
    %v1903 = vpop.permute.xlu0 %1902
    %1904 = vrot.lane.b32.xlu0 %v1493, 80
    %v1905 = vpop.permute.xlu0 %1904
    %v1906 = vsel %vm203, %v1899, 0
    %v1908 = vsel %vm203, %v1901, 0
    %v1910 = vsel %vm203, %v1903, 0
    %v1912 = vsel %vm203, %v1905, 0
    %1914 = vmatprep.subr.mxu0 0.0
    %1915 = vmatpush1.xpose.msra.mxu0 %v1910
    %1916 = vmatprep.subr.mxu0 0.0
    %1917 = vmatpush1.xpose.msra.mxu0 %v1912
    %1918 = vmatprep.subr.mxu0 0.0
    %1919 = vmatpush1.xpose.msra.mxu0 0.0
    %1920 = vmatprep.subr.mxu0 0.0
    %1921 = vmatpush1.xpose.msra.mxu0 0.0
    %1922 = vmatprep.subr.mxu0 0.0
    %1923 = vmatpush1.xpose.msra.mxu0 0.0
    %1924 = vmatprep.subr.mxu0 0.0
    %1925 = vmatpush1.xpose.msra.mxu0 0.0
    %1926 = vmatprep.subr.mxu0 0.0
    %1927 = vmatpush1.xpose.msra.mxu0 0.0
    %1928 = vmatprep.subr.mxu0 0.0
    %1929 = vmatpush1.xpose.msra.mxu0 0.0
    %1930 = vmatprep.subr.mxu0 0.0
    %1931 = vmatpush1.xpose.msra.mxu0 0.0
    %1932 = vmatprep.subr.mxu0 0.0
    %1933 = vmatpush1.xpose.msra.mxu0 0.0
    %1934 = vmatprep.subr.mxu0 0.0
    %1935 = vmatpush1.xpose.msra.mxu0 0.0
    %1936 = vmatprep.subr.mxu0 0.0
    %1937 = vmatpush1.xpose.msra.mxu0 0.0
    %1938 = vmatprep.subr.mxu0 0.0
    %1939 = vmatpush1.xpose.msra.mxu0 0.0
    %1940 = vmatprep.subr.mxu0 0.0
    %1941 = vmatpush1.xpose.msra.mxu0 0.0
    %1942 = vmatprep.subr.mxu0 0.0
    %1943 = vmatpush1.xpose.msra.mxu0 0.0
    %1944 = vmatprep.subr.mxu0 0.0
    %1945 = vmatpush1.xpose.msra.mxu0 0.0
    %1946 = vmatprep.subr.mxu0 0.0
    %1947 = vmatpush1.xpose.msra.mxu0 0.0
    %1948 = vmatprep.subr.mxu0 0.0
    %1949 = vmatpush1.xpose.msra.mxu0 0.0
    %1950 = vmatprep.subr.mxu0 0.0
    %1951 = vmatpush1.xpose.msra.mxu0 0.0
    %1952 = vmatprep.subr.mxu0 0.0
    %1953 = vmatpush1.xpose.msra.mxu0 0.0
    %1954 = vmatprep.subr.mxu0 0.0
    %1955 = vmatpush1.xpose.msra.mxu0 0.0
    %1956 = vmatprep.subr.mxu0 0.0
    %1957 = vmatpush1.xpose.msra.mxu0 0.0
    %1958 = vmatprep.subr.mxu0 0.0
    %1959 = vmatpush1.xpose.msra.mxu0 0.0
    %1960 = vmatprep.subr.mxu0 0.0
    %1961 = vmatpush1.xpose.msra.mxu0 0.0
    %1962 = vmatprep.subr.mxu0 0.0
    %1963 = vmatpush1.xpose.msra.mxu0 0.0
    %1964 = vmatprep.subr.mxu0 0.0
    %1965 = vmatpush1.xpose.msra.mxu0 0.0
    %1966 = vmatprep.subr.mxu0 0.0
    %1967 = vmatpush1.xpose.msra.mxu0 0.0
    %1968 = vmatprep.subr.mxu0 0.0
    %1969 = vmatpush1.xpose.msra.mxu0 0.0
    %1970 = vmatprep.subr.mxu0 0.0
    %1971 = vmatpush1.xpose.msra.mxu0 0.0
    %1972 = vmatprep.subr.mxu0 0.0
    %1973 = vmatpush1.xpose.msra.mxu0 0.0
    %1974 = vmatprep.subr.mxu0 0.0
    %1975 = vmatpush1.xpose.msra.mxu0 0.0
    %1976 = vmatprep.subr.mxu0 0.0
    %1977 = vmatpush1.xpose.msra.mxu0 0.0
    %1978 = vmatprep.mubr.f32.mxu0 0.0
    %1979 = vmatmul.mubr.f32.gmra.mrb[0].mxu0 %v1906
    %v1980 = vpop.f32.mrb[0].mxu0
    %v1981 = vadd.f32 %v62, %v1980
    %v1982 = vpop.f32.mrb[0].mxu0
    %1983 = vmatprep.mubr.f32.mxu0 0.0
    %1984 = vmatmul.mubr.f32.gmra.mrb[0].mxu0 %v1908
    %v1985 = vpop.f32.mrb[0].mxu0
    %v1986 = vadd.f32 %v63, %v1985
    %v1987 = vpop.f32.mrb[0].mxu0
    %1988 = vdwg.mxu0
    %v1989 = vsel %vm289, %v1981, -inf
    %1990 = vmax.xlane.f32.xlu0 %v1989
    %v1991 = vpop.xlane.xlu0 %1990
    %v1992 = vsel %vm289, %v1986, -inf
    %1993 = vmax.xlane.f32.xlu0 %v1992
    %v1994 = vpop.xlane.xlu0 %1993
    %v1995 = vsub.f32 %v1981, %v1991
    %v1996 = vsub.f32 %v1986, %v1994
    %v1997 = vmul.f32 %v1995, 1.442695
    %v1998 = vpow.pop %v1997
    %v1999 = vmul.f32 %v1996, 1.442695
    %v2000 = vpow.pop %v1999
    %v2001 = vsel %vm289, %v1998, 0.0
    %2002 = vadd.xlane.f32.xlu0 %v2001
    %v2003 = vpop.xlane.xlu0 %2002
    %v2004 = vsel %vm289, %v2000, 0.0
    %2005 = vadd.xlane.f32.xlu0 %v2004
    %v2006 = vpop.xlane.xlu0 %2005
    %v2007 = vrcp.pop %v2003
    %v2008 = vrcp.pop %v2006
    %v2009 = vmul.f32 %v1998, %v2007
    %v2010 = vmul.f32 %v2000, %v2008
    %2011 = vrot.lane.b32.xlu0 %v1488, 48
    %v2012 = vpop.permute.xlu0 %2011
    %2013 = vrot.lane.b32.xlu0 %v1493, 48
    %v2014 = vpop.permute.xlu0 %2013
    %v2018 = vsel %vm289, %v2009, 0
    %v2021 = vsel %vm289, %v2010, 0
    %2023 = vmatprep.subr.mxu0 0.0
    %2024 = vmatpush1.msra.mxu0 %v2012
    %2025 = vmatprep.subr.mxu0 0.0
    %2026 = vmatpush1.msra.mxu0 %v2014
    %2027 = vmatprep.subr.mxu0 0.0
    %2028 = vmatpush1.msra.mxu0 0.0
    %2029 = vmatprep.subr.mxu0 0.0
    %2030 = vmatpush1.msra.mxu0 0.0
    %2031 = vmatprep.subr.mxu0 0.0
    %2032 = vmatpush1.msra.mxu0 0.0
    %2033 = vmatprep.subr.mxu0 0.0
    %2034 = vmatpush1.msra.mxu0 0.0
    %2035 = vmatprep.subr.mxu0 0.0
    %2036 = vmatpush1.msra.mxu0 0.0
    %2037 = vmatprep.subr.mxu0 0.0
    %2038 = vmatpush1.msra.mxu0 0.0
    %2039 = vmatprep.subr.mxu0 0.0
    %2040 = vmatpush1.msra.mxu0 0.0
    %2041 = vmatprep.subr.mxu0 0.0
    %2042 = vmatpush1.msra.mxu0 0.0
    %2043 = vmatprep.subr.mxu0 0.0
    %2044 = vmatpush1.msra.mxu0 0.0
    %2045 = vmatprep.subr.mxu0 0.0
    %2046 = vmatpush1.msra.mxu0 0.0
    %2047 = vmatprep.subr.mxu0 0.0
    %2048 = vmatpush1.msra.mxu0 0.0
    %2049 = vmatprep.subr.mxu0 0.0
    %2050 = vmatpush1.msra.mxu0 0.0
    %2051 = vmatprep.subr.mxu0 0.0
    %2052 = vmatpush1.msra.mxu0 0.0
    %2053 = vmatprep.subr.mxu0 0.0
    %2054 = vmatpush1.msra.mxu0 0.0
    %2055 = vmatprep.subr.mxu0 0.0
    %2056 = vmatpush1.msra.mxu0 0.0
    %2057 = vmatprep.subr.mxu0 0.0
    %2058 = vmatpush1.msra.mxu0 0.0
    %2059 = vmatprep.subr.mxu0 0.0
    %2060 = vmatpush1.msra.mxu0 0.0
    %2061 = vmatprep.subr.mxu0 0.0
    %2062 = vmatpush1.msra.mxu0 0.0
    %2063 = vmatprep.subr.mxu0 0.0
    %2064 = vmatpush1.msra.mxu0 0.0
    %2065 = vmatprep.subr.mxu0 0.0
    %2066 = vmatpush1.msra.mxu0 0.0
    %2067 = vmatprep.subr.mxu0 0.0
    %2068 = vmatpush1.msra.mxu0 0.0
    %2069 = vmatprep.subr.mxu0 0.0
    %2070 = vmatpush1.msra.mxu0 0.0
    %2071 = vmatprep.subr.mxu0 0.0
    %2072 = vmatpush1.msra.mxu0 0.0
    %2073 = vmatprep.subr.mxu0 0.0
    %2074 = vmatpush1.msra.mxu0 0.0
    %2075 = vmatprep.subr.mxu0 0.0
    %2076 = vmatpush1.msra.mxu0 0.0
    %2077 = vmatprep.subr.mxu0 0.0
    %2078 = vmatpush1.msra.mxu0 0.0
    %2079 = vmatprep.subr.mxu0 0.0
    %2080 = vmatpush1.msra.mxu0 0.0
    %2081 = vmatprep.subr.mxu0 0.0
    %2082 = vmatpush1.msra.mxu0 0.0
    %2083 = vmatprep.subr.mxu0 0.0
    %2084 = vmatpush1.msra.mxu0 0.0
    %2085 = vmatprep.subr.mxu0 0.0
    %2086 = vmatpush1.msra.mxu0 0.0
    %2087 = vmatprep.mubr.f32.mxu0 0.0
    %2088 = vmatmul.mubr.f32.gmra.mrb[0].mxu0 %v2018
    %v2089 = vpop.f32.mrb[0].mxu0
    %v2090 = vadd.f32 0.0, %v2089
    %v2091 = vpop.f32.mrb[0].mxu0
    %2092 = vmatprep.mubr.f32.mxu0 0.0
    %2093 = vmatmul.mubr.f32.gmra.mrb[0].mxu0 %v2021
    %v2094 = vpop.f32.mrb[0].mxu0
    %v2095 = vadd.f32 0.0, %v2094
    %v2096 = vpop.f32.mrb[0].mxu0
    %2097 = vdwg.mxu0
    %2098 = vrot.lane.b32.xlu0 %v1496, 104
    %v2099 = vpop.permute.xlu0 %2098
    %2100 = vrot.lane.b32.xlu0 %v1497, 104
    %v2101 = vpop.permute.xlu0 %2100
    %2102 = vrot.lane.b32.xlu0 %v1488, 72
    %v2103 = vpop.permute.xlu0 %2102
    %2104 = vrot.lane.b32.xlu0 %v1493, 72
    %v2105 = vpop.permute.xlu0 %2104
    %v2106 = vsel %vm203, %v2099, 0
    %v2108 = vsel %vm203, %v2101, 0
    %v2110 = vsel %vm203, %v2103, 0
    %v2112 = vsel %vm203, %v2105, 0
    %2114 = vmatprep.subr.mxu0 0.0
    %2115 = vmatpush1.xpose.msra.mxu0 %v2110
    %2116 = vmatprep.subr.mxu0 0.0
    %2117 = vmatpush1.xpose.msra.mxu0 %v2112
    %2118 = vmatprep.subr.mxu0 0.0
    %2119 = vmatpush1.xpose.msra.mxu0 0.0
    %2120 = vmatprep.subr.mxu0 0.0
    %2121 = vmatpush1.xpose.msra.mxu0 0.0
    %2122 = vmatprep.subr.mxu0 0.0
    %2123 = vmatpush1.xpose.msra.mxu0 0.0
    %2124 = vmatprep.subr.mxu0 0.0
    %2125 = vmatpush1.xpose.msra.mxu0 0.0
    %2126 = vmatprep.subr.mxu0 0.0
    %2127 = vmatpush1.xpose.msra.mxu0 0.0
    %2128 = vmatprep.subr.mxu0 0.0
    %2129 = vmatpush1.xpose.msra.mxu0 0.0
    %2130 = vmatprep.subr.mxu0 0.0
    %2131 = vmatpush1.xpose.msra.mxu0 0.0
    %2132 = vmatprep.subr.mxu0 0.0
    %2133 = vmatpush1.xpose.msra.mxu0 0.0
    %2134 = vmatprep.subr.mxu0 0.0
    %2135 = vmatpush1.xpose.msra.mxu0 0.0
    %2136 = vmatprep.subr.mxu0 0.0
    %2137 = vmatpush1.xpose.msra.mxu0 0.0
    %2138 = vmatprep.subr.mxu0 0.0
    %2139 = vmatpush1.xpose.msra.mxu0 0.0
    %2140 = vmatprep.subr.mxu0 0.0
    %2141 = vmatpush1.xpose.msra.mxu0 0.0
    %2142 = vmatprep.subr.mxu0 0.0
    %2143 = vmatpush1.xpose.msra.mxu0 0.0
    %2144 = vmatprep.subr.mxu0 0.0
    %2145 = vmatpush1.xpose.msra.mxu0 0.0
    %2146 = vmatprep.subr.mxu0 0.0
    %2147 = vmatpush1.xpose.msra.mxu0 0.0
    %2148 = vmatprep.subr.mxu0 0.0
    %2149 = vmatpush1.xpose.msra.mxu0 0.0
    %2150 = vmatprep.subr.mxu0 0.0
    %2151 = vmatpush1.xpose.msra.mxu0 0.0
    %2152 = vmatprep.subr.mxu0 0.0
    %2153 = vmatpush1.xpose.msra.mxu0 0.0
    %2154 = vmatprep.subr.mxu0 0.0
    %2155 = vmatpush1.xpose.msra.mxu0 0.0
    %2156 = vmatprep.subr.mxu0 0.0
    %2157 = vmatpush1.xpose.msra.mxu0 0.0
    %2158 = vmatprep.subr.mxu0 0.0
    %2159 = vmatpush1.xpose.msra.mxu0 0.0
    %2160 = vmatprep.subr.mxu0 0.0
    %2161 = vmatpush1.xpose.msra.mxu0 0.0
    %2162 = vmatprep.subr.mxu0 0.0
    %2163 = vmatpush1.xpose.msra.mxu0 0.0
    %2164 = vmatprep.subr.mxu0 0.0
    %2165 = vmatpush1.xpose.msra.mxu0 0.0
    %2166 = vmatprep.subr.mxu0 0.0
    %2167 = vmatpush1.xpose.msra.mxu0 0.0
    %2168 = vmatprep.subr.mxu0 0.0
    %2169 = vmatpush1.xpose.msra.mxu0 0.0
    %2170 = vmatprep.subr.mxu0 0.0
    %2171 = vmatpush1.xpose.msra.mxu0 0.0
    %2172 = vmatprep.subr.mxu0 0.0
    %2173 = vmatpush1.xpose.msra.mxu0 0.0
    %2174 = vmatprep.subr.mxu0 0.0
    %2175 = vmatpush1.xpose.msra.mxu0 0.0
    %2176 = vmatprep.subr.mxu0 0.0
    %2177 = vmatpush1.xpose.msra.mxu0 0.0
    %2178 = vmatprep.mubr.f32.mxu0 0.0
    %2179 = vmatmul.mubr.f32.gmra.mrb[0].mxu0 %v2106
    %v2180 = vpop.f32.mrb[0].mxu0
    %v2181 = vadd.f32 %v62, %v2180
    %v2182 = vpop.f32.mrb[0].mxu0
    %2183 = vmatprep.mubr.f32.mxu0 0.0
    %2184 = vmatmul.mubr.f32.gmra.mrb[0].mxu0 %v2108
    %v2185 = vpop.f32.mrb[0].mxu0
    %v2186 = vadd.f32 %v63, %v2185
    %v2187 = vpop.f32.mrb[0].mxu0
    %2188 = vdwg.mxu0
    %v2189 = vsel %vm289, %v2181, -inf
    %2190 = vmax.xlane.f32.xlu0 %v2189
    %v2191 = vpop.xlane.xlu0 %2190
    %v2192 = vsel %vm289, %v2186, -inf
    %2193 = vmax.xlane.f32.xlu0 %v2192
    %v2194 = vpop.xlane.xlu0 %2193
    %v2195 = vsub.f32 %v2181, %v2191
    %v2196 = vsub.f32 %v2186, %v2194
    %v2197 = vmul.f32 %v2195, 1.442695
    %v2198 = vpow.pop %v2197
    %v2199 = vmul.f32 %v2196, 1.442695
    %v2200 = vpow.pop %v2199
    %v2201 = vsel %vm289, %v2198, 0.0
    %2202 = vadd.xlane.f32.xlu0 %v2201
    %v2203 = vpop.xlane.xlu0 %2202
    %v2204 = vsel %vm289, %v2200, 0.0
    %2205 = vadd.xlane.f32.xlu0 %v2204
    %v2206 = vpop.xlane.xlu0 %2205
    %v2207 = vrcp.pop %v2203
    %v2208 = vrcp.pop %v2206
    %v2209 = vmul.f32 %v2198, %v2207
    %v2210 = vmul.f32 %v2200, %v2208
    %2211 = vrot.lane.b32.xlu0 %v1488, 40
    %v2212 = vpop.permute.xlu0 %2211
    %2213 = vrot.lane.b32.xlu0 %v1493, 40
    %v2214 = vpop.permute.xlu0 %2213
    %v2218 = vsel %vm289, %v2209, 0
    %v2221 = vsel %vm289, %v2210, 0
    %2223 = vmatprep.subr.mxu0 0.0
    %2224 = vmatpush1.msra.mxu0 %v2212
    %2225 = vmatprep.subr.mxu0 0.0
    %2226 = vmatpush1.msra.mxu0 %v2214
    %2227 = vmatprep.subr.mxu0 0.0
    %2228 = vmatpush1.msra.mxu0 0.0
    %2229 = vmatprep.subr.mxu0 0.0
    %2230 = vmatpush1.msra.mxu0 0.0
    %2231 = vmatprep.subr.mxu0 0.0
    %2232 = vmatpush1.msra.mxu0 0.0
    %2233 = vmatprep.subr.mxu0 0.0
    %2234 = vmatpush1.msra.mxu0 0.0
    %2235 = vmatprep.subr.mxu0 0.0
    %2236 = vmatpush1.msra.mxu0 0.0
    %2237 = vmatprep.subr.mxu0 0.0
    %2238 = vmatpush1.msra.mxu0 0.0
    %2239 = vmatprep.subr.mxu0 0.0
    %2240 = vmatpush1.msra.mxu0 0.0
    %2241 = vmatprep.subr.mxu0 0.0
    %2242 = vmatpush1.msra.mxu0 0.0
    %2243 = vmatprep.subr.mxu0 0.0
    %2244 = vmatpush1.msra.mxu0 0.0
    %2245 = vmatprep.subr.mxu0 0.0
    %2246 = vmatpush1.msra.mxu0 0.0
    %2247 = vmatprep.subr.mxu0 0.0
    %2248 = vmatpush1.msra.mxu0 0.0
    %2249 = vmatprep.subr.mxu0 0.0
    %2250 = vmatpush1.msra.mxu0 0.0
    %2251 = vmatprep.subr.mxu0 0.0
    %2252 = vmatpush1.msra.mxu0 0.0
    %2253 = vmatprep.subr.mxu0 0.0
    %2254 = vmatpush1.msra.mxu0 0.0
    %2255 = vmatprep.subr.mxu0 0.0
    %2256 = vmatpush1.msra.mxu0 0.0
    %2257 = vmatprep.subr.mxu0 0.0
    %2258 = vmatpush1.msra.mxu0 0.0
    %2259 = vmatprep.subr.mxu0 0.0
    %2260 = vmatpush1.msra.mxu0 0.0
    %2261 = vmatprep.subr.mxu0 0.0
    %2262 = vmatpush1.msra.mxu0 0.0
    %2263 = vmatprep.subr.mxu0 0.0
    %2264 = vmatpush1.msra.mxu0 0.0
    %2265 = vmatprep.subr.mxu0 0.0
    %2266 = vmatpush1.msra.mxu0 0.0
    %2267 = vmatprep.subr.mxu0 0.0
    %2268 = vmatpush1.msra.mxu0 0.0
    %2269 = vmatprep.subr.mxu0 0.0
    %2270 = vmatpush1.msra.mxu0 0.0
    %2271 = vmatprep.subr.mxu0 0.0
    %2272 = vmatpush1.msra.mxu0 0.0
    %2273 = vmatprep.subr.mxu0 0.0
    %2274 = vmatpush1.msra.mxu0 0.0
    %2275 = vmatprep.subr.mxu0 0.0
    %2276 = vmatpush1.msra.mxu0 0.0
    %2277 = vmatprep.subr.mxu0 0.0
    %2278 = vmatpush1.msra.mxu0 0.0
    %2279 = vmatprep.subr.mxu0 0.0
    %2280 = vmatpush1.msra.mxu0 0.0
    %2281 = vmatprep.subr.mxu0 0.0
    %2282 = vmatpush1.msra.mxu0 0.0
    %2283 = vmatprep.subr.mxu0 0.0
    %2284 = vmatpush1.msra.mxu0 0.0
    %2285 = vmatprep.subr.mxu0 0.0
    %2286 = vmatpush1.msra.mxu0 0.0
    %2287 = vmatprep.mubr.f32.mxu0 0.0
    %2288 = vmatmul.mubr.f32.gmra.mrb[0].mxu0 %v2218
    %v2289 = vpop.f32.mrb[0].mxu0
    %v2290 = vadd.f32 0.0, %v2289
    %v2291 = vpop.f32.mrb[0].mxu0
    %2292 = vmatprep.mubr.f32.mxu0 0.0
    %2293 = vmatmul.mubr.f32.gmra.mrb[0].mxu0 %v2221
    %v2294 = vpop.f32.mrb[0].mxu0
    %v2295 = vadd.f32 0.0, %v2294
    %v2296 = vpop.f32.mrb[0].mxu0
    %2297 = vdwg.mxu0
    %2300 = vrot.lane.b32.xlu0 %v1890, 8
    %v2301 = vpop.permute.xlu0 %2300
    %2302 = vrot.lane.b32.xlu0 %v1895, 8
    %v2303 = vpop.permute.xlu0 %2302
    %2308 = vrot.lane.b32.xlu0 %v2090, 16
    %v2309 = vpop.permute.xlu0 %2308
    %2310 = vrot.lane.b32.xlu0 %v2095, 16
    %v2311 = vpop.permute.xlu0 %2310
    %2316 = vrot.lane.b32.xlu0 %v2290, 24
    %v2317 = vpop.permute.xlu0 %2316
    %2318 = vrot.lane.b32.xlu0 %v2295, 24
    %v2319 = vpop.permute.xlu0 %2318
    %v2322 = vsel %vm203, %v1690, %v2301
    %v2323 = vsel %vm203, %v1695, %v2303
    %v2324 = vsel %vm289, %v2322, %v2309
    %v2325 = vsel %vm289, %v2323, %v2311
    %v2326 = vsel %vm1027, %v2324, %v2317
    %v2327 = vsel %vm1027, %v2325, %v2319
    %s2328 = scalar_lea.vmem %s6, 32
    %v2329 = vld [vmem:[%s2328] sm:$0xff]
    %v2330 = vld [vmem:[%s2328 + $0x8] sm:$0xff]
    %v2331 = vld [vmem:[%s2328 + $0x10] sm:$0xff]
    %v2332 = vld [vmem:[%s2328 + $0x18] sm:$0xff]
    %s2333 = scalar_lea.vmem %s7, 1
    %v2334 = vld [vmem:[%s2333] sm:$0x1]
    %v2336 = vlaneseq
    %v2337 = vshrl.u32 %v2336, 7
    %v2338 = vsub.s32 0, %v2337
    %v2339 = vrot.slane %v2334, %v2338
    %v2342 = vsel %vm66, %v2326, 0
    %v2345 = vsel %vm66, %v2327, 0
    %2347 = vmatprep.subr.mxu0 0.0
    %2348 = vmatpush1.msra.mxu0 %v2329
    %2349 = vmatprep.subr.mxu0 0.0
    %2350 = vmatpush1.msra.mxu0 %v2330
    %2351 = vmatprep.subr.mxu0 0.0
    %2352 = vmatpush1.msra.mxu0 %v2331
    %2353 = vmatprep.subr.mxu0 0.0
    %2354 = vmatpush1.msra.mxu0 %v2332
    %2355 = vmatprep.subr.mxu0 0.0
    %2356 = vmatpush1.msra.mxu0 0.0
    %2357 = vmatprep.subr.mxu0 0.0
    %2358 = vmatpush1.msra.mxu0 0.0
    %2359 = vmatprep.subr.mxu0 0.0
    %2360 = vmatpush1.msra.mxu0 0.0
    %2361 = vmatprep.subr.mxu0 0.0
    %2362 = vmatpush1.msra.mxu0 0.0
    %2363 = vmatprep.subr.mxu0 0.0
    %2364 = vmatpush1.msra.mxu0 0.0
    %2365 = vmatprep.subr.mxu0 0.0
    %2366 = vmatpush1.msra.mxu0 0.0
    %2367 = vmatprep.subr.mxu0 0.0
    %2368 = vmatpush1.msra.mxu0 0.0
    %2369 = vmatprep.subr.mxu0 0.0
    %2370 = vmatpush1.msra.mxu0 0.0
    %2371 = vmatprep.subr.mxu0 0.0
    %2372 = vmatpush1.msra.mxu0 0.0
    %2373 = vmatprep.subr.mxu0 0.0
    %2374 = vmatpush1.msra.mxu0 0.0
    %2375 = vmatprep.subr.mxu0 0.0
    %2376 = vmatpush1.msra.mxu0 0.0
    %2377 = vmatprep.subr.mxu0 0.0
    %2378 = vmatpush1.msra.mxu0 0.0
    %2379 = vmatprep.subr.mxu0 0.0
    %2380 = vmatpush1.msra.mxu0 0.0
    %2381 = vmatprep.subr.mxu0 0.0
    %2382 = vmatpush1.msra.mxu0 0.0
    %2383 = vmatprep.subr.mxu0 0.0
    %2384 = vmatpush1.msra.mxu0 0.0
    %2385 = vmatprep.subr.mxu0 0.0
    %2386 = vmatpush1.msra.mxu0 0.0
    %2387 = vmatprep.subr.mxu0 0.0
    %2388 = vmatpush1.msra.mxu0 0.0
    %2389 = vmatprep.subr.mxu0 0.0
    %2390 = vmatpush1.msra.mxu0 0.0
    %2391 = vmatprep.subr.mxu0 0.0
    %2392 = vmatpush1.msra.mxu0 0.0
    %2393 = vmatprep.subr.mxu0 0.0
    %2394 = vmatpush1.msra.mxu0 0.0
    %2395 = vmatprep.subr.mxu0 0.0
    %2396 = vmatpush1.msra.mxu0 0.0
    %2397 = vmatprep.subr.mxu0 0.0
    %2398 = vmatpush1.msra.mxu0 0.0
    %2399 = vmatprep.subr.mxu0 0.0
    %2400 = vmatpush1.msra.mxu0 0.0
    %2401 = vmatprep.subr.mxu0 0.0
    %2402 = vmatpush1.msra.mxu0 0.0
    %2403 = vmatprep.subr.mxu0 0.0
    %2404 = vmatpush1.msra.mxu0 0.0
    %2405 = vmatprep.subr.mxu0 0.0
    %2406 = vmatpush1.msra.mxu0 0.0
    %2407 = vmatprep.subr.mxu0 0.0
    %2408 = vmatpush1.msra.mxu0 0.0
    %2409 = vmatprep.subr.mxu0 0.0
    %2410 = vmatpush1.msra.mxu0 0.0
    %2411 = vmatprep.mubr.f32.mxu0 0.0
    %2412 = vmatmul.mubr.f32.gmra.mrb[0].mxu0 %v2342
    %v2413 = vpop.f32.mrb[0].mxu0
    %v2414 = vadd.f32 %v2339, %v2413
    %v2415 = vpop.f32.mrb[0].mxu0
    %2416 = vmatprep.mubr.f32.mxu0 0.0
    %2417 = vmatmul.mubr.f32.gmra.mrb[0].mxu0 %v2345
    %v2418 = vpop.f32.mrb[0].mxu0
    %v2419 = vadd.f32 %v2339, %v2418
    %v2420 = vpop.f32.mrb[0].mxu0
    %2421 = vdwg.mxu0
    %v2422 = vadd.f32 %v1362, %v2414
    %v2423 = vadd.f32 %v1363, %v2419
    %s2424 = scalar_lea.vmem %s8, 1
    %v2425 = vld [vmem:[%s2424] sm:$0x1]
    %s2426 = scalar_lea.vmem %s9, 1
    %v2427 = vld [vmem:[%s2426] sm:$0x1]
    %v2428 = vsel %vm66, %v2422, 0.0
    %2429 = vadd.xlane.f32.xlu0 %v2428
    %v2430 = vpop.xlane.xlu0 %2429
    %v2431 = vsel %vm66, %v2423, 0.0
    %2432 = vadd.xlane.f32.xlu0 %v2431
    %v2433 = vpop.xlane.xlu0 %2432
    %v2434 = vmul.f32 %v2430, %v73
    %v2435 = vmul.f32 %v2433, %v73
    %v2436 = vsub.f32 %v2422, %v2434
    %v2437 = vsub.f32 %v2423, %v2435
    %v2438 = vmul.f32 %v2436, %v2436
    %v2439 = vmul.f32 %v2437, %v2437
    %v2440 = vsel %vm66, %v2438, 0.0
    %2441 = vadd.xlane.f32.xlu0 %v2440
    %v2442 = vpop.xlane.xlu0 %2441
    %v2443 = vsel %vm66, %v2439, 0.0
    %2444 = vadd.xlane.f32.xlu0 %v2443
    %v2445 = vpop.xlane.xlu0 %2444
    %v2446 = vmul.f32 %v2442, %v73
    %v2447 = vmul.f32 %v2445, %v73
    %v2448 = vadd.f32 %v2446, 1e-05
    %v2449 = vadd.f32 %v2447, 1e-05
    %v2450 = vrsqrt.pop %v2448
    %v2451 = vrsqrt.pop %v2449
    %v2452 = vmul.f32 %v2436, %v2450
    %v2453 = vmul.f32 %v2437, %v2451
    %v2455 = vlaneseq
    %v2456 = vshrl.u32 %v2455, 7
    %v2457 = vsub.s32 0, %v2456
    %v2458 = vrot.slane %v2425, %v2457
    %v2460 = vmul.f32 %v2452, %v2458
    %v2461 = vmul.f32 %v2453, %v2458
    %v2463 = vlaneseq
    %v2464 = vshrl.u32 %v2463, 7
    %v2465 = vsub.s32 0, %v2464
    %v2466 = vrot.slane %v2427, %v2465
    %v2468 = vadd.f32 %v2460, %v2466
    %v2469 = vadd.f32 %v2461, %v2466
    %s2470 = scalar_lea.vmem %s10, 32
    %v2471 = vld [vmem:[%s2470] sm:$0xff]
    %v2472 = vld [vmem:[%s2470 + $0x8] sm:$0xff]
    %v2473 = vld [vmem:[%s2470 + $0x10] sm:$0xff]
    %v2474 = vld [vmem:[%s2470 + $0x18] sm:$0xff]
    %s2475 = scalar_lea.vmem %s11, 1
    %v2476 = vld [vmem:[%s2475] sm:$0x1]
    %v2478 = vlaneseq
    %v2479 = vshrl.u32 %v2478, 7
    %v2480 = vsub.s32 0, %v2479
    %v2481 = vrot.slane %v2476, %v2480
    %v2484 = vsel %vm66, %v2468, 0
    %v2487 = vsel %vm66, %v2469, 0
    %2489 = vmatprep.subr.mxu0 0.0
    %2490 = vmatpush1.msra.mxu0 %v2471
    %2491 = vmatprep.subr.mxu0 0.0
    %2492 = vmatpush1.msra.mxu0 %v2472
    %2493 = vmatprep.subr.mxu0 0.0
    %2494 = vmatpush1.msra.mxu0 %v2473
    %2495 = vmatprep.subr.mxu0 0.0
    %2496 = vmatpush1.msra.mxu0 %v2474
    %2497 = vmatprep.subr.mxu0 0.0
    %2498 = vmatpush1.msra.mxu0 0.0
    %2499 = vmatprep.subr.mxu0 0.0
    %2500 = vmatpush1.msra.mxu0 0.0
    %2501 = vmatprep.subr.mxu0 0.0
    %2502 = vmatpush1.msra.mxu0 0.0
    %2503 = vmatprep.subr.mxu0 0.0
    %2504 = vmatpush1.msra.mxu0 0.0
    %2505 = vmatprep.subr.mxu0 0.0
    %2506 = vmatpush1.msra.mxu0 0.0
    %2507 = vmatprep.subr.mxu0 0.0
    %2508 = vmatpush1.msra.mxu0 0.0
    %2509 = vmatprep.subr.mxu0 0.0
    %2510 = vmatpush1.msra.mxu0 0.0
    %2511 = vmatprep.subr.mxu0 0.0
    %2512 = vmatpush1.msra.mxu0 0.0
    %2513 = vmatprep.subr.mxu0 0.0
    %2514 = vmatpush1.msra.mxu0 0.0
    %2515 = vmatprep.subr.mxu0 0.0
    %2516 = vmatpush1.msra.mxu0 0.0
    %2517 = vmatprep.subr.mxu0 0.0
    %2518 = vmatpush1.msra.mxu0 0.0
    %2519 = vmatprep.subr.mxu0 0.0
    %2520 = vmatpush1.msra.mxu0 0.0
    %2521 = vmatprep.subr.mxu0 0.0
    %2522 = vmatpush1.msra.mxu0 0.0
    %2523 = vmatprep.subr.mxu0 0.0
    %2524 = vmatpush1.msra.mxu0 0.0
    %2525 = vmatprep.subr.mxu0 0.0
    %2526 = vmatpush1.msra.mxu0 0.0
    %2527 = vmatprep.subr.mxu0 0.0
    %2528 = vmatpush1.msra.mxu0 0.0
    %2529 = vmatprep.subr.mxu0 0.0
    %2530 = vmatpush1.msra.mxu0 0.0
    %2531 = vmatprep.subr.mxu0 0.0
    %2532 = vmatpush1.msra.mxu0 0.0
    %2533 = vmatprep.subr.mxu0 0.0
    %2534 = vmatpush1.msra.mxu0 0.0
    %2535 = vmatprep.subr.mxu0 0.0
    %2536 = vmatpush1.msra.mxu0 0.0
    %2537 = vmatprep.subr.mxu0 0.0
    %2538 = vmatpush1.msra.mxu0 0.0
    %2539 = vmatprep.subr.mxu0 0.0
    %2540 = vmatpush1.msra.mxu0 0.0
    %2541 = vmatprep.subr.mxu0 0.0
    %2542 = vmatpush1.msra.mxu0 0.0
    %2543 = vmatprep.subr.mxu0 0.0
    %2544 = vmatpush1.msra.mxu0 0.0
    %2545 = vmatprep.subr.mxu0 0.0
    %2546 = vmatpush1.msra.mxu0 0.0
    %2547 = vmatprep.subr.mxu0 0.0
    %2548 = vmatpush1.msra.mxu0 0.0
    %2549 = vmatprep.subr.mxu0 0.0
    %2550 = vmatpush1.msra.mxu0 0.0
    %2551 = vmatprep.subr.mxu0 0.0
    %2552 = vmatpush1.msra.mxu0 0.0
    %2553 = vmatprep.mubr.f32.mxu0 0.0
    %2554 = vmatmul.mubr.f32.gmra.mrb[0].mxu0 %v2484
    %v2555 = vpop.f32.mrb[0].mxu0
    %v2556 = vadd.f32 %v2481, %v2555
    %v2557 = vpop.f32.mrb[0].mxu0
    %2558 = vmatprep.mubr.f32.mxu0 0.0
    %2559 = vmatmul.mubr.f32.gmra.mrb[0].mxu0 %v2487
    %v2560 = vpop.f32.mrb[0].mxu0
    %v2561 = vadd.f32 %v2481, %v2560
    %v2562 = vpop.f32.mrb[0].mxu0
    %2563 = vdwg.mxu0
    %v2564 = vmax.f32 %v2556, 0.0
    %v2565 = vmax.f32 %v2561, 0.0
    %s2566 = scalar_lea.vmem %s12, 128
    %v2567 = vld [vmem:[%s2566] sm:$0xff]
    %v2568 = vld [vmem:[%s2566 + $0x8] sm:$0xff]
    %v2569 = vld [vmem:[%s2566 + $0x10] sm:$0xff]
    %v2570 = vld [vmem:[%s2566 + $0x18] sm:$0xff]
    %v2571 = vld [vmem:[%s2566 + $0x20] sm:$0xff]
    %v2572 = vld [vmem:[%s2566 + $0x28] sm:$0xff]
    %v2573 = vld [vmem:[%s2566 + $0x30] sm:$0xff]
    %v2574 = vld [vmem:[%s2566 + $0x38] sm:$0xff]
    %v2575 = vld [vmem:[%s2566 + $0x40] sm:$0xff]
    %v2576 = vld [vmem:[%s2566 + $0x48] sm:$0xff]
    %v2577 = vld [vmem:[%s2566 + $0x50] sm:$0xff]
    %v2578 = vld [vmem:[%s2566 + $0x58] sm:$0xff]
    %v2579 = vld [vmem:[%s2566 + $0x60] sm:$0xff]
    %v2580 = vld [vmem:[%s2566 + $0x68] sm:$0xff]
    %v2581 = vld [vmem:[%s2566 + $0x70] sm:$0xff]
    %v2582 = vld [vmem:[%s2566 + $0x78] sm:$0xff]
    %2583 = vmatprep.subr.mxu0 0.0
    %2584 = vmatpush1.msra.mxu0 %v2567
    %2585 = vmatprep.subr.mxu0 0.0
    %2586 = vmatpush1.msra.mxu0 %v2568
    %2587 = vmatprep.subr.mxu0 0.0
    %2588 = vmatpush1.msra.mxu0 %v2569
    %2589 = vmatprep.subr.mxu0 0.0
    %2590 = vmatpush1.msra.mxu0 %v2570
    %2591 = vmatprep.subr.mxu0 0.0
    %2592 = vmatpush1.msra.mxu0 %v2571
    %2593 = vmatprep.subr.mxu0 0.0
    %2594 = vmatpush1.msra.mxu0 %v2572
    %2595 = vmatprep.subr.mxu0 0.0
    %2596 = vmatpush1.msra.mxu0 %v2573
    %2597 = vmatprep.subr.mxu0 0.0
    %2598 = vmatpush1.msra.mxu0 %v2574
    %2599 = vmatprep.subr.mxu0 0.0
    %2600 = vmatpush1.msra.mxu0 %v2575
    %2601 = vmatprep.subr.mxu0 0.0
    %2602 = vmatpush1.msra.mxu0 %v2576
    %2603 = vmatprep.subr.mxu0 0.0
    %2604 = vmatpush1.msra.mxu0 %v2577
    %2605 = vmatprep.subr.mxu0 0.0
    %2606 = vmatpush1.msra.mxu0 %v2578
    %2607 = vmatprep.subr.mxu0 0.0
    %2608 = vmatpush1.msra.mxu0 %v2579
    %2609 = vmatprep.subr.mxu0 0.0
    %2610 = vmatpush1.msra.mxu0 %v2580
    %2611 = vmatprep.subr.mxu0 0.0
    %2612 = vmatpush1.msra.mxu0 %v2581
    %2613 = vmatprep.subr.mxu0 0.0
    %2614 = vmatpush1.msra.mxu0 %v2582
    %2615 = vmatprep.subr.mxu0 0.0
    %2616 = vmatpush1.msra.mxu0 0.0
    %2617 = vmatprep.subr.mxu0 0.0
    %2618 = vmatpush1.msra.mxu0 0.0
    %2619 = vmatprep.subr.mxu0 0.0
    %2620 = vmatpush1.msra.mxu0 0.0
    %2621 = vmatprep.subr.mxu0 0.0
    %2622 = vmatpush1.msra.mxu0 0.0
    %2623 = vmatprep.subr.mxu0 0.0
    %2624 = vmatpush1.msra.mxu0 0.0
    %2625 = vmatprep.subr.mxu0 0.0
    %2626 = vmatpush1.msra.mxu0 0.0
    %2627 = vmatprep.subr.mxu0 0.0
    %2628 = vmatpush1.msra.mxu0 0.0
    %2629 = vmatprep.subr.mxu0 0.0
    %2630 = vmatpush1.msra.mxu0 0.0
    %2631 = vmatprep.subr.mxu0 0.0
    %2632 = vmatpush1.msra.mxu0 0.0
    %2633 = vmatprep.subr.mxu0 0.0
    %2634 = vmatpush1.msra.mxu0 0.0
    %2635 = vmatprep.subr.mxu0 0.0
    %2636 = vmatpush1.msra.mxu0 0.0
    %2637 = vmatprep.subr.mxu0 0.0
    %2638 = vmatpush1.msra.mxu0 0.0
    %2639 = vmatprep.subr.mxu0 0.0
    %2640 = vmatpush1.msra.mxu0 0.0
    %2641 = vmatprep.subr.mxu0 0.0
    %2642 = vmatpush1.msra.mxu0 0.0
    %2643 = vmatprep.subr.mxu0 0.0
    %2644 = vmatpush1.msra.mxu0 0.0
    %2645 = vmatprep.subr.mxu0 0.0
    %2646 = vmatpush1.msra.mxu0 0.0
    %2647 = vmatprep.mubr.f32.mxu0 0.0
    %2648 = vmatmul.mubr.f32.gmra.mrb[0].mxu0 %v2564
    %v2649 = vpop.f32.mrb[0].mxu0
    %v2650 = vadd.f32 0.0, %v2649
    %v2651 = vpop.f32.mrb[0].mxu0
    %2652 = vmatprep.mubr.f32.mxu0 0.0
    %2653 = vmatmul.mubr.f32.gmra.mrb[0].mxu0 %v2565
    %v2654 = vpop.f32.mrb[0].mxu0
    %v2655 = vadd.f32 0.0, %v2654
    %v2656 = vpop.f32.mrb[0].mxu0
    %2657 = vdwg.mxu0
    %v2658 = vadd.f32 %v2422, %v2650
    %v2659 = vadd.f32 %v2423, %v2655
    %s2660 = scalar_lea.vmem %s13, 1
    %v2661 = vld [vmem:[%s2660] sm:$0x1]
    %v2663 = vlaneseq
    %v2664 = vshrl.u32 %v2663, 7
    %v2665 = vsub.s32 0, %v2664
    %v2666 = vrot.slane %v2661, %v2665
    %v2668 = vadd.f32 %v2658, %v2666
    %v2669 = vadd.f32 %v2659, %v2666
    %v2670 = vld [vmem:[%s14] sm:$0x1]
    %v2671 = vld [vmem:[%s15] sm:$0x1]
    %v2672 = vsel %vm66, %v2668, 0.0
    %2673 = vadd.xlane.f32.xlu0 %v2672
    %v2674 = vpop.xlane.xlu0 %2673
    %v2675 = vsel %vm66, %v2669, 0.0
    %2676 = vadd.xlane.f32.xlu0 %v2675
    %v2677 = vpop.xlane.xlu0 %2676
    %v2678 = vmul.f32 %v2674, %v73
    %v2679 = vmul.f32 %v2677, %v73
    %v2680 = vsub.f32 %v2668, %v2678
    %v2681 = vsub.f32 %v2669, %v2679
    %v2682 = vmul.f32 %v2680, %v2680
    %v2683 = vmul.f32 %v2681, %v2681
    %v2684 = vsel %vm66, %v2682, 0.0
    %2685 = vadd.xlane.f32.xlu0 %v2684
    %v2686 = vpop.xlane.xlu0 %2685
    %v2687 = vsel %vm66, %v2683, 0.0
    %2688 = vadd.xlane.f32.xlu0 %v2687
    %v2689 = vpop.xlane.xlu0 %2688
    %v2690 = vmul.f32 %v2686, %v73
    %v2691 = vmul.f32 %v2689, %v73
    %v2692 = vadd.f32 %v2690, 1e-05
    %v2693 = vadd.f32 %v2691, 1e-05
    %v2694 = vrsqrt.pop %v2692
    %v2695 = vrsqrt.pop %v2693
    %v2696 = vmul.f32 %v2680, %v2694
    %v2697 = vmul.f32 %v2681, %v2695
    %v2699 = vlaneseq
    %v2700 = vshrl.u32 %v2699, 7
    %v2701 = vsub.s32 0, %v2700
    %v2702 = vrot.slane %v2670, %v2701
    %v2704 = vmul.f32 %v2696, %v2702
    %v2705 = vmul.f32 %v2697, %v2702
    %v2707 = vlaneseq
    %v2708 = vshrl.u32 %v2707, 7
    %v2709 = vsub.s32 0, %v2708
    %v2710 = vrot.slane %v2671, %v2709
    %v2712 = vadd.f32 %v2704, %v2710
    %v2713 = vadd.f32 %v2705, %v2710
    %v2714 = vld [vmem:[%s16] sm:$0xff]
    %v2715 = vld [vmem:[%s16 + $0x8] sm:$0xff]
    %v2716 = vld [vmem:[%s16 + $0x10] sm:$0xff]
    %v2717 = vld [vmem:[%s16 + $0x18] sm:$0xff]
    %v2718 = vld [vmem:[%s17] sm:$0x1]
    %v2720 = vlaneseq
    %v2721 = vshrl.u32 %v2720, 7
    %v2722 = vsub.s32 0, %v2721
    %v2723 = vrot.slane %v2718, %v2722
    %v2726 = vsel %vm66, %v2712, 0
    %v2729 = vsel %vm66, %v2713, 0
    %2731 = vmatprep.subr.mxu0 0.0
    %2732 = vmatpush1.msra.mxu0 %v2714
    %2733 = vmatprep.subr.mxu0 0.0
    %2734 = vmatpush1.msra.mxu0 %v2715
    %2735 = vmatprep.subr.mxu0 0.0
    %2736 = vmatpush1.msra.mxu0 %v2716
    %2737 = vmatprep.subr.mxu0 0.0
    %2738 = vmatpush1.msra.mxu0 %v2717
    %2739 = vmatprep.subr.mxu0 0.0
    %2740 = vmatpush1.msra.mxu0 0.0
    %2741 = vmatprep.subr.mxu0 0.0
    %2742 = vmatpush1.msra.mxu0 0.0
    %2743 = vmatprep.subr.mxu0 0.0
    %2744 = vmatpush1.msra.mxu0 0.0
    %2745 = vmatprep.subr.mxu0 0.0
    %2746 = vmatpush1.msra.mxu0 0.0
    %2747 = vmatprep.subr.mxu0 0.0
    %2748 = vmatpush1.msra.mxu0 0.0
    %2749 = vmatprep.subr.mxu0 0.0
    %2750 = vmatpush1.msra.mxu0 0.0
    %2751 = vmatprep.subr.mxu0 0.0
    %2752 = vmatpush1.msra.mxu0 0.0
    %2753 = vmatprep.subr.mxu0 0.0
    %2754 = vmatpush1.msra.mxu0 0.0
    %2755 = vmatprep.subr.mxu0 0.0
    %2756 = vmatpush1.msra.mxu0 0.0
    %2757 = vmatprep.subr.mxu0 0.0
    %2758 = vmatpush1.msra.mxu0 0.0
    %2759 = vmatprep.subr.mxu0 0.0
    %2760 = vmatpush1.msra.mxu0 0.0
    %2761 = vmatprep.subr.mxu0 0.0
    %2762 = vmatpush1.msra.mxu0 0.0
    %2763 = vmatprep.subr.mxu0 0.0
    %2764 = vmatpush1.msra.mxu0 0.0
    %2765 = vmatprep.subr.mxu0 0.0
    %2766 = vmatpush1.msra.mxu0 0.0
    %2767 = vmatprep.subr.mxu0 0.0
    %2768 = vmatpush1.msra.mxu0 0.0
    %2769 = vmatprep.subr.mxu0 0.0
    %2770 = vmatpush1.msra.mxu0 0.0
    %2771 = vmatprep.subr.mxu0 0.0
    %2772 = vmatpush1.msra.mxu0 0.0
    %2773 = vmatprep.subr.mxu0 0.0
    %2774 = vmatpush1.msra.mxu0 0.0
    %2775 = vmatprep.subr.mxu0 0.0
    %2776 = vmatpush1.msra.mxu0 0.0
    %2777 = vmatprep.subr.mxu0 0.0
    %2778 = vmatpush1.msra.mxu0 0.0
    %2779 = vmatprep.subr.mxu0 0.0
    %2780 = vmatpush1.msra.mxu0 0.0
    %2781 = vmatprep.subr.mxu0 0.0
    %2782 = vmatpush1.msra.mxu0 0.0
    %2783 = vmatprep.subr.mxu0 0.0
    %2784 = vmatpush1.msra.mxu0 0.0
    %2785 = vmatprep.subr.mxu0 0.0
    %2786 = vmatpush1.msra.mxu0 0.0
    %2787 = vmatprep.subr.mxu0 0.0
    %2788 = vmatpush1.msra.mxu0 0.0
    %2789 = vmatprep.subr.mxu0 0.0
    %2790 = vmatpush1.msra.mxu0 0.0
    %2791 = vmatprep.subr.mxu0 0.0
    %2792 = vmatpush1.msra.mxu0 0.0
    %2793 = vmatprep.subr.mxu0 0.0
    %2794 = vmatpush1.msra.mxu0 0.0
    %2795 = vmatprep.mubr.f32.mxu0 0.0
    %2796 = vmatmul.mubr.f32.gmra.mrb[0].mxu0 %v2726
    %v2797 = vpop.f32.mrb[0].mxu0
    %v2798 = vadd.f32 %v2723, %v2797
    %v2799 = vpop.f32.mrb[0].mxu0
    %2800 = vmatprep.mubr.f32.mxu0 0.0
    %2801 = vmatmul.mubr.f32.gmra.mrb[0].mxu0 %v2729
    %v2802 = vpop.f32.mrb[0].mxu0
    %v2803 = vadd.f32 %v2723, %v2802
    %v2804 = vpop.f32.mrb[0].mxu0
    %2805 = vdwg.mxu0
    %2806 = vmax.xlane.f32.xlu0 %v2798
    %v2807 = vpop.xlane.xlu0 %2806
    %2808 = vmax.xlane.f32.xlu0 %v2803
    %v2809 = vpop.xlane.xlu0 %2808
    %v2810 = vsub.f32 %v2798, %v2807
    %v2811 = vsub.f32 %v2803, %v2809
    %v2812 = vmul.f32 %v2810, 1.442695
    %v2813 = vpow.pop %v2812
    %v2814 = vmul.f32 %v2811, 1.442695
    %v2815 = vpow.pop %v2814
    %2816 = vadd.xlane.f32.xlu0 %v2813
    %v2817 = vpop.xlane.xlu0 %2816
    %2818 = vadd.xlane.f32.xlu0 %v2815
    %v2819 = vpop.xlane.xlu0 %2818
    %v2820 = vrcp.pop %v2817
    %v2821 = vrcp.pop %v2819
    %v2822 = vmul.f32 %v2813, %v2820
    %v2823 = vmul.f32 %v2815, %v2821
    %v2824 = vld [vmem:[%s1] sm:$0xff]
    %v2825 = vld [vmem:[%s1 + $0x8] sm:$0xff]
    %vm2826 = vcmp.ge.s32.totalorder %v2824, 27
    %vm2827 = vcmp.ge.s32.totalorder %v2825, 27
    %v2828 = vsel %vm2826, 1, 0
    %v2829 = vsel %vm2827, 1, 0
    %2830 = vset.pattern.permute.xlu0 0
    %2831 = vperm.xlu0 %2830, %v2828
    %v2832 = vpop.permute.xlu0 %2831
    %2833 = vset.pattern.permute.xlu0 0
    %2834 = vperm.xlu0 %2833, %v2829
    %v2835 = vpop.permute.xlu0 %2834
    %vm2836 = vcmp.eq.s32.totalorder %v2832, 1
    %vm2837 = vcmp.eq.s32.totalorder %v2835, 1
    %v2838 = vsel %vm2836, %v2822, 0.0
    %v2839 = vsel %vm2837, %v2823, 0.0
    %v2840 = vsub.f32 1.0, %v2838
    %v2841 = vsub.f32 1.0, %v2839
    %v2842 = vmax.f32 %v2840, 1e-30
    %v2843 = vmax.f32 %v2841, 1e-30
    %v2844 = vlog2.pop %v2842
    %v2845 = vmul.f32 %v2844, 0.6931472
    %v2846 = vlog2.pop %v2843
    %v2847 = vmul.f32 %v2846, 0.6931472
    %v2848 = vrot.slane %v2845, 4
    %v2849 = vadd.f32 %v2845, %v2848
    %v2850 = vrot.slane %v2849, 2
    %v2851 = vadd.f32 %v2849, %v2850
    %v2852 = vrot.slane %v2851, 1
    %v2853 = vadd.f32 %v2851, %v2852
    %v2854 = vmul.f32 %v2853, 1.442695
    %v2855 = vpow.pop %v2854
    %v2856 = vsub.f32 1.0, %v2855
    %v2857 = vrot.slane %v2847, 4
    %v2858 = vadd.f32 %v2847, %v2857
    %v2859 = vrot.slane %v2858, 2
    %v2860 = vadd.f32 %v2858, %v2859
    %v2861 = vrot.slane %v2860, 1
    %v2862 = vadd.f32 %v2860, %v2861
    %v2863 = vmul.f32 %v2862, 1.442695
    %v2864 = vpow.pop %v2863
    %v2865 = vsub.f32 1.0, %v2864
    %vm2866 = vcmask 1040384
    %v2867 = vsel %vm2866, %v2856, %v2865
    %2868 = vst [vmem:[#allocation2] sm:$0x3] %v2867
    // Predicated region
    $region74: #{hangman_forward.1} parent=1 // pred_check
      _
    $region75: #{hangman_forward.1} parent=1 // pred_check_branch
      %2870 = sbr.rel (0) target = $region77
    $region76: #{hangman_forward.1} parent=1 // pred_region
      %s2872 = ssub.s32 32, 32
      %2873 = vsyncadd [#allocation3], %s2872
      %s2875 = sshll.u32 [#allocation2], 4
      %s2876 = int_to_ptr.vmem [resolvable:$true] %s2875
      %2878 = dma.vmem_to_hbm [thread:$0]  %s2876, 32, %s18, [#allocation3]
    $region77: #{hangman_forward.1} parent=1 // pred_fallthru
      _
    // Predicated region
    $region78: #{hangman_forward.1} parent=1 // pred_check
      _
    $region79: #{hangman_forward.1} parent=1 // pred_check_branch
      %2880 = sbr.rel (0) target = $region81
    $region80: #{hangman_forward.1} parent=1 // pred_region
      %2881 = dma.done [#allocation3], 32
    $region81: #{hangman_forward.1} parent=1 // pred_fallthru
      _
    %2882 = vsyncpa [#allocation3], 1

</llo_original>
